<compile_context>
chip_gen: v5e
topology: v5e:2x2
jax: 0.10.0
libtpu: 0.0.40
codegen_flags: <defaults>
</compile_context>

<pallas_src>
import jax
import jax.numpy as jnp
from jax import lax
from jax.experimental import pallas as pl
from jax.experimental.pallas import tpu as pltpu


# ---------------------------------------------------------------------------
# In-kernel building block: 3x3 conv (pad=1) + folded BN + ReLU over
# zero-padded, lane-packed VMEM scratches.
# ---------------------------------------------------------------------------
def _conv3x3_bn_relu_from_padded(xp_refs, cins, H, W, w_ref, s_ref, b_ref):
    """xp_refs[g]: (H+2, (W+2)*cins[g]) bf16, zero border, interior = input g.
    w_ref: (9*W*sum(cins), W*C) bf16, block-diagonal packed (see packer).
    s_ref/b_ref: (1, W*C) f32 per-channel scale/shift tiled across W.
    Returns (H, W*C) f32 = relu(conv * scale + shift), lane-packed (w, co)."""
    acc = None
    off = 0
    for xp, cin in zip(xp_refs, cins):
        kw = W * cin
        for dy in range(3):
            for dx in range(3):
                # Pure static slice: dense (H, W*cin) bf16 slab, no reshape.
                slab = xp[dy:dy + H, dx * cin:(dx + W) * cin]
                part = jnp.dot(slab, w_ref[off:off + kw, :],
                               preferred_element_type=jnp.float32)
                acc = part if acc is None else acc + part
                off += kw
    return jnp.maximum(acc * s_ref[...] + b_ref[...], 0.0)


# ---------------------------------------------------------------------------
# Fully fused Upconv kernel (scale_factor == 1 path)
# ---------------------------------------------------------------------------
def _make_upconv_fused_kernel(H, W, cin1, cin2, C):
    def kernel(x1_ref, x2_ref, w1_ref, w2_ref, wf_ref,
               s1_ref, b1_ref, s2_ref, b2_ref, sf_ref, bf_ref,
               o_ref, xp1, xp2, yp1, yp2):
        bf16 = jnp.bfloat16
        # Tiny memsets establish the zero border; interiors are overwritten
        # below with ONE dense store each (no per-column loops).
        xp1[...] = jnp.zeros_like(xp1)
        xp2[...] = jnp.zeros_like(xp2)
        yp1[...] = jnp.zeros_like(yp1)
        yp2[...] = jnp.zeros_like(yp2)
        xp1[1:H + 1, cin1:(W + 1) * cin1] = x1_ref[0].astype(bf16)
        xp2[1:H + 1, cin2:(W + 1) * cin2] = x2_ref[0].astype(bf16)

        # x1_layer / x2_layer convs (f32 epilogue).
        y1 = _conv3x3_bn_relu_from_padded([xp1], (cin1,), H, W,
                                          w1_ref, s1_ref, b1_ref)
        y2 = _conv3x3_bn_relu_from_padded([xp2], (cin2,), H, W,
                                          w2_ref, s2_ref, b2_ref)

        # Feed fusion_layer through padded bf16 VMEM scratches; the channel
        # concat is folded into wf's K ordering, so nothing touches HBM here.
        yp1[1:H + 1, C:(W + 1) * C] = y1.astype(bf16)
        yp2[1:H + 1, C:(W + 1) * C] = y2.astype(bf16)

        y = _conv3x3_bn_relu_from_padded([yp1, yp2], (C, C), H, W,
                                         wf_ref, sf_ref, bf_ref)
        o_ref[0] = y.astype(o_ref.dtype)          # ONE dense (H, W*C) store
    return kernel


def upconv_fused(x1p, x2p, H, W, cin1, cin2, C,
                 w1, w2, wf, s1, b1, s2, b2, sf, bfv):
    N = x1p.shape[0]

    def const_spec(arr):
        return pl.BlockSpec(arr.shape, lambda n: (0, 0))

    in_specs = [
        pl.BlockSpec((1, H, W * cin1), lambda n: (n, 0, 0)),
        pl.BlockSpec((1, H, W * cin2), lambda n: (n, 0, 0)),
        const_spec(w1), const_spec(w2), const_spec(wf),
        const_spec(s1), const_spec(b1),
        const_spec(s2), const_spec(b2),
        const_spec(sf), const_spec(bfv),
    ]
    scratch_shapes = [
        pltpu.VMEM((H + 2, (W + 2) * cin1), jnp.bfloat16),
        pltpu.VMEM((H + 2, (W + 2) * cin2), jnp.bfloat16),
        pltpu.VMEM((H + 2, (W + 2) * C), jnp.bfloat16),
        pltpu.VMEM((H + 2, (W + 2) * C), jnp.bfloat16),
    ]
    return pl.pallas_call(
        _make_upconv_fused_kernel(H, W, cin1, cin2, C),
        out_shape=jax.ShapeDtypeStruct((N, H, W * C), jnp.float32),
        grid_spec=pltpu.PrefetchScalarGridSpec(
            num_scalar_prefetch=0,
            grid=(N,),
            in_specs=in_specs,
            out_specs=pl.BlockSpec((1, H, W * C), lambda n: (n, 0, 0)),
            scratch_shapes=scratch_shapes,
        ),
        compiler_params=pltpu.CompilerParams(
            dimension_semantics=("parallel",),
            vmem_limit_bytes=32 * 1024 * 1024,
        ),
    )(x1p, x2p, w1, w2, wf, s1, b1, s2, b2, sf, bfv)


# ---------------------------------------------------------------------------
# Standalone multi-input conv kernel (used only for the scale_factor != 1 path)
# ---------------------------------------------------------------------------
def _make_conv_kernel(H, W, cins, C):
    n_in = len(cins)

    def kernel(*refs):
        x_refs = refs[:n_in]
        w_ref, s_ref, b_ref = refs[n_in:n_in + 3]
        o_ref = refs[n_in + 3]
        xp_refs = refs[n_in + 4:]
        for x_ref, xp, cin in zip(x_refs, xp_refs, cins):
            xp[...] = jnp.zeros_like(xp)
            xp[1:H + 1, cin:(W + 1) * cin] = x_ref[0].astype(jnp.bfloat16)
        y = _conv3x3_bn_relu_from_padded(list(xp_refs), cins, H, W,
                                         w_ref, s_ref, b_ref)
        o_ref[0] = y.astype(o_ref.dtype)
    return kernel


def conv3x3_bn_relu(xs_packed, cins, H, W, w_bd, s_tiled, b_tiled, C,
                    out_dtype=jnp.float32):
    N = xs_packed[0].shape[0]
    in_specs = [pl.BlockSpec((1, H, W * c), lambda n: (n, 0, 0)) for c in cins]
    in_specs += [pl.BlockSpec(w_bd.shape, lambda n: (0, 0)),
                 pl.BlockSpec(s_tiled.shape, lambda n: (0, 0)),
                 pl.BlockSpec(b_tiled.shape, lambda n: (0, 0))]
    scratch_shapes = [pltpu.VMEM((H + 2, (W + 2) * c), jnp.bfloat16)
                      for c in cins]
    return pl.pallas_call(
        _make_conv_kernel(H, W, tuple(cins), C),
        out_shape=jax.ShapeDtypeStruct((N, H, W * C), out_dtype),
        grid_spec=pltpu.PrefetchScalarGridSpec(
            num_scalar_prefetch=0,
            grid=(N,),
            in_specs=in_specs,
            out_specs=pl.BlockSpec((1, H, W * C), lambda n: (n, 0, 0)),
            scratch_shapes=scratch_shapes,
        ),
        compiler_params=pltpu.CompilerParams(
            dimension_semantics=("parallel",),
            vmem_limit_bytes=32 * 1024 * 1024,
        ),
    )(*xs_packed, w_bd, s_tiled, b_tiled)


# ---------------------------------------------------------------------------
# Host-side parameter packing (cheap; done per spatial width)
# ---------------------------------------------------------------------------
def _pack_conv_weight_bd(w_oihw, cin_splits, W):
    """PyTorch (Cout, sum(cins), 3, 3) weight -> (9*W*sum(cins), W*Cout) bf16
    block-diagonal matrix so a lane-packed (H, W*cin) tap slab times this
    matrix IS the conv tap.  K order: (input_block, dy, dx, w, ci);
    N order: (w, co); the (cin, cout) tap is replicated on the W-diagonal."""
    cout = w_oihw.shape[0]
    eye = jnp.eye(W, dtype=jnp.float32)
    blocks = []
    start = 0
    for cin in cin_splits:
        wi = jnp.transpose(w_oihw[:, start:start + cin], (2, 3, 1, 0))  # dy,dx,ci,co
        for dy in range(3):
            for dx in range(3):
                bd = jnp.einsum('ab,ij->aibj', eye, wi[dy, dx])
                blocks.append(bd.reshape(W * cin, W * cout))
        start += cin
    return jnp.concatenate(blocks, axis=0).astype(jnp.bfloat16)


def _fold_bn_tiled(p, W, eps=1e-5):
    """Fold conv bias + inference-mode BN into scale/shift, tiled to (1, W*C)."""
    scale = p['gamma'] / jnp.sqrt(p['var'] + eps)
    shift = p['beta'] + (p['bias'] - p['mean']) * scale
    return jnp.tile(scale, W)[None, :], jnp.tile(shift, W)[None, :]


def _init_conv_block(key, cin, cout):
    """Deterministic params for Conv2d(cin->cout, k=3, pad=1) + BatchNorm2d."""
    kw, kb = jax.random.split(key)
    return dict(
        w=jax.random.normal(kw, (cout, cin, 3, 3), jnp.float32) * 0.1,
        bias=jax.random.normal(kb, (cout,), jnp.float32) * 0.01,
        gamma=jnp.ones((cout,), jnp.float32),
        beta=jnp.zeros((cout,), jnp.float32),
        mean=jnp.zeros((cout,), jnp.float32),
        var=jnp.ones((cout,), jnp.float32),
    )


# ---------------------------------------------------------------------------
# Bilinear upsample (identity at the module's default scale_factor=1)
# ---------------------------------------------------------------------------
def upsample_bilinear_nhwc(x, scale_factor):
    """nn.UpsamplingBilinear2d (align_corners=True). XLA-gather fallback.
    TODO(synk): replace with a row-streaming Pallas kernel if ever hot."""
    if scale_factor == 1:
        return x
    N, H, W, C = x.shape
    Ho, Wo = int(H * scale_factor), int(W * scale_factor)

    def coords(out_len, in_len):
        if out_len == 1:
            return jnp.zeros((out_len,), jnp.float32)
        return jnp.linspace(0.0, float(in_len - 1), out_len)

    ys, xs = coords(Ho, H), coords(Wo, W)
    y0 = jnp.floor(ys).astype(jnp.int32)
    x0 = jnp.floor(xs).astype(jnp.int32)
    y1 = jnp.minimum(y0 + 1, H - 1)
    x1 = jnp.minimum(x0 + 1, W - 1)
    wy = (ys - y0)[None, :, None, None]
    wx = (xs - x0)[None, None, :, None]
    xf = x.astype(jnp.float32)

    def gather(yi, xi):
        return xf[:, yi][:, :, xi]

    top = gather(y0, x0) * (1.0 - wx) + gather(y0, x1) * wx
    bot = gather(y1, x0) * (1.0 - wx) + gather(y1, x1) * wx
    return (top * (1.0 - wy) + bot * wy).astype(x.dtype)


# ---------------------------------------------------------------------------
# Module
# ---------------------------------------------------------------------------
class UpconvPallas:
    """JAX/Pallas port of Upconv (UNet2d), forward (inference) pass."""
    # TODO(synk): training-mode BatchNorm (per-batch statistics) not
    # implemented; inference-mode (folded running stats) semantics are used.

    def __init__(self, in_channels, mid_channels, out_channels, scale_factor=1,
                 key=jax.random.PRNGKey(0)):
        k1, k2, k3 = jax.random.split(key, 3)
        self.cin, self.cmid, self.cout = in_channels, mid_channels, out_channels
        self.scale_factor = scale_factor
        self.p1 = _init_conv_block(k1, in_channels, out_channels)
        self.p2 = _init_conv_block(k2, mid_channels, out_channels)
        self.pf = _init_conv_block(k3, out_channels * 2, out_channels)

    def __call__(self, x1_nchw, x2_nchw):
        C = self.cout
        N, _, H1, W1 = x1_nchw.shape
        _, _, H2, W2 = x2_nchw.shape

        # NCHW -> lane-packed NHWC (N, H, W*C); layout moves only at the
        # PyTorch-compatible module boundary.
        x1 = jnp.transpose(x1_nchw, (0, 2, 3, 1)).reshape(N, H1, W1 * self.cin)
        x2 = jnp.transpose(x2_nchw, (0, 2, 3, 1)).reshape(N, H2, W2 * self.cmid)

        # NOTE: block-diagonal weight packing depends on W, so it happens per
        # call here; a deployed model would precompute it once per shape.
        if self.scale_factor == 1:
            assert (H1, W1) == (H2, W2), "cat(dim=1) requires equal spatial dims"
            H, W = H2, W2
            w1 = _pack_conv_weight_bd(self.p1['w'], [self.cin], W)
            w2 = _pack_conv_weight_bd(self.p2['w'], [self.cmid], W)
            wf = _pack_conv_weight_bd(self.pf['w'], [C, C], W)
            s1, b1 = _fold_bn_tiled(self.p1, W)
            s2, b2 = _fold_bn_tiled(self.p2, W)
            sf, bfv = _fold_bn_tiled(self.pf, W)
            y = upconv_fused(x1, x2, H, W, self.cin, self.cmid, C,
                             w1, w2, wf, s1, b1, s2, b2, sf, bfv)
            return jnp.transpose(y.reshape(N, H, W, C), (0, 3, 1, 2))

        # scale_factor != 1 fallback: separate kernels (bf16 intermediates) +
        # XLA bilinear upsample between conv1 and the fusion conv.
        w1 = _pack_conv_weight_bd(self.p1['w'], [self.cin], W1)
        s1, b1 = _fold_bn_tiled(self.p1, W1)
        y1 = conv3x3_bn_relu([x1], [self.cin], H1, W1, w1, s1, b1, C,
                             out_dtype=jnp.bfloat16)
        y1 = upsample_bilinear_nhwc(y1.reshape(N, H1, W1, C), self.scale_factor)
        Hu, Wu = y1.shape[1], y1.shape[2]
        assert (Hu, Wu) == (H2, W2), (
            f"upsampled x1 dims {(Hu, Wu)} must match x2 dims {(H2, W2)}")
        y1 = y1.reshape(N, H2, W2 * C)

        w2 = _pack_conv_weight_bd(self.p2['w'], [self.cmid], W2)
        s2, b2 = _fold_bn_tiled(self.p2, W2)
        y2 = conv3x3_bn_relu([x2], [self.cmid], H2, W2, w2, s2, b2, C,
                             out_dtype=jnp.bfloat16)

        wf = _pack_conv_weight_bd(self.pf['w'], [C, C], W2)
        sf, bfv = _fold_bn_tiled(self.pf, W2)
        y = conv3x3_bn_relu([y1, y2], [C, C], H2, W2, wf, sf, bfv, C,
                            out_dtype=jnp.float32)
        return jnp.transpose(y.reshape(N, H2, W2, C), (0, 3, 1, 2))


if __name__ == "__main__":
    key = jax.random.PRNGKey(0)
    k_x1, k_x2, k_params = jax.random.split(key, 3)

    N, Cin, Cmid, Cout, H, W = 2, 4, 6, 8, 16, 16
    x1 = jax.random.normal(k_x1, (N, Cin, H, W), jnp.float32)
    x2 = jax.random.normal(k_x2, (N, Cmid, H, W), jnp.float32)

    model = UpconvPallas(in_channels=Cin, mid_channels=Cmid,
                         out_channels=Cout, scale_factor=1, key=k_params)
    out = jax.block_until_ready(model(x1, x2))
    assert out.shape == (N, Cout, H, W), out.shape

    # Pure-JAX/XLA f32 reference (same folded inference-mode BN semantics).
    def ref_block(x, p):
        o = lax.conv_general_dilated(
            x, p['w'], (1, 1), ((1, 1), (1, 1)),
            dimension_numbers=('NCHW', 'OIHW', 'NCHW'))
        scale = p['gamma'] / jnp.sqrt(p['var'] + 1e-5)
        shift = p['beta'] + (p['bias'] - p['mean']) * scale
        return jnp.maximum(o * scale[None, :, None, None]
                           + shift[None, :, None, None], 0.0)

    r1 = ref_block(x1, model.p1)
    r2 = ref_block(x2, model.p2)
    ref = ref_block(jnp.concatenate([r1, r2], axis=1), model.pf)

    assert bool(jnp.all(jnp.isfinite(out)))
    assert bool(jnp.all(out >= 0.0))  # final ReLU
    max_err = float(jnp.max(jnp.abs(out - ref)))
    assert max_err < 1e-1, f"max abs error vs XLA reference: {max_err}"
    print("KERNEL_OK")
</pallas_src>

<mosaic_0001>
module attributes {stable_mosaic.version = 11 : i64} {
  func.func @kernel(%arg0: i32, %arg1: memref<1x16x64xf32, #tpu.memory_space<vmem>>, %arg2: memref<1x16x96xf32, #tpu.memory_space<vmem>>, %arg3: memref<576x128xbf16, #tpu.memory_space<vmem>>, %arg4: memref<864x128xbf16, #tpu.memory_space<vmem>>, %arg5: memref<2304x128xbf16, #tpu.memory_space<vmem>>, %arg6: memref<1x128xf32, #tpu.memory_space<vmem>>, %arg7: memref<1x128xf32, #tpu.memory_space<vmem>>, %arg8: memref<1x128xf32, #tpu.memory_space<vmem>>, %arg9: memref<1x128xf32, #tpu.memory_space<vmem>>, %arg10: memref<1x128xf32, #tpu.memory_space<vmem>>, %arg11: memref<1x128xf32, #tpu.memory_space<vmem>>, %arg12: memref<1x16x128xf32, #tpu.memory_space<vmem>>, %arg13: memref<18x72xbf16, #tpu.memory_space<vmem>>, %arg14: memref<18x108xbf16, #tpu.memory_space<vmem>>, %arg15: memref<18x144xbf16, #tpu.memory_space<vmem>>, %arg16: memref<18x144xbf16, #tpu.memory_space<vmem>>) attributes {dimension_semantics = [#tpu.dimension_semantics<parallel>], iteration_bounds = array<i64: 2>, scalar_prefetch = 0 : i64, scratch_operands = 4 : i64, tpu.core_type = #tpu.core_type<tc>, window_params = [{transform_indices = @transform_0, window_bounds = array<i64: 1, 16, 64>}, {transform_indices = @transform_1, window_bounds = array<i64: 1, 16, 96>}, {pipeline_mode = #tpu.pipeline_mode<synchronous>, transform_indices = @transform_2, window_bounds = array<i64: 576, 128>}, {pipeline_mode = #tpu.pipeline_mode<synchronous>, transform_indices = @transform_3, window_bounds = array<i64: 864, 128>}, {pipeline_mode = #tpu.pipeline_mode<synchronous>, transform_indices = @transform_4, window_bounds = array<i64: 2304, 128>}, {pipeline_mode = #tpu.pipeline_mode<synchronous>, transform_indices = @transform_5, window_bounds = array<i64: 1, 128>}, {pipeline_mode = #tpu.pipeline_mode<synchronous>, transform_indices = @transform_6, window_bounds = array<i64: 1, 128>}, {pipeline_mode = #tpu.pipeline_mode<synchronous>, transform_indices = @transform_7, window_bounds = array<i64: 1, 128>}, {pipeline_mode = #tpu.pipeline_mode<synchronous>, transform_indices = @transform_8, window_bounds = array<i64: 1, 128>}, {pipeline_mode = #tpu.pipeline_mode<synchronous>, transform_indices = @transform_9, window_bounds = array<i64: 1, 128>}, {pipeline_mode = #tpu.pipeline_mode<synchronous>, transform_indices = @transform_10, window_bounds = array<i64: 1, 128>}, {transform_indices = @transform_11, window_bounds = array<i64: 1, 16, 128>}]} {
    %cst = arith.constant 0.000000e+00 : bf16
    %0 = vector.broadcast %cst : bf16 to vector<18x72xbf16>
    %c0 = arith.constant 0 : index
    %c0_0 = arith.constant 0 : index
    %1 = vector.load %arg13[%c0, %c0_0] : memref<18x72xbf16, #tpu.memory_space<vmem>>, vector<18x72xbf16>
    tpu.vector_store %arg13[%c0, %c0_0], %0 {strides = array<i32>} : memref<18x72xbf16, #tpu.memory_space<vmem>>, vector<18x72xbf16>,
    %cst_1 = arith.constant 0.000000e+00 : bf16
    %2 = vector.broadcast %cst_1 : bf16 to vector<18x108xbf16>
    %c0_2 = arith.constant 0 : index
    %c0_3 = arith.constant 0 : index
    %3 = vector.load %arg14[%c0_2, %c0_3] : memref<18x108xbf16, #tpu.memory_space<vmem>>, vector<18x108xbf16>
    tpu.vector_store %arg14[%c0_2, %c0_3], %2 {strides = array<i32>} : memref<18x108xbf16, #tpu.memory_space<vmem>>, vector<18x108xbf16>,
    %cst_4 = arith.constant 0.000000e+00 : bf16
    %4 = vector.broadcast %cst_4 : bf16 to vector<18x144xbf16>
    %c0_5 = arith.constant 0 : index
    %c0_6 = arith.constant 0 : index
    %5 = vector.load %arg15[%c0_5, %c0_6] : memref<18x144xbf16, #tpu.memory_space<vmem>>, vector<18x144xbf16>
    tpu.vector_store %arg15[%c0_5, %c0_6], %4 {strides = array<i32>} : memref<18x144xbf16, #tpu.memory_space<vmem>>, vector<18x144xbf16>,
    %cst_7 = arith.constant 0.000000e+00 : bf16
    %6 = vector.broadcast %cst_7 : bf16 to vector<18x144xbf16>
    %c0_8 = arith.constant 0 : index
    %c0_9 = arith.constant 0 : index
    %7 = vector.load %arg16[%c0_8, %c0_9] : memref<18x144xbf16, #tpu.memory_space<vmem>>, vector<18x144xbf16>
    tpu.vector_store %arg16[%c0_8, %c0_9], %6 {strides = array<i32>} : memref<18x144xbf16, #tpu.memory_space<vmem>>, vector<18x144xbf16>,
    %c0_10 = arith.constant 0 : index
    %c0_11 = arith.constant 0 : index
    %c0_12 = arith.constant 0 : index
    %8 = vector.load %arg1[%c0_10, %c0_11, %c0_12] : memref<1x16x64xf32, #tpu.memory_space<vmem>>, vector<1x16x64xf32>
    %9 = vector.shape_cast %8 : vector<1x16x64xf32> to vector<16x64xf32>
    %10 = arith.truncf %9 : vector<16x64xf32> to vector<16x64xbf16>
    %c1 = arith.constant 1 : index
    %c4 = arith.constant 4 : index
    %11 = vector.load %arg13[%c1, %c4] : memref<18x72xbf16, #tpu.memory_space<vmem>>, vector<16x64xbf16>
    tpu.vector_store %arg13[%c1, %c4], %10 {strides = array<i32>} : memref<18x72xbf16, #tpu.memory_space<vmem>>, vector<16x64xbf16>,
    %c0_13 = arith.constant 0 : index
    %c0_14 = arith.constant 0 : index
    %c0_15 = arith.constant 0 : index
    %12 = vector.load %arg2[%c0_13, %c0_14, %c0_15] : memref<1x16x96xf32, #tpu.memory_space<vmem>>, vector<1x16x96xf32>
    %13 = vector.shape_cast %12 : vector<1x16x96xf32> to vector<16x96xf32>
    %14 = arith.truncf %13 : vector<16x96xf32> to vector<16x96xbf16>
    %c1_16 = arith.constant 1 : index
    %c6 = arith.constant 6 : index
    %15 = vector.load %arg14[%c1_16, %c6] : memref<18x108xbf16, #tpu.memory_space<vmem>>, vector<16x96xbf16>
    tpu.vector_store %arg14[%c1_16, %c6], %14 {strides = array<i32>} : memref<18x108xbf16, #tpu.memory_space<vmem>>, vector<16x96xbf16>,
    %c0_17 = arith.constant 0 : index
    %c0_18 = arith.constant 0 : index
    %16 = vector.load %arg13[%c0_17, %c0_18] : memref<18x72xbf16, #tpu.memory_space<vmem>>, vector<16x64xbf16>
    %c0_19 = arith.constant 0 : index
    %c0_20 = arith.constant 0 : index
    %17 = vector.load %arg3[%c0_19, %c0_20] : memref<576x128xbf16, #tpu.memory_space<vmem>>, vector<64x128xbf16>
    %cst_21 = arith.constant dense<0.000000e+00> : vector<16x128xf32>
    %18 = tpu.matmul %16, %17, %cst_21 {dimension_numbers = #tpu.dot_dimension_numbers<[1], [0], [0], [1], [0, 0, 1, 1], [], []>} : vector<16x64xbf16>, vector<64x128xbf16>, vector<16x128xf32> -> vector<16x128xf32>
    %c0_22 = arith.constant 0 : index
    %c4_23 = arith.constant 4 : index
    %19 = vector.load %arg13[%c0_22, %c4_23] : memref<18x72xbf16, #tpu.memory_space<vmem>>, vector<16x64xbf16>
    %c64 = arith.constant 64 : index
    %c0_24 = arith.constant 0 : index
    %20 = vector.load %arg3[%c64, %c0_24] : memref<576x128xbf16, #tpu.memory_space<vmem>>, vector<64x128xbf16>
    %cst_25 = arith.constant dense<0.000000e+00> : vector<16x128xf32>
    %21 = tpu.matmul %19, %20, %cst_25 {dimension_numbers = #tpu.dot_dimension_numbers<[1], [0], [0], [1], [0, 0, 1, 1], [], []>} : vector<16x64xbf16>, vector<64x128xbf16>, vector<16x128xf32> -> vector<16x128xf32>
    %22 = arith.addf %18, %21 : vector<16x128xf32>
    %c0_26 = arith.constant 0 : index
    %c8 = arith.constant 8 : index
    %23 = vector.load %arg13[%c0_26, %c8] : memref<18x72xbf16, #tpu.memory_space<vmem>>, vector<16x64xbf16>
    %c128 = arith.constant 128 : index
    %c0_27 = arith.constant 0 : index
    %24 = vector.load %arg3[%c128, %c0_27] : memref<576x128xbf16, #tpu.memory_space<vmem>>, vector<64x128xbf16>
    %cst_28 = arith.constant dense<0.000000e+00> : vector<16x128xf32>
    %25 = tpu.matmul %23, %24, %cst_28 {dimension_numbers = #tpu.dot_dimension_numbers<[1], [0], [0], [1], [0, 0, 1, 1], [], []>} : vector<16x64xbf16>, vector<64x128xbf16>, vector<16x128xf32> -> vector<16x128xf32>
    %26 = arith.addf %22, %25 : vector<16x128xf32>
    %c1_29 = arith.constant 1 : index
    %c0_30 = arith.constant 0 : index
    %27 = vector.load %arg13[%c1_29, %c0_30] : memref<18x72xbf16, #tpu.memory_space<vmem>>, vector<16x64xbf16>
    %c192 = arith.constant 192 : index
    %c0_31 = arith.constant 0 : index
    %28 = vector.load %arg3[%c192, %c0_31] : memref<576x128xbf16, #tpu.memory_space<vmem>>, vector<64x128xbf16>
    %cst_32 = arith.constant dense<0.000000e+00> : vector<16x128xf32>
    %29 = tpu.matmul %27, %28, %cst_32 {dimension_numbers = #tpu.dot_dimension_numbers<[1], [0], [0], [1], [0, 0, 1, 1], [], []>} : vector<16x64xbf16>, vector<64x128xbf16>, vector<16x128xf32> -> vector<16x128xf32>
    %30 = arith.addf %26, %29 : vector<16x128xf32>
    %c1_33 = arith.constant 1 : index
    %c4_34 = arith.constant 4 : index
    %31 = vector.load %arg13[%c1_33, %c4_34] : memref<18x72xbf16, #tpu.memory_space<vmem>>, vector<16x64xbf16>
    %c256 = arith.constant 256 : index
    %c0_35 = arith.constant 0 : index
    %32 = vector.load %arg3[%c256, %c0_35] : memref<576x128xbf16, #tpu.memory_space<vmem>>, vector<64x128xbf16>
    %cst_36 = arith.constant dense<0.000000e+00> : vector<16x128xf32>
    %33 = tpu.matmul %31, %32, %cst_36 {dimension_numbers = #tpu.dot_dimension_numbers<[1], [0], [0], [1], [0, 0, 1, 1], [], []>} : vector<16x64xbf16>, vector<64x128xbf16>, vector<16x128xf32> -> vector<16x128xf32>
    %34 = arith.addf %30, %33 : vector<16x128xf32>
    %c1_37 = arith.constant 1 : index
    %c8_38 = arith.constant 8 : index
    %35 = vector.load %arg13[%c1_37, %c8_38] : memref<18x72xbf16, #tpu.memory_space<vmem>>, vector<16x64xbf16>
    %c320 = arith.constant 320 : index
    %c0_39 = arith.constant 0 : index
    %36 = vector.load %arg3[%c320, %c0_39] : memref<576x128xbf16, #tpu.memory_space<vmem>>, vector<64x128xbf16>
    %cst_40 = arith.constant dense<0.000000e+00> : vector<16x128xf32>
    %37 = tpu.matmul %35, %36, %cst_40 {dimension_numbers = #tpu.dot_dimension_numbers<[1], [0], [0], [1], [0, 0, 1, 1], [], []>} : vector<16x64xbf16>, vector<64x128xbf16>, vector<16x128xf32> -> vector<16x128xf32>
    %38 = arith.addf %34, %37 : vector<16x128xf32>
    %c2 = arith.constant 2 : index
    %c0_41 = arith.constant 0 : index
    %39 = vector.load %arg13[%c2, %c0_41] : memref<18x72xbf16, #tpu.memory_space<vmem>>, vector<16x64xbf16>
    %c384 = arith.constant 384 : index
    %c0_42 = arith.constant 0 : index
    %40 = vector.load %arg3[%c384, %c0_42] : memref<576x128xbf16, #tpu.memory_space<vmem>>, vector<64x128xbf16>
    %cst_43 = arith.constant dense<0.000000e+00> : vector<16x128xf32>
    %41 = tpu.matmul %39, %40, %cst_43 {dimension_numbers = #tpu.dot_dimension_numbers<[1], [0], [0], [1], [0, 0, 1, 1], [], []>} : vector<16x64xbf16>, vector<64x128xbf16>, vector<16x128xf32> -> vector<16x128xf32>
    %42 = arith.addf %38, %41 : vector<16x128xf32>
    %c2_44 = arith.constant 2 : index
    %c4_45 = arith.constant 4 : index
    %43 = vector.load %arg13[%c2_44, %c4_45] : memref<18x72xbf16, #tpu.memory_space<vmem>>, vector<16x64xbf16>
    %c448 = arith.constant 448 : index
    %c0_46 = arith.constant 0 : index
    %44 = vector.load %arg3[%c448, %c0_46] : memref<576x128xbf16, #tpu.memory_space<vmem>>, vector<64x128xbf16>
    %cst_47 = arith.constant dense<0.000000e+00> : vector<16x128xf32>
    %45 = tpu.matmul %43, %44, %cst_47 {dimension_numbers = #tpu.dot_dimension_numbers<[1], [0], [0], [1], [0, 0, 1, 1], [], []>} : vector<16x64xbf16>, vector<64x128xbf16>, vector<16x128xf32> -> vector<16x128xf32>
    %46 = arith.addf %42, %45 : vector<16x128xf32>
    %c2_48 = arith.constant 2 : index
    %c8_49 = arith.constant 8 : index
    %47 = vector.load %arg13[%c2_48, %c8_49] : memref<18x72xbf16, #tpu.memory_space<vmem>>, vector<16x64xbf16>
    %c512 = arith.constant 512 : index
    %c0_50 = arith.constant 0 : index
    %48 = vector.load %arg3[%c512, %c0_50] : memref<576x128xbf16, #tpu.memory_space<vmem>>, vector<64x128xbf16>
    %cst_51 = arith.constant dense<0.000000e+00> : vector<16x128xf32>
    %49 = tpu.matmul %47, %48, %cst_51 {dimension_numbers = #tpu.dot_dimension_numbers<[1], [0], [0], [1], [0, 0, 1, 1], [], []>} : vector<16x64xbf16>, vector<64x128xbf16>, vector<16x128xf32> -> vector<16x128xf32>
    %50 = arith.addf %46, %49 : vector<16x128xf32>
    %c0_52 = arith.constant 0 : index
    %c0_53 = arith.constant 0 : index
    %51 = vector.load %arg6[%c0_52, %c0_53] : memref<1x128xf32, #tpu.memory_space<vmem>>, vector<1x128xf32>
    %52 = vector.broadcast %51 : vector<1x128xf32> to vector<16x128xf32>
    %53 = arith.mulf %50, %52 : vector<16x128xf32>
    %c0_54 = arith.constant 0 : index
    %c0_55 = arith.constant 0 : index
    %54 = vector.load %arg7[%c0_54, %c0_55] : memref<1x128xf32, #tpu.memory_space<vmem>>, vector<1x128xf32>
    %55 = vector.broadcast %54 : vector<1x128xf32> to vector<16x128xf32>
    %56 = arith.addf %53, %55 : vector<16x128xf32>
    %cst_56 = arith.constant 0.000000e+00 : f32
    %57 = vector.broadcast %cst_56 : f32 to vector<16x128xf32>
    %58 = arith.maximumf %56, %57 : vector<16x128xf32>
    %c0_57 = arith.constant 0 : index
    %c0_58 = arith.constant 0 : index
    %59 = vector.load %arg14[%c0_57, %c0_58] : memref<18x108xbf16, #tpu.memory_space<vmem>>, vector<16x96xbf16>
    %c0_59 = arith.constant 0 : index
    %c0_60 = arith.constant 0 : index
    %60 = vector.load %arg4[%c0_59, %c0_60] : memref<864x128xbf16, #tpu.memory_space<vmem>>, vector<96x128xbf16>
    %cst_61 = arith.constant dense<0.000000e+00> : vector<16x128xf32>
    %61 = tpu.matmul %59, %60, %cst_61 {dimension_numbers = #tpu.dot_dimension_numbers<[1], [0], [0], [1], [0, 0, 1, 1], [], []>} : vector<16x96xbf16>, vector<96x128xbf16>, vector<16x128xf32> -> vector<16x128xf32>
    %c0_62 = arith.constant 0 : index
    %c6_63 = arith.constant 6 : index
    %62 = vector.load %arg14[%c0_62, %c6_63] : memref<18x108xbf16, #tpu.memory_space<vmem>>, vector<16x96xbf16>
    %c96 = arith.constant 96 : index
    %c0_64 = arith.constant 0 : index
    %63 = vector.load %arg4[%c96, %c0_64] : memref<864x128xbf16, #tpu.memory_space<vmem>>, vector<96x128xbf16>
    %cst_65 = arith.constant dense<0.000000e+00> : vector<16x128xf32>
    %64 = tpu.matmul %62, %63, %cst_65 {dimension_numbers = #tpu.dot_dimension_numbers<[1], [0], [0], [1], [0, 0, 1, 1], [], []>} : vector<16x96xbf16>, vector<96x128xbf16>, vector<16x128xf32> -> vector<16x128xf32>
    %65 = arith.addf %61, %64 : vector<16x128xf32>
    %c0_66 = arith.constant 0 : index
    %c12 = arith.constant 12 : index
    %66 = vector.load %arg14[%c0_66, %c12] : memref<18x108xbf16, #tpu.memory_space<vmem>>, vector<16x96xbf16>
    %c192_67 = arith.constant 192 : index
    %c0_68 = arith.constant 0 : index
    %67 = vector.load %arg4[%c192_67, %c0_68] : memref<864x128xbf16, #tpu.memory_space<vmem>>, vector<96x128xbf16>
    %cst_69 = arith.constant dense<0.000000e+00> : vector<16x128xf32>
    %68 = tpu.matmul %66, %67, %cst_69 {dimension_numbers = #tpu.dot_dimension_numbers<[1], [0], [0], [1], [0, 0, 1, 1], [], []>} : vector<16x96xbf16>, vector<96x128xbf16>, vector<16x128xf32> -> vector<16x128xf32>
    %69 = arith.addf %65, %68 : vector<16x128xf32>
    %c1_70 = arith.constant 1 : index
    %c0_71 = arith.constant 0 : index
    %70 = vector.load %arg14[%c1_70, %c0_71] : memref<18x108xbf16, #tpu.memory_space<vmem>>, vector<16x96xbf16>
    %c288 = arith.constant 288 : index
    %c0_72 = arith.constant 0 : index
    %71 = vector.load %arg4[%c288, %c0_72] : memref<864x128xbf16, #tpu.memory_space<vmem>>, vector<96x128xbf16>
    %cst_73 = arith.constant dense<0.000000e+00> : vector<16x128xf32>
    %72 = tpu.matmul %70, %71, %cst_73 {dimension_numbers = #tpu.dot_dimension_numbers<[1], [0], [0], [1], [0, 0, 1, 1], [], []>} : vector<16x96xbf16>, vector<96x128xbf16>, vector<16x128xf32> -> vector<16x128xf32>
    %73 = arith.addf %69, %72 : vector<16x128xf32>
    %c1_74 = arith.constant 1 : index
    %c6_75 = arith.constant 6 : index
    %74 = vector.load %arg14[%c1_74, %c6_75] : memref<18x108xbf16, #tpu.memory_space<vmem>>, vector<16x96xbf16>
    %c384_76 = arith.constant 384 : index
    %c0_77 = arith.constant 0 : index
    %75 = vector.load %arg4[%c384_76, %c0_77] : memref<864x128xbf16, #tpu.memory_space<vmem>>, vector<96x128xbf16>
    %cst_78 = arith.constant dense<0.000000e+00> : vector<16x128xf32>
    %76 = tpu.matmul %74, %75, %cst_78 {dimension_numbers = #tpu.dot_dimension_numbers<[1], [0], [0], [1], [0, 0, 1, 1], [], []>} : vector<16x96xbf16>, vector<96x128xbf16>, vector<16x128xf32> -> vector<16x128xf32>
    %77 = arith.addf %73, %76 : vector<16x128xf32>
    %c1_79 = arith.constant 1 : index
    %c12_80 = arith.constant 12 : index
    %78 = vector.load %arg14[%c1_79, %c12_80] : memref<18x108xbf16, #tpu.memory_space<vmem>>, vector<16x96xbf16>
    %c480 = arith.constant 480 : index
    %c0_81 = arith.constant 0 : index
    %79 = vector.load %arg4[%c480, %c0_81] : memref<864x128xbf16, #tpu.memory_space<vmem>>, vector<96x128xbf16>
    %cst_82 = arith.constant dense<0.000000e+00> : vector<16x128xf32>
    %80 = tpu.matmul %78, %79, %cst_82 {dimension_numbers = #tpu.dot_dimension_numbers<[1], [0], [0], [1], [0, 0, 1, 1], [], []>} : vector<16x96xbf16>, vector<96x128xbf16>, vector<16x128xf32> -> vector<16x128xf32>
    %81 = arith.addf %77, %80 : vector<16x128xf32>
    %c2_83 = arith.constant 2 : index
    %c0_84 = arith.constant 0 : index
    %82 = vector.load %arg14[%c2_83, %c0_84] : memref<18x108xbf16, #tpu.memory_space<vmem>>, vector<16x96xbf16>
    %c576 = arith.constant 576 : index
    %c0_85 = arith.constant 0 : index
    %83 = vector.load %arg4[%c576, %c0_85] : memref<864x128xbf16, #tpu.memory_space<vmem>>, vector<96x128xbf16>
    %cst_86 = arith.constant dense<0.000000e+00> : vector<16x128xf32>
    %84 = tpu.matmul %82, %83, %cst_86 {dimension_numbers = #tpu.dot_dimension_numbers<[1], [0], [0], [1], [0, 0, 1, 1], [], []>} : vector<16x96xbf16>, vector<96x128xbf16>, vector<16x128xf32> -> vector<16x128xf32>
    %85 = arith.addf %81, %84 : vector<16x128xf32>
    %c2_87 = arith.constant 2 : index
    %c6_88 = arith.constant 6 : index
    %86 = vector.load %arg14[%c2_87, %c6_88] : memref<18x108xbf16, #tpu.memory_space<vmem>>, vector<16x96xbf16>
    %c672 = arith.constant 672 : index
    %c0_89 = arith.constant 0 : index
    %87 = vector.load %arg4[%c672, %c0_89] : memref<864x128xbf16, #tpu.memory_space<vmem>>, vector<96x128xbf16>
    %cst_90 = arith.constant dense<0.000000e+00> : vector<16x128xf32>
    %88 = tpu.matmul %86, %87, %cst_90 {dimension_numbers = #tpu.dot_dimension_numbers<[1], [0], [0], [1], [0, 0, 1, 1], [], []>} : vector<16x96xbf16>, vector<96x128xbf16>, vector<16x128xf32> -> vector<16x128xf32>
    %89 = arith.addf %85, %88 : vector<16x128xf32>
    %c2_91 = arith.constant 2 : index
    %c12_92 = arith.constant 12 : index
    %90 = vector.load %arg14[%c2_91, %c12_92] : memref<18x108xbf16, #tpu.memory_space<vmem>>, vector<16x96xbf16>
    %c768 = arith.constant 768 : index
    %c0_93 = arith.constant 0 : index
    %91 = vector.load %arg4[%c768, %c0_93] : memref<864x128xbf16, #tpu.memory_space<vmem>>, vector<96x128xbf16>
    %cst_94 = arith.constant dense<0.000000e+00> : vector<16x128xf32>
    %92 = tpu.matmul %90, %91, %cst_94 {dimension_numbers = #tpu.dot_dimension_numbers<[1], [0], [0], [1], [0, 0, 1, 1], [], []>} : vector<16x96xbf16>, vector<96x128xbf16>, vector<16x128xf32> -> vector<16x128xf32>
    %93 = arith.addf %89, %92 : vector<16x128xf32>
    %c0_95 = arith.constant 0 : index
    %c0_96 = arith.constant 0 : index
    %94 = vector.load %arg8[%c0_95, %c0_96] : memref<1x128xf32, #tpu.memory_space<vmem>>, vector<1x128xf32>
    %95 = vector.broadcast %94 : vector<1x128xf32> to vector<16x128xf32>
    %96 = arith.mulf %93, %95 : vector<16x128xf32>
    %c0_97 = arith.constant 0 : index
    %c0_98 = arith.constant 0 : index
    %97 = vector.load %arg9[%c0_97, %c0_98] : memref<1x128xf32, #tpu.memory_space<vmem>>, vector<1x128xf32>
    %98 = vector.broadcast %97 : vector<1x128xf32> to vector<16x128xf32>
    %99 = arith.addf %96, %98 : vector<16x128xf32>
    %cst_99 = arith.constant 0.000000e+00 : f32
    %100 = vector.broadcast %cst_99 : f32 to vector<16x128xf32>
    %101 = arith.maximumf %99, %100 : vector<16x128xf32>
    %102 = arith.truncf %58 : vector<16x128xf32> to vector<16x128xbf16>
    %c1_100 = arith.constant 1 : index
    %c8_101 = arith.constant 8 : index
    %103 = vector.load %arg15[%c1_100, %c8_101] : memref<18x144xbf16, #tpu.memory_space<vmem>>, vector<16x128xbf16>
    tpu.vector_store %arg15[%c1_100, %c8_101], %102 {strides = array<i32>} : memref<18x144xbf16, #tpu.memory_space<vmem>>, vector<16x128xbf16>,
    %104 = arith.truncf %101 : vector<16x128xf32> to vector<16x128xbf16>
    %c1_102 = arith.constant 1 : index
    %c8_103 = arith.constant 8 : index
    %105 = vector.load %arg16[%c1_102, %c8_103] : memref<18x144xbf16, #tpu.memory_space<vmem>>, vector<16x128xbf16>
    tpu.vector_store %arg16[%c1_102, %c8_103], %104 {strides = array<i32>} : memref<18x144xbf16, #tpu.memory_space<vmem>>, vector<16x128xbf16>,
    %c0_104 = arith.constant 0 : index
    %c0_105 = arith.constant 0 : index
    %106 = vector.load %arg15[%c0_104, %c0_105] : memref<18x144xbf16, #tpu.memory_space<vmem>>, vector<16x128xbf16>
    %c0_106 = arith.constant 0 : index
    %c0_107 = arith.constant 0 : index
    %107 = vector.load %arg5[%c0_106, %c0_107] : memref<2304x128xbf16, #tpu.memory_space<vmem>>, vector<128x128xbf16>
    %cst_108 = arith.constant dense<0.000000e+00> : vector<16x128xf32>
    %108 = tpu.matmul %106, %107, %cst_108 {dimension_numbers = #tpu.dot_dimension_numbers<[1], [0], [0], [1], [0, 0, 1, 1], [], []>} : vector<16x128xbf16>, vector<128x128xbf16>, vector<16x128xf32> -> vector<16x128xf32>
    %c0_109 = arith.constant 0 : index
    %c8_110 = arith.constant 8 : index
    %109 = vector.load %arg15[%c0_109, %c8_110] : memref<18x144xbf16, #tpu.memory_space<vmem>>, vector<16x128xbf16>
    %c128_111 = arith.constant 128 : index
    %c0_112 = arith.constant 0 : index
    %110 = vector.load %arg5[%c128_111, %c0_112] : memref<2304x128xbf16, #tpu.memory_space<vmem>>, vector<128x128xbf16>
    %cst_113 = arith.constant dense<0.000000e+00> : vector<16x128xf32>
    %111 = tpu.matmul %109, %110, %cst_113 {dimension_numbers = #tpu.dot_dimension_numbers<[1], [0], [0], [1], [0, 0, 1, 1], [], []>} : vector<16x128xbf16>, vector<128x128xbf16>, vector<16x128xf32> -> vector<16x128xf32>
    %112 = arith.addf %108, %111 : vector<16x128xf32>
    %c0_114 = arith.constant 0 : index
    %c16 = arith.constant 16 : index
    %113 = vector.load %arg15[%c0_114, %c16] : memref<18x144xbf16, #tpu.memory_space<vmem>>, vector<16x128xbf16>
    %c256_115 = arith.constant 256 : index
    %c0_116 = arith.constant 0 : index
    %114 = vector.load %arg5[%c256_115, %c0_116] : memref<2304x128xbf16, #tpu.memory_space<vmem>>, vector<128x128xbf16>
    %cst_117 = arith.constant dense<0.000000e+00> : vector<16x128xf32>
    %115 = tpu.matmul %113, %114, %cst_117 {dimension_numbers = #tpu.dot_dimension_numbers<[1], [0], [0], [1], [0, 0, 1, 1], [], []>} : vector<16x128xbf16>, vector<128x128xbf16>, vector<16x128xf32> -> vector<16x128xf32>
    %116 = arith.addf %112, %115 : vector<16x128xf32>
    %c1_118 = arith.constant 1 : index
    %c0_119 = arith.constant 0 : index
    %117 = vector.load %arg15[%c1_118, %c0_119] : memref<18x144xbf16, #tpu.memory_space<vmem>>, vector<16x128xbf16>
    %c384_120 = arith.constant 384 : index
    %c0_121 = arith.constant 0 : index
    %118 = vector.load %arg5[%c384_120, %c0_121] : memref<2304x128xbf16, #tpu.memory_space<vmem>>, vector<128x128xbf16>
    %cst_122 = arith.constant dense<0.000000e+00> : vector<16x128xf32>
    %119 = tpu.matmul %117, %118, %cst_122 {dimension_numbers = #tpu.dot_dimension_numbers<[1], [0], [0], [1], [0, 0, 1, 1], [], []>} : vector<16x128xbf16>, vector<128x128xbf16>, vector<16x128xf32> -> vector<16x128xf32>
    %120 = arith.addf %116, %119 : vector<16x128xf32>
    %c1_123 = arith.constant 1 : index
    %c8_124 = arith.constant 8 : index
    %121 = vector.load %arg15[%c1_123, %c8_124] : memref<18x144xbf16, #tpu.memory_space<vmem>>, vector<16x128xbf16>
    %c512_125 = arith.constant 512 : index
    %c0_126 = arith.constant 0 : index
    %122 = vector.load %arg5[%c512_125, %c0_126] : memref<2304x128xbf16, #tpu.memory_space<vmem>>, vector<128x128xbf16>
    %cst_127 = arith.constant dense<0.000000e+00> : vector<16x128xf32>
    %123 = tpu.matmul %121, %122, %cst_127 {dimension_numbers = #tpu.dot_dimension_numbers<[1], [0], [0], [1], [0, 0, 1, 1], [], []>} : vector<16x128xbf16>, vector<128x128xbf16>, vector<16x128xf32> -> vector<16x128xf32>
    %124 = arith.addf %120, %123 : vector<16x128xf32>
    %c1_128 = arith.constant 1 : index
    %c16_129 = arith.constant 16 : index
    %125 = vector.load %arg15[%c1_128, %c16_129] : memref<18x144xbf16, #tpu.memory_space<vmem>>, vector<16x128xbf16>
    %c640 = arith.constant 640 : index
    %c0_130 = arith.constant 0 : index
    %126 = vector.load %arg5[%c640, %c0_130] : memref<2304x128xbf16, #tpu.memory_space<vmem>>, vector<128x128xbf16>
    %cst_131 = arith.constant dense<0.000000e+00> : vector<16x128xf32>
    %127 = tpu.matmul %125, %126, %cst_131 {dimension_numbers = #tpu.dot_dimension_numbers<[1], [0], [0], [1], [0, 0, 1, 1], [], []>} : vector<16x128xbf16>, vector<128x128xbf16>, vector<16x128xf32> -> vector<16x128xf32>
    %128 = arith.addf %124, %127 : vector<16x128xf32>
    %c2_132 = arith.constant 2 : index
    %c0_133 = arith.constant 0 : index
    %129 = vector.load %arg15[%c2_132, %c0_133] : memref<18x144xbf16, #tpu.memory_space<vmem>>, vector<16x128xbf16>
    %c768_134 = arith.constant 768 : index
    %c0_135 = arith.constant 0 : index
    %130 = vector.load %arg5[%c768_134, %c0_135] : memref<2304x128xbf16, #tpu.memory_space<vmem>>, vector<128x128xbf16>
    %cst_136 = arith.constant dense<0.000000e+00> : vector<16x128xf32>
    %131 = tpu.matmul %129, %130, %cst_136 {dimension_numbers = #tpu.dot_dimension_numbers<[1], [0], [0], [1], [0, 0, 1, 1], [], []>} : vector<16x128xbf16>, vector<128x128xbf16>, vector<16x128xf32> -> vector<16x128xf32>
    %132 = arith.addf %128, %131 : vector<16x128xf32>
    %c2_137 = arith.constant 2 : index
    %c8_138 = arith.constant 8 : index
    %133 = vector.load %arg15[%c2_137, %c8_138] : memref<18x144xbf16, #tpu.memory_space<vmem>>, vector<16x128xbf16>
    %c896 = arith.constant 896 : index
    %c0_139 = arith.constant 0 : index
    %134 = vector.load %arg5[%c896, %c0_139] : memref<2304x128xbf16, #tpu.memory_space<vmem>>, vector<128x128xbf16>
    %cst_140 = arith.constant dense<0.000000e+00> : vector<16x128xf32>
    %135 = tpu.matmul %133, %134, %cst_140 {dimension_numbers = #tpu.dot_dimension_numbers<[1], [0], [0], [1], [0, 0, 1, 1], [], []>} : vector<16x128xbf16>, vector<128x128xbf16>, vector<16x128xf32> -> vector<16x128xf32>
    %136 = arith.addf %132, %135 : vector<16x128xf32>
    %c2_141 = arith.constant 2 : index
    %c16_142 = arith.constant 16 : index
    %137 = vector.load %arg15[%c2_141, %c16_142] : memref<18x144xbf16, #tpu.memory_space<vmem>>, vector<16x128xbf16>
    %c1024 = arith.constant 1024 : index
    %c0_143 = arith.constant 0 : index
    %138 = vector.load %arg5[%c1024, %c0_143] : memref<2304x128xbf16, #tpu.memory_space<vmem>>, vector<128x128xbf16>
    %cst_144 = arith.constant dense<0.000000e+00> : vector<16x128xf32>
    %139 = tpu.matmul %137, %138, %cst_144 {dimension_numbers = #tpu.dot_dimension_numbers<[1], [0], [0], [1], [0, 0, 1, 1], [], []>} : vector<16x128xbf16>, vector<128x128xbf16>, vector<16x128xf32> -> vector<16x128xf32>
    %140 = arith.addf %136, %139 : vector<16x128xf32>
    %c0_145 = arith.constant 0 : index
    %c0_146 = arith.constant 0 : index
    %141 = vector.load %arg16[%c0_145, %c0_146] : memref<18x144xbf16, #tpu.memory_space<vmem>>, vector<16x128xbf16>
    %c1152 = arith.constant 1152 : index
    %c0_147 = arith.constant 0 : index
    %142 = vector.load %arg5[%c1152, %c0_147] : memref<2304x128xbf16, #tpu.memory_space<vmem>>, vector<128x128xbf16>
    %cst_148 = arith.constant dense<0.000000e+00> : vector<16x128xf32>
    %143 = tpu.matmul %141, %142, %cst_148 {dimension_numbers = #tpu.dot_dimension_numbers<[1], [0], [0], [1], [0, 0, 1, 1], [], []>} : vector<16x128xbf16>, vector<128x128xbf16>, vector<16x128xf32> -> vector<16x128xf32>
    %144 = arith.addf %140, %143 : vector<16x128xf32>
    %c0_149 = arith.constant 0 : index
    %c8_150 = arith.constant 8 : index
    %145 = vector.load %arg16[%c0_149, %c8_150] : memref<18x144xbf16, #tpu.memory_space<vmem>>, vector<16x128xbf16>
    %c1280 = arith.constant 1280 : index
    %c0_151 = arith.constant 0 : index
    %146 = vector.load %arg5[%c1280, %c0_151] : memref<2304x128xbf16, #tpu.memory_space<vmem>>, vector<128x128xbf16>
    %cst_152 = arith.constant dense<0.000000e+00> : vector<16x128xf32>
    %147 = tpu.matmul %145, %146, %cst_152 {dimension_numbers = #tpu.dot_dimension_numbers<[1], [0], [0], [1], [0, 0, 1, 1], [], []>} : vector<16x128xbf16>, vector<128x128xbf16>, vector<16x128xf32> -> vector<16x128xf32>
    %148 = arith.addf %144, %147 : vector<16x128xf32>
    %c0_153 = arith.constant 0 : index
    %c16_154 = arith.constant 16 : index
    %149 = vector.load %arg16[%c0_153, %c16_154] : memref<18x144xbf16, #tpu.memory_space<vmem>>, vector<16x128xbf16>
    %c1408 = arith.constant 1408 : index
    %c0_155 = arith.constant 0 : index
    %150 = vector.load %arg5[%c1408, %c0_155] : memref<2304x128xbf16, #tpu.memory_space<vmem>>, vector<128x128xbf16>
    %cst_156 = arith.constant dense<0.000000e+00> : vector<16x128xf32>
    %151 = tpu.matmul %149, %150, %cst_156 {dimension_numbers = #tpu.dot_dimension_numbers<[1], [0], [0], [1], [0, 0, 1, 1], [], []>} : vector<16x128xbf16>, vector<128x128xbf16>, vector<16x128xf32> -> vector<16x128xf32>
    %152 = arith.addf %148, %151 : vector<16x128xf32>
    %c1_157 = arith.constant 1 : index
    %c0_158 = arith.constant 0 : index
    %153 = vector.load %arg16[%c1_157, %c0_158] : memref<18x144xbf16, #tpu.memory_space<vmem>>, vector<16x128xbf16>
    %c1536 = arith.constant 1536 : index
    %c0_159 = arith.constant 0 : index
    %154 = vector.load %arg5[%c1536, %c0_159] : memref<2304x128xbf16, #tpu.memory_space<vmem>>, vector<128x128xbf16>
    %cst_160 = arith.constant dense<0.000000e+00> : vector<16x128xf32>
    %155 = tpu.matmul %153, %154, %cst_160 {dimension_numbers = #tpu.dot_dimension_numbers<[1], [0], [0], [1], [0, 0, 1, 1], [], []>} : vector<16x128xbf16>, vector<128x128xbf16>, vector<16x128xf32> -> vector<16x128xf32>
    %156 = arith.addf %152, %155 : vector<16x128xf32>
    %c1_161 = arith.constant 1 : index
    %c8_162 = arith.constant 8 : index
    %157 = vector.load %arg16[%c1_161, %c8_162] : memref<18x144xbf16, #tpu.memory_space<vmem>>, vector<16x128xbf16>
    %c1664 = arith.constant 1664 : index
    %c0_163 = arith.constant 0 : index
    %158 = vector.load %arg5[%c1664, %c0_163] : memref<2304x128xbf16, #tpu.memory_space<vmem>>, vector<128x128xbf16>
    %cst_164 = arith.constant dense<0.000000e+00> : vector<16x128xf32>
    %159 = tpu.matmul %157, %158, %cst_164 {dimension_numbers = #tpu.dot_dimension_numbers<[1], [0], [0], [1], [0, 0, 1, 1], [], []>} : vector<16x128xbf16>, vector<128x128xbf16>, vector<16x128xf32> -> vector<16x128xf32>
    %160 = arith.addf %156, %159 : vector<16x128xf32>
    %c1_165 = arith.constant 1 : index
    %c16_166 = arith.constant 16 : index
    %161 = vector.load %arg16[%c1_165, %c16_166] : memref<18x144xbf16, #tpu.memory_space<vmem>>, vector<16x128xbf16>
    %c1792 = arith.constant 1792 : index
    %c0_167 = arith.constant 0 : index
    %162 = vector.load %arg5[%c1792, %c0_167] : memref<2304x128xbf16, #tpu.memory_space<vmem>>, vector<128x128xbf16>
    %cst_168 = arith.constant dense<0.000000e+00> : vector<16x128xf32>
    %163 = tpu.matmul %161, %162, %cst_168 {dimension_numbers = #tpu.dot_dimension_numbers<[1], [0], [0], [1], [0, 0, 1, 1], [], []>} : vector<16x128xbf16>, vector<128x128xbf16>, vector<16x128xf32> -> vector<16x128xf32>
    %164 = arith.addf %160, %163 : vector<16x128xf32>
    %c2_169 = arith.constant 2 : index
    %c0_170 = arith.constant 0 : index
    %165 = vector.load %arg16[%c2_169, %c0_170] : memref<18x144xbf16, #tpu.memory_space<vmem>>, vector<16x128xbf16>
    %c1920 = arith.constant 1920 : index
    %c0_171 = arith.constant 0 : index
    %166 = vector.load %arg5[%c1920, %c0_171] : memref<2304x128xbf16, #tpu.memory_space<vmem>>, vector<128x128xbf16>
    %cst_172 = arith.constant dense<0.000000e+00> : vector<16x128xf32>
    %167 = tpu.matmul %165, %166, %cst_172 {dimension_numbers = #tpu.dot_dimension_numbers<[1], [0], [0], [1], [0, 0, 1, 1], [], []>} : vector<16x128xbf16>, vector<128x128xbf16>, vector<16x128xf32> -> vector<16x128xf32>
    %168 = arith.addf %164, %167 : vector<16x128xf32>
    %c2_173 = arith.constant 2 : index
    %c8_174 = arith.constant 8 : index
    %169 = vector.load %arg16[%c2_173, %c8_174] : memref<18x144xbf16, #tpu.memory_space<vmem>>, vector<16x128xbf16>
    %c2048 = arith.constant 2048 : index
    %c0_175 = arith.constant 0 : index
    %170 = vector.load %arg5[%c2048, %c0_175] : memref<2304x128xbf16, #tpu.memory_space<vmem>>, vector<128x128xbf16>
    %cst_176 = arith.constant dense<0.000000e+00> : vector<16x128xf32>
    %171 = tpu.matmul %169, %170, %cst_176 {dimension_numbers = #tpu.dot_dimension_numbers<[1], [0], [0], [1], [0, 0, 1, 1], [], []>} : vector<16x128xbf16>, vector<128x128xbf16>, vector<16x128xf32> -> vector<16x128xf32>
    %172 = arith.addf %168, %171 : vector<16x128xf32>
    %c2_177 = arith.constant 2 : index
    %c16_178 = arith.constant 16 : index
    %173 = vector.load %arg16[%c2_177, %c16_178] : memref<18x144xbf16, #tpu.memory_space<vmem>>, vector<16x128xbf16>
    %c2176 = arith.constant 2176 : index
    %c0_179 = arith.constant 0 : index
    %174 = vector.load %arg5[%c2176, %c0_179] : memref<2304x128xbf16, #tpu.memory_space<vmem>>, vector<128x128xbf16>
    %cst_180 = arith.constant dense<0.000000e+00> : vector<16x128xf32>
    %175 = tpu.matmul %173, %174, %cst_180 {dimension_numbers = #tpu.dot_dimension_numbers<[1], [0], [0], [1], [0, 0, 1, 1], [], []>} : vector<16x128xbf16>, vector<128x128xbf16>, vector<16x128xf32> -> vector<16x128xf32>
    %176 = arith.addf %172, %175 : vector<16x128xf32>
    %c0_181 = arith.constant 0 : index
    %c0_182 = arith.constant 0 : index
    %177 = vector.load %arg10[%c0_181, %c0_182] : memref<1x128xf32, #tpu.memory_space<vmem>>, vector<1x128xf32>
    %178 = vector.broadcast %177 : vector<1x128xf32> to vector<16x128xf32>
    %179 = arith.mulf %176, %178 : vector<16x128xf32>
    %c0_183 = arith.constant 0 : index
    %c0_184 = arith.constant 0 : index
    %180 = vector.load %arg11[%c0_183, %c0_184] : memref<1x128xf32, #tpu.memory_space<vmem>>, vector<1x128xf32>
    %181 = vector.broadcast %180 : vector<1x128xf32> to vector<16x128xf32>
    %182 = arith.addf %179, %181 : vector<16x128xf32>
    %cst_185 = arith.constant 0.000000e+00 : f32
    %183 = vector.broadcast %cst_185 : f32 to vector<16x128xf32>
    %184 = arith.maximumf %182, %183 : vector<16x128xf32>
    %c0_186 = arith.constant 0 : index
    %c0_187 = arith.constant 0 : index
    %c0_188 = arith.constant 0 : index
    %185 = vector.load %arg12[%c0_186, %c0_187, %c0_188] : memref<1x16x128xf32, #tpu.memory_space<vmem>>, vector<1x16x128xf32>
    %186 = vector.shape_cast %185 : vector<1x16x128xf32> to vector<16x128xf32>
    %187 = vector.shape_cast %184 : vector<16x128xf32> to vector<1x16x128xf32>
    tpu.vector_store %arg12[%c0_186, %c0_187, %c0_188], %187 {strides = array<i32>} : memref<1x16x128xf32, #tpu.memory_space<vmem>>, vector<1x16x128xf32>,
    return
  }
  func.func @transform_0(%arg0: i32) -> (i32, i32, i32) {
    %c0_i32 = arith.constant 0 : i32
    %c0_i32_0 = arith.constant 0 : i32
    %c0_i32_1 = arith.constant 0 : i32
    return %arg0, %c0_i32, %c0_i32_0 : i32, i32, i32
  }
  func.func @transform_1(%arg0: i32) -> (i32, i32, i32) {
    %c0_i32 = arith.constant 0 : i32
    %c0_i32_0 = arith.constant 0 : i32
    %c0_i32_1 = arith.constant 0 : i32
    return %arg0, %c0_i32, %c0_i32_0 : i32, i32, i32
  }
  func.func @transform_2(%arg0: i32) -> (i32, i32) {
    %c0_i32 = arith.constant 0 : i32
    %c0_i32_0 = arith.constant 0 : i32
    %c0_i32_1 = arith.constant 0 : i32
    return %c0_i32, %c0_i32_0 : i32, i32
  }
  func.func @transform_3(%arg0: i32) -> (i32, i32) {
    %c0_i32 = arith.constant 0 : i32
    %c0_i32_0 = arith.constant 0 : i32
    %c0_i32_1 = arith.constant 0 : i32
    return %c0_i32, %c0_i32_0 : i32, i32
  }
  func.func @transform_4(%arg0: i32) -> (i32, i32) {
    %c0_i32 = arith.constant 0 : i32
    %c0_i32_0 = arith.constant 0 : i32
    %c0_i32_1 = arith.constant 0 : i32
    return %c0_i32, %c0_i32_0 : i32, i32
  }
  func.func @transform_5(%arg0: i32) -> (i32, i32) {
    %c0_i32 = arith.constant 0 : i32
    %c0_i32_0 = arith.constant 0 : i32
    %c0_i32_1 = arith.constant 0 : i32
    return %c0_i32, %c0_i32_0 : i32, i32
  }
  func.func @transform_6(%arg0: i32) -> (i32, i32) {
    %c0_i32 = arith.constant 0 : i32
    %c0_i32_0 = arith.constant 0 : i32
    %c0_i32_1 = arith.constant 0 : i32
    return %c0_i32, %c0_i32_0 : i32, i32
  }
  func.func @transform_7(%arg0: i32) -> (i32, i32) {
    %c0_i32 = arith.constant 0 : i32
    %c0_i32_0 = arith.constant 0 : i32
    %c0_i32_1 = arith.constant 0 : i32
    return %c0_i32, %c0_i32_0 : i32, i32
  }
  func.func @transform_8(%arg0: i32) -> (i32, i32) {
    %c0_i32 = arith.constant 0 : i32
    %c0_i32_0 = arith.constant 0 : i32
    %c0_i32_1 = arith.constant 0 : i32
    return %c0_i32, %c0_i32_0 : i32, i32
  }
  func.func @transform_9(%arg0: i32) -> (i32, i32) {
    %c0_i32 = arith.constant 0 : i32
    %c0_i32_0 = arith.constant 0 : i32
    %c0_i32_1 = arith.constant 0 : i32
    return %c0_i32, %c0_i32_0 : i32, i32
  }
  func.func @transform_10(%arg0: i32) -> (i32, i32) {
    %c0_i32 = arith.constant 0 : i32
    %c0_i32_0 = arith.constant 0 : i32
    %c0_i32_1 = arith.constant 0 : i32
    return %c0_i32, %c0_i32_0 : i32, i32
  }
  func.func @transform_11(%arg0: i32) -> (i32, i32, i32) {
    %c0_i32 = arith.constant 0 : i32
    %c0_i32_0 = arith.constant 0 : i32
    %c0_i32_1 = arith.constant 0 : i32
    return %arg0, %c0_i32, %c0_i32_0 : i32, i32, i32
  }
}

</mosaic_0001>

<llo_original>
// kernel: tpu_custom_call.1
$region0: #{tpu_custom_call.1}
  #allocation0 [shape = 'u32[]', space=smem, size = 0x4, offset = 0x4, fixed_abs, tag = 'smem constant byte address 0x4 - core index']
  #allocation1 [shape = 'u32[72,128]{1,0:T(1,128)}', space=vmem, size = 0x9000, scoped, tag = 'internal scratch']
  #allocation2 [shape = 'bf16[18,72]{1,0:T(8,128)(2,1)}', space=vmem, size = 0x1800, scoped, tag = 'scratch operand']
  #allocation3 [shape = 'bf16[18,108]{1,0:T(8,128)(2,1)}', space=vmem, size = 0x1800, scoped, tag = 'scratch operand']
  #allocation4 [shape = 'bf16[18,144]{1,0:T(8,128)(2,1)}', space=vmem, size = 0x3000, scoped, tag = 'scratch operand']
  #allocation5 [shape = 'bf16[18,144]{1,0:T(8,128)(2,1)}', space=vmem, size = 0x3000, scoped, tag = 'scratch operand']
  %s0 = inlined_call_operand.hbm [shape: f32[2,16,64], index: 0, kind: input, shape index: {}]
  %s1 = inlined_call_operand.hbm [shape: f32[2,16,96], index: 1, kind: input, shape index: {}]
  %s2 = inlined_call_operand.hbm [shape: bf16[576,128], index: 2, kind: input, shape index: {}]
  %s3 = inlined_call_operand.hbm [shape: bf16[864,128], index: 3, kind: input, shape index: {}]
  %s4 = inlined_call_operand.hbm [shape: bf16[2304,128], index: 4, kind: input, shape index: {}]
  %s5 = inlined_call_operand.vmem [shape: f32[1,128], index: 5, kind: input, shape index: {}]
  %s6 = inlined_call_operand.vmem [shape: f32[1,128], index: 6, kind: input, shape index: {}]
  %s7 = inlined_call_operand.vmem [shape: f32[1,128], index: 7, kind: input, shape index: {}]
  %s8 = inlined_call_operand.vmem [shape: f32[1,128], index: 8, kind: input, shape index: {}]
  %s9 = inlined_call_operand.vmem [shape: f32[1,128], index: 9, kind: input, shape index: {}]
  %s10 = inlined_call_operand.vmem [shape: f32[1,128], index: 10, kind: input, shape index: {}]
  %s11 = inlined_call_operand.hbm [shape: f32[2,16,128], index: 11, kind: output, shape index: {}]
  %s12 = sld [smem:[#allocation0]]
  $region97: #{tpu_custom_call.1} parent=0
    _
  %s14 = ssub.s32 1, %s12
  %s15 = scalar_select 0, %s14, %s12
  $region1: #{tpu_custom_call.1} parent=0
    #allocation6 [shape = 'u8[16384]{0}', space=vmem, size = 0x4000, scoped, tag = 'input window, operand 0']
    #allocation7 [shape = 's32[2]{0}', space=sflag, size = 0x8, scoped, tag = 'scoped memory for tpu_custom_call.1']
    #allocation8 [shape = 's32[2]{0}', space=sflag, size = 0x8, scoped, tag = 'scoped memory for tpu_custom_call.1']
    #allocation9 [shape = 'u8[16384]{0}', space=vmem, size = 0x4000, scoped, tag = 'input window, operand 1']
    #allocation10 [shape = 's32[2]{0}', space=sflag, size = 0x8, scoped, tag = 'scoped memory for tpu_custom_call.1']
    #allocation11 [shape = 'u8[147456]{0}', space=vmem, size = 0x24000, scoped, tag = 'input window, operand 2, single buffered']
    #allocation12 [shape = 'u8[221184]{0}', space=vmem, size = 0x36000, scoped, tag = 'input window, operand 3, single buffered']
    #allocation13 [shape = 's32[1]{0}', space=sflag, size = 0x4, scoped, tag = 'scoped memory for tpu_custom_call.1']
    #allocation14 [shape = 'u8[589824]{0}', space=vmem, size = 0x90000, scoped, tag = 'input window, operand 4, single buffered']
    #allocation15 [shape = 'u8[16384]{0}', space=vmem, size = 0x4000, scoped, tag = 'output window, operand 0']
    %16 = vsyncpa [#allocation7], 0
    %s17 = scalar_lea.sflag [#allocation7], 1
    %18 = vsyncpa %s17, 0
    %19 = vsyncpa [#allocation10], 0
    %s20 = scalar_lea.sflag [#allocation10], 1
    %21 = vsyncpa %s20, 0
    %22 = vsyncpa [#allocation13], 0
    %23 = vsyncpa [#allocation8], 0
    %s24 = scalar_lea.sflag [#allocation8], 1
    %25 = vsyncpa %s24, 0
    loop: start=0, step=1, limit=4
    $region2: #{tpu_custom_call.1} parent=1 // loop_pre_header
      _
    $region3: #{tpu_custom_call.1} parent=1 // loop_header
      %s27 = sphi 0, %s31
      %p28 = scmp.ge.s32.totalorder %s27, 4
      %s37 = sphi 0, %s39
      %s40 = sphi 0, %s37
      %s41 = sphi 0, %s40
      %s57 = sphi 0, %s41
      %s63 = sphi 0, %s65
      %s66 = sphi 0, %s63
      %s67 = sphi 0, %s66
      %s83 = sphi 0, %s67
      %s87 = sphi 0, %s87
      %s89 = sphi 0, %s87
      %s90 = sphi 0, %s89
      %s104 = sphi 0, %s90
      %s108 = sphi 0, %s108
      %s110 = sphi 0, %s108
      %s111 = sphi 0, %s110
      %s125 = sphi 0, %s111
      %s129 = sphi 0, %s129
      %s131 = sphi 0, %s129
      %s132 = sphi 0, %s131
      %s146 = sphi 0, %s132
      %s150 = sphi 0, %s150
      %s152 = sphi 0, %s150
      %s153 = sphi 0, %s152
      %s167 = sphi 0, %s153
      %s171 = sphi 0, %s171
      %s173 = sphi 0, %s171
      %s174 = sphi 0, %s173
      %s188 = sphi 0, %s174
      %s192 = sphi 0, %s192
      %s194 = sphi 0, %s192
      %s195 = sphi 0, %s194
      %s209 = sphi 0, %s195
      %s213 = sphi 0, %s213
      %s215 = sphi 0, %s213
      %s216 = sphi 0, %s215
      %s230 = sphi 0, %s216
      %s234 = sphi 0, %s234
      %s236 = sphi 0, %s234
      %s237 = sphi 0, %s236
      %s251 = sphi 0, %s237
      %s255 = sphi 0, %s255
      %s257 = sphi 0, %s255
      %s258 = sphi 0, %s257
      %s272 = sphi 0, %s258
      %s278 = sphi 0, %s280
      %s281 = sphi 0, %s278
      %s282 = sphi 0, %s281
      %s298 = sphi 0, %s282
    $region4: #{tpu_custom_call.1} parent=1 // loop_header_branch
      %30 = sbr.rel (%p28) target = $region8
    $region5: #{tpu_custom_call.1} parent=1 // loop_body
      %s32 = ssub.s32 %s27, 1
      %s33 = ssub.s32 %s27, 2
      %s34 = sadd.s32 %s27, 1
      %s35 = ssub.s32 %s27, %s34
      %p36 = scmp.eq.s32.totalorder %s35, 0
      %s38 = sadd.s32 %s37, 1
      %s39 = scalar_select %p36, %s37, %s38
      %p42 = pneg %p36
      %p43 = scmp.eq.s32.totalorder %s27, 1
      %p44 = por %p42, %p43
      %p45 = scmp.ne.s32.totalorder %s37, %s40
      %p46 = scmp.eq.s32.totalorder %s27, 0
      %p47 = por %p45, %p46
      %p48 = scmp.ne.s32.totalorder %s37, %s40
      %p49 = scmp.eq.s32.totalorder %s32, 1
      %p50 = por %p48, %p49
      %p51 = scmp.ne.s32.totalorder %s40, %s41
      %p52 = scmp.eq.s32.totalorder %s32, 0
      %p53 = por %p51, %p52
      %p54 = scmp.ne.s32.totalorder %s40, %s41
      %p55 = scmp.eq.s32.totalorder %s33, 1
      %p56 = por %p54, %p55
      %p58 = scmp.ne.s32.totalorder %s41, %s57
      %p59 = scmp.eq.s32.totalorder %s33, 0
      %p60 = por %p58, %p59
      %s61 = ssub.s32 %s27, %s34
      %p62 = scmp.eq.s32.totalorder %s61, 0
      %s64 = sadd.s32 %s63, 1
      %s65 = scalar_select %p62, %s63, %s64
      %p68 = pneg %p62
      %p69 = scmp.eq.s32.totalorder %s27, 1
      %p70 = por %p68, %p69
      %p71 = scmp.ne.s32.totalorder %s63, %s66
      %p72 = scmp.eq.s32.totalorder %s27, 0
      %p73 = por %p71, %p72
      %p74 = scmp.ne.s32.totalorder %s63, %s66
      %p75 = scmp.eq.s32.totalorder %s32, 1
      %p76 = por %p74, %p75
      %p77 = scmp.ne.s32.totalorder %s66, %s67
      %p78 = scmp.eq.s32.totalorder %s32, 0
      %p79 = por %p77, %p78
      %p80 = scmp.ne.s32.totalorder %s66, %s67
      %p81 = scmp.eq.s32.totalorder %s33, 1
      %p82 = por %p80, %p81
      %p84 = scmp.ne.s32.totalorder %s67, %s83
      %p85 = scmp.eq.s32.totalorder %s33, 0
      %p86 = por %p84, %p85
      %s88 = sadd.s32 %s87, 1
      %p91 = scmp.eq.s32.totalorder %s27, 1
      %p92 = scmp.ne.s32.totalorder %s87, %s89
      %p93 = scmp.eq.s32.totalorder %s27, 0
      %p94 = por %p92, %p93
      %p95 = scmp.ne.s32.totalorder %s87, %s89
      %p96 = scmp.eq.s32.totalorder %s32, 1
      %p97 = por %p95, %p96
      %p98 = scmp.ne.s32.totalorder %s89, %s90
      %p99 = scmp.eq.s32.totalorder %s32, 0
      %p100 = por %p98, %p99
      %p101 = scmp.ne.s32.totalorder %s89, %s90
      %p102 = scmp.eq.s32.totalorder %s33, 1
      %p103 = por %p101, %p102
      %p105 = scmp.ne.s32.totalorder %s90, %s104
      %p106 = scmp.eq.s32.totalorder %s33, 0
      %p107 = por %p105, %p106
      %s109 = sadd.s32 %s108, 1
      %p112 = scmp.eq.s32.totalorder %s27, 1
      %p113 = scmp.ne.s32.totalorder %s108, %s110
      %p114 = scmp.eq.s32.totalorder %s27, 0
      %p115 = por %p113, %p114
      %p116 = scmp.ne.s32.totalorder %s108, %s110
      %p117 = scmp.eq.s32.totalorder %s32, 1
      %p118 = por %p116, %p117
      %p119 = scmp.ne.s32.totalorder %s110, %s111
      %p120 = scmp.eq.s32.totalorder %s32, 0
      %p121 = por %p119, %p120
      %p122 = scmp.ne.s32.totalorder %s110, %s111
      %p123 = scmp.eq.s32.totalorder %s33, 1
      %p124 = por %p122, %p123
      %p126 = scmp.ne.s32.totalorder %s111, %s125
      %p127 = scmp.eq.s32.totalorder %s33, 0
      %p128 = por %p126, %p127
      %s130 = sadd.s32 %s129, 1
      %p133 = scmp.eq.s32.totalorder %s27, 1
      %p134 = scmp.ne.s32.totalorder %s129, %s131
      %p135 = scmp.eq.s32.totalorder %s27, 0
      %p136 = por %p134, %p135
      %p137 = scmp.ne.s32.totalorder %s129, %s131
      %p138 = scmp.eq.s32.totalorder %s32, 1
      %p139 = por %p137, %p138
      %p140 = scmp.ne.s32.totalorder %s131, %s132
      %p141 = scmp.eq.s32.totalorder %s32, 0
      %p142 = por %p140, %p141
      %p143 = scmp.ne.s32.totalorder %s131, %s132
      %p144 = scmp.eq.s32.totalorder %s33, 1
      %p145 = por %p143, %p144
      %p147 = scmp.ne.s32.totalorder %s132, %s146
      %p148 = scmp.eq.s32.totalorder %s33, 0
      %p149 = por %p147, %p148
      %s151 = sadd.s32 %s150, 1
      %p154 = scmp.eq.s32.totalorder %s27, 1
      %p155 = scmp.ne.s32.totalorder %s150, %s152
      %p156 = scmp.eq.s32.totalorder %s27, 0
      %p157 = por %p155, %p156
      %p158 = scmp.ne.s32.totalorder %s150, %s152
      %p159 = scmp.eq.s32.totalorder %s32, 1
      %p160 = por %p158, %p159
      %p161 = scmp.ne.s32.totalorder %s152, %s153
      %p162 = scmp.eq.s32.totalorder %s32, 0
      %p163 = por %p161, %p162
      %p164 = scmp.ne.s32.totalorder %s152, %s153
      %p165 = scmp.eq.s32.totalorder %s33, 1
      %p166 = por %p164, %p165
      %p168 = scmp.ne.s32.totalorder %s153, %s167
      %p169 = scmp.eq.s32.totalorder %s33, 0
      %p170 = por %p168, %p169
      %s172 = sadd.s32 %s171, 1
      %p175 = scmp.eq.s32.totalorder %s27, 1
      %p176 = scmp.ne.s32.totalorder %s171, %s173
      %p177 = scmp.eq.s32.totalorder %s27, 0
      %p178 = por %p176, %p177
      %p179 = scmp.ne.s32.totalorder %s171, %s173
      %p180 = scmp.eq.s32.totalorder %s32, 1
      %p181 = por %p179, %p180
      %p182 = scmp.ne.s32.totalorder %s173, %s174
      %p183 = scmp.eq.s32.totalorder %s32, 0
      %p184 = por %p182, %p183
      %p185 = scmp.ne.s32.totalorder %s173, %s174
      %p186 = scmp.eq.s32.totalorder %s33, 1
      %p187 = por %p185, %p186
      %p189 = scmp.ne.s32.totalorder %s174, %s188
      %p190 = scmp.eq.s32.totalorder %s33, 0
      %p191 = por %p189, %p190
      %s193 = sadd.s32 %s192, 1
      %p196 = scmp.eq.s32.totalorder %s27, 1
      %p197 = scmp.ne.s32.totalorder %s192, %s194
      %p198 = scmp.eq.s32.totalorder %s27, 0
      %p199 = por %p197, %p198
      %p200 = scmp.ne.s32.totalorder %s192, %s194
      %p201 = scmp.eq.s32.totalorder %s32, 1
      %p202 = por %p200, %p201
      %p203 = scmp.ne.s32.totalorder %s194, %s195
      %p204 = scmp.eq.s32.totalorder %s32, 0
      %p205 = por %p203, %p204
      %p206 = scmp.ne.s32.totalorder %s194, %s195
      %p207 = scmp.eq.s32.totalorder %s33, 1
      %p208 = por %p206, %p207
      %p210 = scmp.ne.s32.totalorder %s195, %s209
      %p211 = scmp.eq.s32.totalorder %s33, 0
      %p212 = por %p210, %p211
      %s214 = sadd.s32 %s213, 1
      %p217 = scmp.eq.s32.totalorder %s27, 1
      %p218 = scmp.ne.s32.totalorder %s213, %s215
      %p219 = scmp.eq.s32.totalorder %s27, 0
      %p220 = por %p218, %p219
      %p221 = scmp.ne.s32.totalorder %s213, %s215
      %p222 = scmp.eq.s32.totalorder %s32, 1
      %p223 = por %p221, %p222
      %p224 = scmp.ne.s32.totalorder %s215, %s216
      %p225 = scmp.eq.s32.totalorder %s32, 0
      %p226 = por %p224, %p225
      %p227 = scmp.ne.s32.totalorder %s215, %s216
      %p228 = scmp.eq.s32.totalorder %s33, 1
      %p229 = por %p227, %p228
      %p231 = scmp.ne.s32.totalorder %s216, %s230
      %p232 = scmp.eq.s32.totalorder %s33, 0
      %p233 = por %p231, %p232
      %s235 = sadd.s32 %s234, 1
      %p238 = scmp.eq.s32.totalorder %s27, 1
      %p239 = scmp.ne.s32.totalorder %s234, %s236
      %p240 = scmp.eq.s32.totalorder %s27, 0
      %p241 = por %p239, %p240
      %p242 = scmp.ne.s32.totalorder %s234, %s236
      %p243 = scmp.eq.s32.totalorder %s32, 1
      %p244 = por %p242, %p243
      %p245 = scmp.ne.s32.totalorder %s236, %s237
      %p246 = scmp.eq.s32.totalorder %s32, 0
      %p247 = por %p245, %p246
      %p248 = scmp.ne.s32.totalorder %s236, %s237
      %p249 = scmp.eq.s32.totalorder %s33, 1
      %p250 = por %p248, %p249
      %p252 = scmp.ne.s32.totalorder %s237, %s251
      %p253 = scmp.eq.s32.totalorder %s33, 0
      %p254 = por %p252, %p253
      %s256 = sadd.s32 %s255, 1
      %p259 = scmp.eq.s32.totalorder %s27, 1
      %p260 = scmp.ne.s32.totalorder %s255, %s257
      %p261 = scmp.eq.s32.totalorder %s27, 0
      %p262 = por %p260, %p261
      %p263 = scmp.ne.s32.totalorder %s255, %s257
      %p264 = scmp.eq.s32.totalorder %s32, 1
      %p265 = por %p263, %p264
      %p266 = scmp.ne.s32.totalorder %s257, %s258
      %p267 = scmp.eq.s32.totalorder %s32, 0
      %p268 = por %p266, %p267
      %p269 = scmp.ne.s32.totalorder %s257, %s258
      %p270 = scmp.eq.s32.totalorder %s33, 1
      %p271 = por %p269, %p270
      %p273 = scmp.ne.s32.totalorder %s258, %s272
      %p274 = scmp.eq.s32.totalorder %s33, 0
      %p275 = por %p273, %p274
      %s276 = ssub.s32 %s27, %s34
      %p277 = scmp.eq.s32.totalorder %s276, 0
      %s279 = sadd.s32 %s278, 1
      %s280 = scalar_select %p277, %s278, %s279
      %p283 = pneg %p277
      %p284 = scmp.eq.s32.totalorder %s27, 1
      %p285 = por %p283, %p284
      %p286 = scmp.ne.s32.totalorder %s278, %s281
      %p287 = scmp.eq.s32.totalorder %s27, 0
      %p288 = por %p286, %p287
      %p289 = scmp.ne.s32.totalorder %s278, %s281
      %p290 = scmp.eq.s32.totalorder %s32, 1
      %p291 = por %p289, %p290
      %p292 = scmp.ne.s32.totalorder %s281, %s282
      %p293 = scmp.eq.s32.totalorder %s32, 0
      %p294 = por %p292, %p293
      %p295 = scmp.ne.s32.totalorder %s281, %s282
      %p296 = scmp.eq.s32.totalorder %s33, 1
      %p297 = por %p295, %p296
      %p299 = scmp.ne.s32.totalorder %s282, %s298
      %p300 = scmp.eq.s32.totalorder %s33, 0
      %p301 = por %p299, %p300
      %p302 = scmp.le.s32.totalorder 1, %s27
      %p303 = scmp.lt.s32.totalorder %s27, 3
      %p304 = pnand %p302, %p303
      %p305 = pneg %p304
      // Predicated region
      $region9: #{tpu_custom_call.1} parent=5 // pred_check
        _
      $region10: #{tpu_custom_call.1} parent=5 // pred_check_branch
        %307 = sbr.rel (%p304) target = $region12
      $region11: #{tpu_custom_call.1} parent=5 // pred_region
        %s308 = ssub.s32 %s27, 1
        // Predicated region
        $region13: #{tpu_custom_call.1} parent=11 // pred_check
          %p309 = pneg %p100
        $region14: #{tpu_custom_call.1} parent=11 // pred_check_branch
          %311 = sbr.rel (%p309) target = $region16
        $region15: #{tpu_custom_call.1} parent=11 // pred_region
          %313 = vsyncadd [#allocation10], 0
          %s314 = sshll.u32 %s2, 4
          %s315 = int_to_ptr.hbm [resolvable:$true] %s314
          %s316 = sshll.u32 [#allocation11], 4
          %s317 = int_to_ptr.vmem [resolvable:$true] %s316
          %322 = dma.hbm_to_vmem [thread:$0]  %s315, 4608, %s317, [#allocation10], 64, 64, 4
        $region16: #{tpu_custom_call.1} parent=11 // pred_fallthru
          _
        // Predicated region
        $region17: #{tpu_custom_call.1} parent=11 // pred_check
          %p323 = pneg %p121
        $region18: #{tpu_custom_call.1} parent=11 // pred_check_branch
          %325 = sbr.rel (%p323) target = $region20
        $region19: #{tpu_custom_call.1} parent=11 // pred_region
          %327 = vsyncadd [#allocation13], 0
          %s328 = sshll.u32 %s3, 4
          %s329 = int_to_ptr.hbm [resolvable:$true] %s328
          %s330 = sshll.u32 [#allocation12], 4
          %s331 = int_to_ptr.vmem [resolvable:$true] %s330
          %336 = dma.hbm_to_vmem [thread:$0]  %s329, 6912, %s331, [#allocation13], 64, 64, 4
        $region20: #{tpu_custom_call.1} parent=11 // pred_fallthru
          _
        // Predicated region
        $region21: #{tpu_custom_call.1} parent=11 // pred_check
          %p337 = pneg %p142
        $region22: #{tpu_custom_call.1} parent=11 // pred_check_branch
          %339 = sbr.rel (%p337) target = $region24
        $region23: #{tpu_custom_call.1} parent=11 // pred_region
          %341 = vsyncadd [#allocation13], 0
          %s342 = sshll.u32 %s4, 4
          %s343 = int_to_ptr.hbm [resolvable:$true] %s342
          %s344 = sshll.u32 [#allocation14], 4
          %s345 = int_to_ptr.vmem [resolvable:$true] %s344
          %350 = dma.hbm_to_vmem [thread:$0]  %s343, 18432, %s345, [#allocation13], 64, 64, 4
        $region24: #{tpu_custom_call.1} parent=11 // pred_fallthru
          _
        // Predicated region
        $region25: #{tpu_custom_call.1} parent=11 // pred_check
          %p351 = pneg %p163
        $region26: #{tpu_custom_call.1} parent=11 // pred_check_branch
          %353 = sbr.rel (%p351) target = $region28
        $region27: #{tpu_custom_call.1} parent=11 // pred_region
          _
        $region28: #{tpu_custom_call.1} parent=11 // pred_fallthru
          _
        // Predicated region
        $region29: #{tpu_custom_call.1} parent=11 // pred_check
          %p354 = pneg %p184
        $region30: #{tpu_custom_call.1} parent=11 // pred_check_branch
          %356 = sbr.rel (%p354) target = $region32
        $region31: #{tpu_custom_call.1} parent=11 // pred_region
          _
        $region32: #{tpu_custom_call.1} parent=11 // pred_fallthru
          _
        // Predicated region
        $region33: #{tpu_custom_call.1} parent=11 // pred_check
          %p357 = pneg %p205
        $region34: #{tpu_custom_call.1} parent=11 // pred_check_branch
          %359 = sbr.rel (%p357) target = $region36
        $region35: #{tpu_custom_call.1} parent=11 // pred_region
          _
        $region36: #{tpu_custom_call.1} parent=11 // pred_fallthru
          _
        // Predicated region
        $region37: #{tpu_custom_call.1} parent=11 // pred_check
          %p360 = pneg %p226
        $region38: #{tpu_custom_call.1} parent=11 // pred_check_branch
          %362 = sbr.rel (%p360) target = $region40
        $region39: #{tpu_custom_call.1} parent=11 // pred_region
          _
        $region40: #{tpu_custom_call.1} parent=11 // pred_fallthru
          _
        // Predicated region
        $region41: #{tpu_custom_call.1} parent=11 // pred_check
          %p363 = pneg %p247
        $region42: #{tpu_custom_call.1} parent=11 // pred_check_branch
          %365 = sbr.rel (%p363) target = $region44
        $region43: #{tpu_custom_call.1} parent=11 // pred_region
          _
        $region44: #{tpu_custom_call.1} parent=11 // pred_fallthru
          _
        // Predicated region
        $region45: #{tpu_custom_call.1} parent=11 // pred_check
          %p366 = pneg %p268
        $region46: #{tpu_custom_call.1} parent=11 // pred_check_branch
          %368 = sbr.rel (%p366) target = $region48
        $region47: #{tpu_custom_call.1} parent=11 // pred_region
          _
        $region48: #{tpu_custom_call.1} parent=11 // pred_fallthru
          _
      $region12: #{tpu_custom_call.1} parent=5 // pred_fallthru
        _
      %p369 = scmp.lt.s32.totalorder %s27, 2
      // Predicated region
      $region49: #{tpu_custom_call.1} parent=5 // pred_check
        %p370 = pneg %p369
      $region50: #{tpu_custom_call.1} parent=5 // pred_check_branch
        %372 = sbr.rel (%p370) target = $region52
      $region51: #{tpu_custom_call.1} parent=5 // pred_region
        // Predicated region
        $region53: #{tpu_custom_call.1} parent=51 // pred_check
          %p373 = pneg %p47
        $region54: #{tpu_custom_call.1} parent=51 // pred_check_branch
          %375 = sbr.rel (%p373) target = $region56
        $region55: #{tpu_custom_call.1} parent=51 // pred_region
          %s376 = sand.u32 %s37, 1
          %s377 = scalar_lea.sflag [#allocation7], %s376
          %s378 = sand.u32 %s37, 1
          %s379 = smul.addr %s378, 16
          %s380 = scalar_lea.vmem [#allocation6], %s379
          %382 = vsyncadd %s377, 0
          %s383 = smul.addr %s27, 2
          %s384 = smul.addr %s383, 8
          %s385 = scalar_lea.hbm %s0, %s384
          %s386 = sshll.u32 %s385, 4
          %s387 = int_to_ptr.hbm [resolvable:$true] %s386
          %s388 = sshll.u32 %s380, 4
          %s389 = int_to_ptr.vmem [resolvable:$true] %s388
          %394 = dma.hbm_to_vmem [thread:$0]  %s387, 256, %s389, %s377, 128, 128, 8
        $region56: #{tpu_custom_call.1} parent=51 // pred_fallthru
          _
        // Predicated region
        $region57: #{tpu_custom_call.1} parent=51 // pred_check
          %p395 = pneg %p73
        $region58: #{tpu_custom_call.1} parent=51 // pred_check_branch
          %397 = sbr.rel (%p395) target = $region60
        $region59: #{tpu_custom_call.1} parent=51 // pred_region
          %s398 = sand.u32 %s27, 1
          %s399 = scalar_lea.sflag [#allocation10], %s398
          %s400 = sand.u32 %s63, 1
          %s401 = smul.addr %s400, 16
          %s402 = scalar_lea.vmem [#allocation9], %s401
          %404 = vsyncadd %s399, 0
          %s405 = smul.addr %s27, 2
          %s406 = smul.addr %s405, 8
          %s407 = scalar_lea.hbm %s1, %s406
          %s408 = sshll.u32 %s407, 4
          %s409 = int_to_ptr.hbm [resolvable:$true] %s408
          %s410 = sshll.u32 %s402, 4
          %s411 = int_to_ptr.vmem [resolvable:$true] %s410
          %416 = dma.hbm_to_vmem [thread:$0]  %s409, 256, %s411, %s399, 128, 128, 8
        $region60: #{tpu_custom_call.1} parent=51 // pred_fallthru
          _
      $region52: #{tpu_custom_call.1} parent=5 // pred_fallthru
        _
      %p417 = scmp.le.s32.totalorder 1, %s27
      %p418 = scmp.lt.s32.totalorder %s27, 3
      %p419 = pnand %p417, %p418
      %p420 = pneg %p419
      // Predicated region
      $region61: #{tpu_custom_call.1} parent=5 // pred_check
        _
      $region62: #{tpu_custom_call.1} parent=5 // pred_check_branch
        %422 = sbr.rel (%p419) target = $region64
      $region63: #{tpu_custom_call.1} parent=5 // pred_region
        %s423 = ssub.s32 %s27, 1
        %s424 = sand.u32 %s40, 1
        %s425 = scalar_lea.sflag [#allocation7], %s424
        %s426 = sand.u32 %s40, 1
        %s427 = smul.addr %s426, 16
        %s428 = scalar_lea.vmem [#allocation6], %s427
        // Predicated region
        $region65: #{tpu_custom_call.1} parent=63 // pred_check
          %p429 = pneg %p53
        $region66: #{tpu_custom_call.1} parent=63 // pred_check_branch
          %431 = sbr.rel (%p429) target = $region68
        $region67: #{tpu_custom_call.1} parent=63 // pred_region
          %433 = dma.done %s425, 256
        $region68: #{tpu_custom_call.1} parent=63 // pred_fallthru
          _
        %s434 = sand.u32 %s32, 1
        %s435 = scalar_lea.sflag [#allocation10], %s434
        %s436 = sand.u32 %s66, 1
        %s437 = smul.addr %s436, 16
        %s438 = scalar_lea.vmem [#allocation9], %s437
        // Predicated region
        $region69: #{tpu_custom_call.1} parent=63 // pred_check
          %p439 = pneg %p79
        $region70: #{tpu_custom_call.1} parent=63 // pred_check_branch
          %441 = sbr.rel (%p439) target = $region72
        $region71: #{tpu_custom_call.1} parent=63 // pred_region
          %443 = dma.done %s435, 256
        $region72: #{tpu_custom_call.1} parent=63 // pred_fallthru
          _
        // Predicated region
        $region73: #{tpu_custom_call.1} parent=63 // pred_check
          %p444 = pneg %p100
        $region74: #{tpu_custom_call.1} parent=63 // pred_check_branch
          %446 = sbr.rel (%p444) target = $region76
        $region75: #{tpu_custom_call.1} parent=63 // pred_region
          %448 = dma.done [#allocation10], 4608
        $region76: #{tpu_custom_call.1} parent=63 // pred_fallthru
          _
        // Predicated region
        $region77: #{tpu_custom_call.1} parent=63 // pred_check
          %p449 = pneg %p121
        $region78: #{tpu_custom_call.1} parent=63 // pred_check_branch
          %451 = sbr.rel (%p449) target = $region80
        $region79: #{tpu_custom_call.1} parent=63 // pred_region
          %453 = dma.done [#allocation13], 6912
        $region80: #{tpu_custom_call.1} parent=63 // pred_fallthru
          _
        // Predicated region
        $region81: #{tpu_custom_call.1} parent=63 // pred_check
          %p454 = pneg %p142
        $region82: #{tpu_custom_call.1} parent=63 // pred_check_branch
          %456 = sbr.rel (%p454) target = $region84
        $region83: #{tpu_custom_call.1} parent=63 // pred_region
          %458 = dma.done [#allocation13], 18432
        $region84: #{tpu_custom_call.1} parent=63 // pred_fallthru
          _
        %s459 = sand.u32 %s40, 1
        %s460 = scalar_lea.sflag [#allocation7], %s459
        %s461 = sand.u32 %s40, 1
        %s462 = smul.addr %s461, 16
        %s463 = scalar_lea.vmem [#allocation6], %s462
        %p464 = pneg %p53
        %p465 = pneg %p50
        %s466 = sand.u32 %s32, 1
        %s467 = scalar_lea.sflag [#allocation10], %s466
        %s468 = sand.u32 %s66, 1
        %s469 = smul.addr %s468, 16
        %s470 = scalar_lea.vmem [#allocation9], %s469
        %p471 = pneg %p79
        %p472 = pneg %p76
        %p473 = pneg %p100
        %p474 = pneg %p97
        %p475 = pneg %p121
        %p476 = pneg %p118
        %p477 = pneg %p142
        %p478 = pneg %p139
        %p479 = pneg %p163
        %p480 = pneg %p160
        %p481 = pneg %p184
        %p482 = pneg %p181
        %p483 = pneg %p205
        %p484 = pneg %p202
        %p485 = pneg %p226
        %p486 = pneg %p223
        %p487 = pneg %p247
        %p488 = pneg %p244
        %p489 = pneg %p268
        %p490 = pneg %p265
        %p491 = pneg %p294
        %p492 = pneg %p291
        %s493 = sand.u32 %s281, 1
        %s494 = scalar_lea.sflag [#allocation8], %s493
        %s495 = sand.u32 %s281, 1
        %s496 = smul.addr %s495, 16
        %s497 = scalar_lea.vmem [#allocation15], %s496
        %vm499 = vcmask 584704
        %500 = vst.msk [vmem:[#allocation2] sm:$0xf] %vm499, 0
        %501 = vst.msk [vmem:[#allocation2 + $0x4] sm:$0xf] %vm499, 0
        %vm502 = vcmask 581632
        %503 = vst.msk [vmem:[#allocation2 + $0x8] sm:$0x1] %vm502, 0
        %vm504 = vcmask 879616
        %505 = vst.msk [vmem:[#allocation3] sm:$0xf] %vm504, 0
        %506 = vst.msk [vmem:[#allocation3 + $0x4] sm:$0xf] %vm504, 0
        %vm507 = vcmask 876544
        %508 = vst.msk [vmem:[#allocation3 + $0x8] sm:$0x1] %vm507, 0
        %vm509 = vcmask 1043456
        %vm510 = vcmask 130052
        %vm511 = vmor %vm510, %vm509
        %512 = vst.msk [vmem:[#allocation4] sm:$0xff] %vm511, 0
        %513 = vst.msk [vmem:[#allocation4 + $0x8] sm:$0xff] %vm511, 0
        %vm514 = vcmask 1040384
        %vm515 = vcmask 126980
        %vm516 = vmor %vm515, %vm514
        %517 = vst.msk [vmem:[#allocation4 + $0x10] sm:$0x11] %vm516, 0
        %518 = vst.msk [vmem:[#allocation5] sm:$0xff] %vm511, 0
        %519 = vst.msk [vmem:[#allocation5 + $0x8] sm:$0xff] %vm511, 0
        %520 = vst.msk [vmem:[#allocation5 + $0x10] sm:$0x11] %vm516, 0
        %v521 = vld [vmem:[%s428] sm:$0xff]
        %v522 = vld [vmem:[%s428 + $0x8] sm:$0xff]
        %v523 = vpack.c.bf16 %v521, %v521
        %v524 = vpack.c.bf16 %v522, %v522
        %vm525 = vsmask.f32 256
        %vm526 = vsmask.f32 4368
        %vm527 = vmor %vm525, %vm526
        %v529 = vshrl.u32 %v523, 16
        %v531 = vrot.slane %v529, 7
        %v532 = vshll.u32 %v523, 16
        %v534 = vor.u32 %v531, %v532
        %v535 = vrot.slane %v531, 4
        %v537 = vshrl.u32 %v524, 16
        %v539 = vrot.slane %v537, 7
        %v540 = vshll.u32 %v524, 16
        %v542 = vor.u32 %v539, %v540
        %v543 = vsel %vm527, %v535, %v542
        %v544 = vrot.slane %v539, 4
        %545 = vrot.lane.b32.xlu0 %v534, 4
        %v546 = vpop.permute.xlu0 %545
        %547 = vrot.lane.b32.xlu0 %v543, 4
        %v548 = vpop.permute.xlu0 %547
        %549 = vrot.lane.b32.xlu0 %v544, 4
        %v550 = vpop.permute.xlu0 %549
        %vm554 = vcmask 551968
        %vm555 = vsmask.f32 7938
        %vm556 = vmand %vm554, %vm555
        %v557 = vld [vmem:[#allocation2] sm:$0xf]
        %v558 = vsel %vm556, %v546, %v557
        %559 = vst [vmem:[#allocation2] sm:$0xf] %v558
        %vm560 = vcmask 551968
        %561 = vst.msk [vmem:[#allocation2 + $0x4] sm:$0xf] %vm560, %v548
        %vm562 = vcmask 548896
        %vm563 = vmand %vm562, %vm525
        %v564 = vld [vmem:[#allocation2 + $0x8] sm:$0x1]
        %v565 = vsel %vm563, %v550, %v564
        %566 = vst [vmem:[#allocation2 + $0x8] sm:$0x1] %v565
        %v567 = vld [vmem:[%s438] sm:$0xff]
        %v568 = vld [vmem:[%s438 + $0x8] sm:$0xff]
        %v569 = vpack.c.bf16 %v567, %v567
        %v570 = vpack.c.bf16 %v568, %v568
        %v572 = vshrl.u32 %v569, 16
        %v574 = vrot.slane %v572, 7
        %v575 = vshll.u32 %v569, 16
        %v577 = vor.u32 %v574, %v575
        %v578 = vrot.slane %v574, 4
        %v580 = vshrl.u32 %v570, 16
        %v582 = vrot.slane %v580, 7
        %v583 = vshll.u32 %v570, 16
        %v585 = vor.u32 %v582, %v583
        %v586 = vsel %vm527, %v578, %v585
        %v587 = vrot.slane %v582, 4
        %588 = vrot.lane.b32.xlu0 %v577, 6
        %v589 = vpop.permute.xlu0 %588
        %590 = vrot.lane.b32.xlu0 %v586, 6
        %v591 = vpop.permute.xlu0 %590
        %592 = vrot.lane.b32.xlu0 %v587, 6
        %v593 = vpop.permute.xlu0 %592
        %vm597 = vcmask 830512
        %vm598 = vmand %vm597, %vm555
        %v599 = vld [vmem:[#allocation3] sm:$0xf]
        %v600 = vsel %vm598, %v589, %v599
        %601 = vst [vmem:[#allocation3] sm:$0xf] %v600
        %vm602 = vcmask 830512
        %603 = vst.msk [vmem:[#allocation3 + $0x4] sm:$0xf] %vm602, %v591
        %vm604 = vcmask 827440
        %vm605 = vmand %vm604, %vm525
        %v606 = vld [vmem:[#allocation3 + $0x8] sm:$0x1]
        %v607 = vsel %vm605, %v593, %v606
        %608 = vst [vmem:[#allocation3 + $0x8] sm:$0x1] %v607
        %v609 = vld [vmem:[#allocation2] sm:$0xf]
        %v610 = vld [vmem:[#allocation2 + $0x4] sm:$0xf]
        %v611 = vld [vmem:[#allocation11] sm:$0xf]
        %v612 = vld [vmem:[#allocation11 + $0x4] sm:$0xf]
        %v613 = vld [vmem:[#allocation11 + $0x8] sm:$0xf]
        %v614 = vld [vmem:[#allocation11 + $0xc] sm:$0xf]
        %v615 = vld [vmem:[#allocation11 + $0x10] sm:$0xf]
        %v616 = vld [vmem:[#allocation11 + $0x14] sm:$0xf]
        %v617 = vld [vmem:[#allocation11 + $0x18] sm:$0xf]
        %v618 = vld [vmem:[#allocation11 + $0x1c] sm:$0xf]
        %v619 = vld [vmem:[#allocation11 + $0x20] sm:$0xf]
        %v620 = vld [vmem:[#allocation11 + $0x24] sm:$0xf]
        %v621 = vld [vmem:[#allocation11 + $0x28] sm:$0xf]
        %v622 = vld [vmem:[#allocation11 + $0x2c] sm:$0xf]
        %v623 = vld [vmem:[#allocation11 + $0x30] sm:$0xf]
        %v624 = vld [vmem:[#allocation11 + $0x34] sm:$0xf]
        %v625 = vld [vmem:[#allocation11 + $0x38] sm:$0xf]
        %v626 = vld [vmem:[#allocation11 + $0x3c] sm:$0xf]
        %v629 = vunpack.c.l.b16 %v609
        %v630 = vunpack.c.l.b16 %v610
        %v631 = vpack.c.b16 %v630, %v629
        %632 = vrot.lane.b32.xlu0 %v631, 124
        %v633 = vpop.permute.xlu0 %632
        %v642 = vunpack.c.l.b16 %v619
        %v643 = vunpack.c.l.b16 %v620
        %v644 = vunpack.c.l.b16 %v621
        %v645 = vunpack.c.l.b16 %v622
        %v646 = vunpack.c.l.b16 %v623
        %v647 = vunpack.c.l.b16 %v624
        %v648 = vunpack.c.l.b16 %v625
        %v649 = vunpack.c.l.b16 %v626
        %v650 = vpack.c.b16 %v643, %v642
        %v651 = vpack.c.b16 %v645, %v644
        %v652 = vpack.c.b16 %v647, %v646
        %v653 = vpack.c.b16 %v649, %v648
        %vm658 = vcmask 523264
        %v660 = vsel %vm658, %v633, 0
        %662 = vmatpush.bf16.msra.mxu0 0
        %663 = vmatpush.bf16.msra.mxu0 0
        %664 = vmatpush.bf16.msra.mxu0 0
        %665 = vmatpush.bf16.msra.mxu0 0
        %666 = vmatpush.bf16.msra.mxu0 %v653
        %667 = vmatpush.bf16.msra.mxu0 %v652
        %668 = vmatpush.bf16.msra.mxu0 %v651
        %669 = vmatpush.bf16.msra.mxu0 %v650
        %670 = vmatmul.bf16.gmra.mxu0 %v660
        %v671 = vpop.f32.mrf.mxu0
        %v672 = vadd.f32 0.0, %v671
        %v673 = vpop.f32.mrf.mxu0
        %v674 = vadd.f32 0.0, %v673
        %675 = vdwg.mxu0
        %v684 = vunpack.c.l.b16 %v611
        %v685 = vunpack.c.l.b16 %v612
        %v686 = vunpack.c.l.b16 %v613
        %v687 = vunpack.c.l.b16 %v614
        %v688 = vunpack.c.l.b16 %v615
        %v689 = vunpack.c.l.b16 %v616
        %v690 = vunpack.c.l.b16 %v617
        %v691 = vunpack.c.l.b16 %v618
        %v692 = vpack.c.b16 %v685, %v684
        %v693 = vpack.c.b16 %v687, %v686
        %v694 = vpack.c.b16 %v689, %v688
        %v695 = vpack.c.b16 %v691, %v690
        %v701 = vsel %vm658, %v631, 0
        %703 = vmatpush.bf16.msra.mxu0 0
        %704 = vmatpush.bf16.msra.mxu0 0
        %705 = vmatpush.bf16.msra.mxu0 0
        %706 = vmatpush.bf16.msra.mxu0 0
        %707 = vmatpush.bf16.msra.mxu0 %v695
        %708 = vmatpush.bf16.msra.mxu0 %v694
        %709 = vmatpush.bf16.msra.mxu0 %v693
        %710 = vmatpush.bf16.msra.mxu0 %v692
        %711 = vmatmul.bf16.gmra.mxu0 %v701
        %v712 = vpop.f32.mrf.mxu0
        %v713 = vadd.f32 %v672, %v712
        %v714 = vpop.f32.mrf.mxu0
        %v715 = vadd.f32 %v674, %v714
        %716 = vdwg.mxu0
        %v717 = vld [vmem:[#allocation11 + $0x40] sm:$0xf]
        %v718 = vld [vmem:[#allocation11 + $0x44] sm:$0xf]
        %v719 = vld [vmem:[#allocation11 + $0x48] sm:$0xf]
        %v720 = vld [vmem:[#allocation11 + $0x4c] sm:$0xf]
        %v721 = vld [vmem:[#allocation11 + $0x50] sm:$0xf]
        %v722 = vld [vmem:[#allocation11 + $0x54] sm:$0xf]
        %v723 = vld [vmem:[#allocation11 + $0x58] sm:$0xf]
        %v724 = vld [vmem:[#allocation11 + $0x5c] sm:$0xf]
        %725 = vrot.lane.b32.xlu0 %v631, 120
        %v726 = vpop.permute.xlu0 %725
        %v735 = vunpack.c.l.b16 %v717
        %v736 = vunpack.c.l.b16 %v718
        %v737 = vunpack.c.l.b16 %v719
        %v738 = vunpack.c.l.b16 %v720
        %v739 = vunpack.c.l.b16 %v721
        %v740 = vunpack.c.l.b16 %v722
        %v741 = vunpack.c.l.b16 %v723
        %v742 = vunpack.c.l.b16 %v724
        %v743 = vpack.c.b16 %v736, %v735
        %v744 = vpack.c.b16 %v738, %v737
        %v745 = vpack.c.b16 %v740, %v739
        %v746 = vpack.c.b16 %v742, %v741
        %v752 = vsel %vm658, %v726, 0
        %754 = vmatpush.bf16.msra.mxu0 0
        %755 = vmatpush.bf16.msra.mxu0 0
        %756 = vmatpush.bf16.msra.mxu0 0
        %757 = vmatpush.bf16.msra.mxu0 0
        %758 = vmatpush.bf16.msra.mxu0 %v746
        %759 = vmatpush.bf16.msra.mxu0 %v745
        %760 = vmatpush.bf16.msra.mxu0 %v744
        %761 = vmatpush.bf16.msra.mxu0 %v743
        %762 = vmatmul.bf16.gmra.mxu0 %v752
        %v763 = vpop.f32.mrf.mxu0
        %v764 = vadd.f32 0.0, %v763
        %v765 = vpop.f32.mrf.mxu0
        %v766 = vadd.f32 0.0, %v765
        %767 = vdwg.mxu0
        %v768 = vadd.f32 %v713, %v764
        %v769 = vadd.f32 %v715, %v766
        %v770 = vld [vmem:[#allocation2] sm:$0xf]
        %v771 = vld [vmem:[#allocation2 + $0x4] sm:$0xf]
        %v772 = vld [vmem:[#allocation2 + $0x8] sm:$0x1]
        %v773 = vld [vmem:[#allocation11 + $0x60] sm:$0xf]
        %v774 = vld [vmem:[#allocation11 + $0x64] sm:$0xf]
        %v775 = vld [vmem:[#allocation11 + $0x68] sm:$0xf]
        %v776 = vld [vmem:[#allocation11 + $0x6c] sm:$0xf]
        %v777 = vld [vmem:[#allocation11 + $0x70] sm:$0xf]
        %v778 = vld [vmem:[#allocation11 + $0x74] sm:$0xf]
        %v779 = vld [vmem:[#allocation11 + $0x78] sm:$0xf]
        %v780 = vld [vmem:[#allocation11 + $0x7c] sm:$0xf]
        %v784 = vunpack.c.l.b16 %v770
        %v785 = vunpack.c.l.b16 %v771
        %v786 = vunpack.c.l.b16 %v772
        %v787 = vpack.c.b16 %v785, %v784
        %v788 = vpack.c.b16 %v786, %v786
        %vm789 = vsmask.f32 7424
        %v791 = vshrl.u32 %v787, 16
        %v793 = vshll.u32 %v787, 16
        %v795 = vrot.slane %v793, 1
        %v796 = vor.u32 %v791, %v795
        %v798 = vshll.u32 %v788, 16
        %v800 = vrot.slane %v798, 1
        %v801 = vsel %vm789, %v796, %v800
        %v810 = vunpack.c.l.b16 %v773
        %v811 = vunpack.c.l.b16 %v774
        %v812 = vunpack.c.l.b16 %v775
        %v813 = vunpack.c.l.b16 %v776
        %v814 = vunpack.c.l.b16 %v777
        %v815 = vunpack.c.l.b16 %v778
        %v816 = vunpack.c.l.b16 %v779
        %v817 = vunpack.c.l.b16 %v780
        %v818 = vpack.c.b16 %v811, %v810
        %v819 = vpack.c.b16 %v813, %v812
        %v820 = vpack.c.b16 %v815, %v814
        %v821 = vpack.c.b16 %v817, %v816
        %v827 = vsel %vm658, %v801, 0
        %829 = vmatpush.bf16.msra.mxu0 0
        %830 = vmatpush.bf16.msra.mxu0 0
        %831 = vmatpush.bf16.msra.mxu0 0
        %832 = vmatpush.bf16.msra.mxu0 0
        %833 = vmatpush.bf16.msra.mxu0 %v821
        %834 = vmatpush.bf16.msra.mxu0 %v820
        %835 = vmatpush.bf16.msra.mxu0 %v819
        %836 = vmatpush.bf16.msra.mxu0 %v818
        %837 = vmatmul.bf16.gmra.mxu0 %v827
        %v838 = vpop.f32.mrf.mxu0
        %v839 = vadd.f32 0.0, %v838
        %v840 = vpop.f32.mrf.mxu0
        %v841 = vadd.f32 0.0, %v840
        %842 = vdwg.mxu0
        %v843 = vadd.f32 %v768, %v839
        %v844 = vadd.f32 %v769, %v841
        %v845 = vld [vmem:[#allocation11 + $0x80] sm:$0xf]
        %v846 = vld [vmem:[#allocation11 + $0x84] sm:$0xf]
        %v847 = vld [vmem:[#allocation11 + $0x88] sm:$0xf]
        %v848 = vld [vmem:[#allocation11 + $0x8c] sm:$0xf]
        %v849 = vld [vmem:[#allocation11 + $0x90] sm:$0xf]
        %v850 = vld [vmem:[#allocation11 + $0x94] sm:$0xf]
        %v851 = vld [vmem:[#allocation11 + $0x98] sm:$0xf]
        %v852 = vld [vmem:[#allocation11 + $0x9c] sm:$0xf]
        %853 = vrot.lane.b32.xlu0 %v801, 124
        %v854 = vpop.permute.xlu0 %853
        %v863 = vunpack.c.l.b16 %v845
        %v864 = vunpack.c.l.b16 %v846
        %v865 = vunpack.c.l.b16 %v847
        %v866 = vunpack.c.l.b16 %v848
        %v867 = vunpack.c.l.b16 %v849
        %v868 = vunpack.c.l.b16 %v850
        %v869 = vunpack.c.l.b16 %v851
        %v870 = vunpack.c.l.b16 %v852
        %v871 = vpack.c.b16 %v864, %v863
        %v872 = vpack.c.b16 %v866, %v865
        %v873 = vpack.c.b16 %v868, %v867
        %v874 = vpack.c.b16 %v870, %v869
        %v880 = vsel %vm658, %v854, 0
        %882 = vmatpush.bf16.msra.mxu0 0
        %883 = vmatpush.bf16.msra.mxu0 0
        %884 = vmatpush.bf16.msra.mxu0 0
        %885 = vmatpush.bf16.msra.mxu0 0
        %886 = vmatpush.bf16.msra.mxu0 %v874
        %887 = vmatpush.bf16.msra.mxu0 %v873
        %888 = vmatpush.bf16.msra.mxu0 %v872
        %889 = vmatpush.bf16.msra.mxu0 %v871
        %890 = vmatmul.bf16.gmra.mxu0 %v880
        %v891 = vpop.f32.mrf.mxu0
        %v892 = vadd.f32 0.0, %v891
        %v893 = vpop.f32.mrf.mxu0
        %v894 = vadd.f32 0.0, %v893
        %895 = vdwg.mxu0
        %v896 = vadd.f32 %v843, %v892
        %v897 = vadd.f32 %v844, %v894
        %v898 = vld [vmem:[#allocation11 + $0xa0] sm:$0xf]
        %v899 = vld [vmem:[#allocation11 + $0xa4] sm:$0xf]
        %v900 = vld [vmem:[#allocation11 + $0xa8] sm:$0xf]
        %v901 = vld [vmem:[#allocation11 + $0xac] sm:$0xf]
        %v902 = vld [vmem:[#allocation11 + $0xb0] sm:$0xf]
        %v903 = vld [vmem:[#allocation11 + $0xb4] sm:$0xf]
        %v904 = vld [vmem:[#allocation11 + $0xb8] sm:$0xf]
        %v905 = vld [vmem:[#allocation11 + $0xbc] sm:$0xf]
        %906 = vrot.lane.b32.xlu0 %v801, 120
        %v907 = vpop.permute.xlu0 %906
        %v916 = vunpack.c.l.b16 %v898
        %v917 = vunpack.c.l.b16 %v899
        %v918 = vunpack.c.l.b16 %v900
        %v919 = vunpack.c.l.b16 %v901
        %v920 = vunpack.c.l.b16 %v902
        %v921 = vunpack.c.l.b16 %v903
        %v922 = vunpack.c.l.b16 %v904
        %v923 = vunpack.c.l.b16 %v905
        %v924 = vpack.c.b16 %v917, %v916
        %v925 = vpack.c.b16 %v919, %v918
        %v926 = vpack.c.b16 %v921, %v920
        %v927 = vpack.c.b16 %v923, %v922
        %v933 = vsel %vm658, %v907, 0
        %935 = vmatpush.bf16.msra.mxu0 0
        %936 = vmatpush.bf16.msra.mxu0 0
        %937 = vmatpush.bf16.msra.mxu0 0
        %938 = vmatpush.bf16.msra.mxu0 0
        %939 = vmatpush.bf16.msra.mxu0 %v927
        %940 = vmatpush.bf16.msra.mxu0 %v926
        %941 = vmatpush.bf16.msra.mxu0 %v925
        %942 = vmatpush.bf16.msra.mxu0 %v924
        %943 = vmatmul.bf16.gmra.mxu0 %v933
        %v944 = vpop.f32.mrf.mxu0
        %v945 = vadd.f32 0.0, %v944
        %v946 = vpop.f32.mrf.mxu0
        %v947 = vadd.f32 0.0, %v946
        %948 = vdwg.mxu0
        %v949 = vadd.f32 %v896, %v945
        %v950 = vadd.f32 %v897, %v947
        %v951 = vld [vmem:[#allocation2] sm:$0xe]
        %v952 = vld [vmem:[#allocation11 + $0xc0] sm:$0xf]
        %v953 = vld [vmem:[#allocation11 + $0xc4] sm:$0xf]
        %v954 = vld [vmem:[#allocation11 + $0xc8] sm:$0xf]
        %v955 = vld [vmem:[#allocation11 + $0xcc] sm:$0xf]
        %v956 = vld [vmem:[#allocation11 + $0xd0] sm:$0xf]
        %v957 = vld [vmem:[#allocation11 + $0xd4] sm:$0xf]
        %v958 = vld [vmem:[#allocation11 + $0xd8] sm:$0xf]
        %v959 = vld [vmem:[#allocation11 + $0xdc] sm:$0xf]
        %v961 = vunpack.c.l.b16 %v951
        %v962 = vpack.c.b16 %v785, %v961
        %vm963 = vcmask 1046528
        %v964 = vrot.slane %v962, 1
        %v965 = vrot.slane %v788, 1
        %v966 = vsel %vm963, %v964, %v965
        %v975 = vunpack.c.l.b16 %v952
        %v976 = vunpack.c.l.b16 %v953
        %v977 = vunpack.c.l.b16 %v954
        %v978 = vunpack.c.l.b16 %v955
        %v979 = vunpack.c.l.b16 %v956
        %v980 = vunpack.c.l.b16 %v957
        %v981 = vunpack.c.l.b16 %v958
        %v982 = vunpack.c.l.b16 %v959
        %v983 = vpack.c.b16 %v976, %v975
        %v984 = vpack.c.b16 %v978, %v977
        %v985 = vpack.c.b16 %v980, %v979
        %v986 = vpack.c.b16 %v982, %v981
        %v992 = vsel %vm658, %v966, 0
        %994 = vmatpush.bf16.msra.mxu0 0
        %995 = vmatpush.bf16.msra.mxu0 0
        %996 = vmatpush.bf16.msra.mxu0 0
        %997 = vmatpush.bf16.msra.mxu0 0
        %998 = vmatpush.bf16.msra.mxu0 %v986
        %999 = vmatpush.bf16.msra.mxu0 %v985
        %1000 = vmatpush.bf16.msra.mxu0 %v984
        %1001 = vmatpush.bf16.msra.mxu0 %v983
        %1002 = vmatmul.bf16.gmra.mxu0 %v992
        %v1003 = vpop.f32.mrf.mxu0
        %v1004 = vadd.f32 0.0, %v1003
        %v1005 = vpop.f32.mrf.mxu0
        %v1006 = vadd.f32 0.0, %v1005
        %1007 = vdwg.mxu0
        %v1008 = vadd.f32 %v949, %v1004
        %v1009 = vadd.f32 %v950, %v1006
        %v1010 = vld [vmem:[#allocation11 + $0xe0] sm:$0xf]
        %v1011 = vld [vmem:[#allocation11 + $0xe4] sm:$0xf]
        %v1012 = vld [vmem:[#allocation11 + $0xe8] sm:$0xf]
        %v1013 = vld [vmem:[#allocation11 + $0xec] sm:$0xf]
        %v1014 = vld [vmem:[#allocation11 + $0xf0] sm:$0xf]
        %v1015 = vld [vmem:[#allocation11 + $0xf4] sm:$0xf]
        %v1016 = vld [vmem:[#allocation11 + $0xf8] sm:$0xf]
        %v1017 = vld [vmem:[#allocation11 + $0xfc] sm:$0xf]
        %1018 = vrot.lane.b32.xlu0 %v966, 124
        %v1019 = vpop.permute.xlu0 %1018
        %v1028 = vunpack.c.l.b16 %v1010
        %v1029 = vunpack.c.l.b16 %v1011
        %v1030 = vunpack.c.l.b16 %v1012
        %v1031 = vunpack.c.l.b16 %v1013
        %v1032 = vunpack.c.l.b16 %v1014
        %v1033 = vunpack.c.l.b16 %v1015
        %v1034 = vunpack.c.l.b16 %v1016
        %v1035 = vunpack.c.l.b16 %v1017
        %v1036 = vpack.c.b16 %v1029, %v1028
        %v1037 = vpack.c.b16 %v1031, %v1030
        %v1038 = vpack.c.b16 %v1033, %v1032
        %v1039 = vpack.c.b16 %v1035, %v1034
        %v1045 = vsel %vm658, %v1019, 0
        %1047 = vmatpush.bf16.msra.mxu0 0
        %1048 = vmatpush.bf16.msra.mxu0 0
        %1049 = vmatpush.bf16.msra.mxu0 0
        %1050 = vmatpush.bf16.msra.mxu0 0
        %1051 = vmatpush.bf16.msra.mxu0 %v1039
        %1052 = vmatpush.bf16.msra.mxu0 %v1038
        %1053 = vmatpush.bf16.msra.mxu0 %v1037
        %1054 = vmatpush.bf16.msra.mxu0 %v1036
        %1055 = vmatmul.bf16.gmra.mxu0 %v1045
        %v1056 = vpop.f32.mrf.mxu0
        %v1057 = vadd.f32 0.0, %v1056
        %v1058 = vpop.f32.mrf.mxu0
        %v1059 = vadd.f32 0.0, %v1058
        %1060 = vdwg.mxu0
        %v1061 = vadd.f32 %v1008, %v1057
        %v1062 = vadd.f32 %v1009, %v1059
        %v1063 = vld [vmem:[#allocation11 + $0x100] sm:$0xf]
        %v1064 = vld [vmem:[#allocation11 + $0x104] sm:$0xf]
        %v1065 = vld [vmem:[#allocation11 + $0x108] sm:$0xf]
        %v1066 = vld [vmem:[#allocation11 + $0x10c] sm:$0xf]
        %v1067 = vld [vmem:[#allocation11 + $0x110] sm:$0xf]
        %v1068 = vld [vmem:[#allocation11 + $0x114] sm:$0xf]
        %v1069 = vld [vmem:[#allocation11 + $0x118] sm:$0xf]
        %v1070 = vld [vmem:[#allocation11 + $0x11c] sm:$0xf]
        %1071 = vrot.lane.b32.xlu0 %v966, 120
        %v1072 = vpop.permute.xlu0 %1071
        %v1081 = vunpack.c.l.b16 %v1063
        %v1082 = vunpack.c.l.b16 %v1064
        %v1083 = vunpack.c.l.b16 %v1065
        %v1084 = vunpack.c.l.b16 %v1066
        %v1085 = vunpack.c.l.b16 %v1067
        %v1086 = vunpack.c.l.b16 %v1068
        %v1087 = vunpack.c.l.b16 %v1069
        %v1088 = vunpack.c.l.b16 %v1070
        %v1089 = vpack.c.b16 %v1082, %v1081
        %v1090 = vpack.c.b16 %v1084, %v1083
        %v1091 = vpack.c.b16 %v1086, %v1085
        %v1092 = vpack.c.b16 %v1088, %v1087
        %v1098 = vsel %vm658, %v1072, 0
        %1100 = vmatpush.bf16.msra.mxu0 0
        %1101 = vmatpush.bf16.msra.mxu0 0
        %1102 = vmatpush.bf16.msra.mxu0 0
        %1103 = vmatpush.bf16.msra.mxu0 0
        %1104 = vmatpush.bf16.msra.mxu0 %v1092
        %1105 = vmatpush.bf16.msra.mxu0 %v1091
        %1106 = vmatpush.bf16.msra.mxu0 %v1090
        %1107 = vmatpush.bf16.msra.mxu0 %v1089
        %1108 = vmatmul.bf16.gmra.mxu0 %v1098
        %v1109 = vpop.f32.mrf.mxu0
        %v1110 = vadd.f32 0.0, %v1109
        %v1111 = vpop.f32.mrf.mxu0
        %v1112 = vadd.f32 0.0, %v1111
        %1113 = vdwg.mxu0
        %v1114 = vadd.f32 %v1061, %v1110
        %v1115 = vadd.f32 %v1062, %v1112
        %v1116 = vld [vmem:[%s5] sm:$0x1]
        %v1118 = vperm.slane %v1116, 0
        %v1120 = vmul.f32 %v1114, %v1118
        %v1121 = vmul.f32 %v1115, %v1118
        %v1122 = vld [vmem:[%s6] sm:$0x1]
        %v1124 = vperm.slane %v1122, 0
        %v1126 = vadd.f32 %v1120, %v1124
        %v1127 = vadd.f32 %v1121, %v1124
        %v1128 = vmax.f32 %v1126, 0.0
        %v1129 = vmax.f32 %v1127, 0.0
        %v1130 = vld [vmem:[#allocation3] sm:$0xf]
        %v1131 = vld [vmem:[#allocation3 + $0x4] sm:$0xf]
        %v1132 = vld [vmem:[#allocation12] sm:$0xf]
        %v1133 = vld [vmem:[#allocation12 + $0x4] sm:$0xf]
        %v1134 = vld [vmem:[#allocation12 + $0x8] sm:$0xf]
        %v1135 = vld [vmem:[#allocation12 + $0xc] sm:$0xf]
        %v1136 = vld [vmem:[#allocation12 + $0x10] sm:$0xf]
        %v1137 = vld [vmem:[#allocation12 + $0x14] sm:$0xf]
        %v1138 = vld [vmem:[#allocation12 + $0x18] sm:$0xf]
        %v1139 = vld [vmem:[#allocation12 + $0x1c] sm:$0xf]
        %v1140 = vld [vmem:[#allocation12 + $0x20] sm:$0xf]
        %v1141 = vld [vmem:[#allocation12 + $0x24] sm:$0xf]
        %v1142 = vld [vmem:[#allocation12 + $0x28] sm:$0xf]
        %v1143 = vld [vmem:[#allocation12 + $0x2c] sm:$0xf]
        %v1144 = vld [vmem:[#allocation12 + $0x30] sm:$0xf]
        %v1145 = vld [vmem:[#allocation12 + $0x34] sm:$0xf]
        %v1146 = vld [vmem:[#allocation12 + $0x38] sm:$0xf]
        %v1147 = vld [vmem:[#allocation12 + $0x3c] sm:$0xf]
        %v1148 = vld [vmem:[#allocation12 + $0x40] sm:$0xf]
        %v1149 = vld [vmem:[#allocation12 + $0x44] sm:$0xf]
        %v1150 = vld [vmem:[#allocation12 + $0x48] sm:$0xf]
        %v1151 = vld [vmem:[#allocation12 + $0x4c] sm:$0xf]
        %v1152 = vld [vmem:[#allocation12 + $0x50] sm:$0xf]
        %v1153 = vld [vmem:[#allocation12 + $0x54] sm:$0xf]
        %v1154 = vld [vmem:[#allocation12 + $0x58] sm:$0xf]
        %v1155 = vld [vmem:[#allocation12 + $0x5c] sm:$0xf]
        %v1158 = vunpack.c.l.b16 %v1130
        %v1159 = vunpack.c.l.b16 %v1131
        %v1160 = vpack.c.b16 %v1159, %v1158
        %1161 = vrot.lane.b32.xlu0 %v1160, 122
        %v1162 = vpop.permute.xlu0 %1161
        %v1175 = vunpack.c.l.b16 %v1144
        %v1176 = vunpack.c.l.b16 %v1145
        %v1177 = vunpack.c.l.b16 %v1146
        %v1178 = vunpack.c.l.b16 %v1147
        %v1179 = vunpack.c.l.b16 %v1148
        %v1180 = vunpack.c.l.b16 %v1149
        %v1181 = vunpack.c.l.b16 %v1150
        %v1182 = vunpack.c.l.b16 %v1151
        %v1183 = vunpack.c.l.b16 %v1152
        %v1184 = vunpack.c.l.b16 %v1153
        %v1185 = vunpack.c.l.b16 %v1154
        %v1186 = vunpack.c.l.b16 %v1155
        %v1187 = vpack.c.b16 %v1176, %v1175
        %v1188 = vpack.c.b16 %v1178, %v1177
        %v1189 = vpack.c.b16 %v1180, %v1179
        %v1190 = vpack.c.b16 %v1182, %v1181
        %v1191 = vpack.c.b16 %v1184, %v1183
        %v1192 = vpack.c.b16 %v1186, %v1185
        %vm1199 = vcmask 785408
        %v1201 = vsel %vm1199, %v1162, 0
        %1203 = vmatpush.bf16.msra.mxu0 0
        %1204 = vmatpush.bf16.msra.mxu0 0
        %1205 = vmatpush.bf16.msra.mxu0 %v1192
        %1206 = vmatpush.bf16.msra.mxu0 %v1191
        %1207 = vmatpush.bf16.msra.mxu0 %v1190
        %1208 = vmatpush.bf16.msra.mxu0 %v1189
        %1209 = vmatpush.bf16.msra.mxu0 %v1188
        %1210 = vmatpush.bf16.msra.mxu0 %v1187
        %1211 = vmatmul.bf16.gmra.mxu0 %v1201
        %v1212 = vpop.f32.mrf.mxu0
        %v1213 = vadd.f32 0.0, %v1212
        %v1214 = vpop.f32.mrf.mxu0
        %v1215 = vadd.f32 0.0, %v1214
        %1216 = vdwg.mxu0
        %v1229 = vunpack.c.l.b16 %v1132
        %v1230 = vunpack.c.l.b16 %v1133
        %v1231 = vunpack.c.l.b16 %v1134
        %v1232 = vunpack.c.l.b16 %v1135
        %v1233 = vunpack.c.l.b16 %v1136
        %v1234 = vunpack.c.l.b16 %v1137
        %v1235 = vunpack.c.l.b16 %v1138
        %v1236 = vunpack.c.l.b16 %v1139
        %v1237 = vunpack.c.l.b16 %v1140
        %v1238 = vunpack.c.l.b16 %v1141
        %v1239 = vunpack.c.l.b16 %v1142
        %v1240 = vunpack.c.l.b16 %v1143
        %v1241 = vpack.c.b16 %v1230, %v1229
        %v1242 = vpack.c.b16 %v1232, %v1231
        %v1243 = vpack.c.b16 %v1234, %v1233
        %v1244 = vpack.c.b16 %v1236, %v1235
        %v1245 = vpack.c.b16 %v1238, %v1237
        %v1246 = vpack.c.b16 %v1240, %v1239
        %v1254 = vsel %vm1199, %v1160, 0
        %1256 = vmatpush.bf16.msra.mxu0 0
        %1257 = vmatpush.bf16.msra.mxu0 0
        %1258 = vmatpush.bf16.msra.mxu0 %v1246
        %1259 = vmatpush.bf16.msra.mxu0 %v1245
        %1260 = vmatpush.bf16.msra.mxu0 %v1244
        %1261 = vmatpush.bf16.msra.mxu0 %v1243
        %1262 = vmatpush.bf16.msra.mxu0 %v1242
        %1263 = vmatpush.bf16.msra.mxu0 %v1241
        %1264 = vmatmul.bf16.gmra.mxu0 %v1254
        %v1265 = vpop.f32.mrf.mxu0
        %v1266 = vadd.f32 %v1213, %v1265
        %v1267 = vpop.f32.mrf.mxu0
        %v1268 = vadd.f32 %v1215, %v1267
        %1269 = vdwg.mxu0
        %v1270 = vld [vmem:[#allocation12 + $0x60] sm:$0xf]
        %v1271 = vld [vmem:[#allocation12 + $0x64] sm:$0xf]
        %v1272 = vld [vmem:[#allocation12 + $0x68] sm:$0xf]
        %v1273 = vld [vmem:[#allocation12 + $0x6c] sm:$0xf]
        %v1274 = vld [vmem:[#allocation12 + $0x70] sm:$0xf]
        %v1275 = vld [vmem:[#allocation12 + $0x74] sm:$0xf]
        %v1276 = vld [vmem:[#allocation12 + $0x78] sm:$0xf]
        %v1277 = vld [vmem:[#allocation12 + $0x7c] sm:$0xf]
        %v1278 = vld [vmem:[#allocation12 + $0x80] sm:$0xf]
        %v1279 = vld [vmem:[#allocation12 + $0x84] sm:$0xf]
        %v1280 = vld [vmem:[#allocation12 + $0x88] sm:$0xf]
        %v1281 = vld [vmem:[#allocation12 + $0x8c] sm:$0xf]
        %1282 = vrot.lane.b32.xlu0 %v1160, 116
        %v1283 = vpop.permute.xlu0 %1282
        %v1296 = vunpack.c.l.b16 %v1270
        %v1297 = vunpack.c.l.b16 %v1271
        %v1298 = vunpack.c.l.b16 %v1272
        %v1299 = vunpack.c.l.b16 %v1273
        %v1300 = vunpack.c.l.b16 %v1274
        %v1301 = vunpack.c.l.b16 %v1275
        %v1302 = vunpack.c.l.b16 %v1276
        %v1303 = vunpack.c.l.b16 %v1277
        %v1304 = vunpack.c.l.b16 %v1278
        %v1305 = vunpack.c.l.b16 %v1279
        %v1306 = vunpack.c.l.b16 %v1280
        %v1307 = vunpack.c.l.b16 %v1281
        %v1308 = vpack.c.b16 %v1297, %v1296
        %v1309 = vpack.c.b16 %v1299, %v1298
        %v1310 = vpack.c.b16 %v1301, %v1300
        %v1311 = vpack.c.b16 %v1303, %v1302
        %v1312 = vpack.c.b16 %v1305, %v1304
        %v1313 = vpack.c.b16 %v1307, %v1306
        %v1321 = vsel %vm1199, %v1283, 0
        %1323 = vmatpush.bf16.msra.mxu0 0
        %1324 = vmatpush.bf16.msra.mxu0 0
        %1325 = vmatpush.bf16.msra.mxu0 %v1313
        %1326 = vmatpush.bf16.msra.mxu0 %v1312
        %1327 = vmatpush.bf16.msra.mxu0 %v1311
        %1328 = vmatpush.bf16.msra.mxu0 %v1310
        %1329 = vmatpush.bf16.msra.mxu0 %v1309
        %1330 = vmatpush.bf16.msra.mxu0 %v1308
        %1331 = vmatmul.bf16.gmra.mxu0 %v1321
        %v1332 = vpop.f32.mrf.mxu0
        %v1333 = vadd.f32 0.0, %v1332
        %v1334 = vpop.f32.mrf.mxu0
        %v1335 = vadd.f32 0.0, %v1334
        %1336 = vdwg.mxu0
        %v1337 = vadd.f32 %v1266, %v1333
        %v1338 = vadd.f32 %v1268, %v1335
        %v1339 = vld [vmem:[#allocation3] sm:$0xf]
        %v1340 = vld [vmem:[#allocation3 + $0x4] sm:$0xf]
        %v1341 = vld [vmem:[#allocation3 + $0x8] sm:$0x1]
        %v1342 = vld [vmem:[#allocation12 + $0x90] sm:$0xf]
        %v1343 = vld [vmem:[#allocation12 + $0x94] sm:$0xf]
        %v1344 = vld [vmem:[#allocation12 + $0x98] sm:$0xf]
        %v1345 = vld [vmem:[#allocation12 + $0x9c] sm:$0xf]
        %v1346 = vld [vmem:[#allocation12 + $0xa0] sm:$0xf]
        %v1347 = vld [vmem:[#allocation12 + $0xa4] sm:$0xf]
        %v1348 = vld [vmem:[#allocation12 + $0xa8] sm:$0xf]
        %v1349 = vld [vmem:[#allocation12 + $0xac] sm:$0xf]
        %v1350 = vld [vmem:[#allocation12 + $0xb0] sm:$0xf]
        %v1351 = vld [vmem:[#allocation12 + $0xb4] sm:$0xf]
        %v1352 = vld [vmem:[#allocation12 + $0xb8] sm:$0xf]
        %v1353 = vld [vmem:[#allocation12 + $0xbc] sm:$0xf]
        %v1357 = vunpack.c.l.b16 %v1339
        %v1358 = vunpack.c.l.b16 %v1340
        %v1359 = vunpack.c.l.b16 %v1341
        %v1360 = vpack.c.b16 %v1358, %v1357
        %v1361 = vpack.c.b16 %v1359, %v1359
        %v1363 = vshrl.u32 %v1360, 16
        %v1365 = vshll.u32 %v1360, 16
        %v1367 = vrot.slane %v1365, 1
        %v1368 = vor.u32 %v1363, %v1367
        %v1370 = vshll.u32 %v1361, 16
        %v1372 = vrot.slane %v1370, 1
        %v1373 = vsel %vm789, %v1368, %v1372
        %v1386 = vunpack.c.l.b16 %v1342
        %v1387 = vunpack.c.l.b16 %v1343
        %v1388 = vunpack.c.l.b16 %v1344
        %v1389 = vunpack.c.l.b16 %v1345
        %v1390 = vunpack.c.l.b16 %v1346
        %v1391 = vunpack.c.l.b16 %v1347
        %v1392 = vunpack.c.l.b16 %v1348
        %v1393 = vunpack.c.l.b16 %v1349
        %v1394 = vunpack.c.l.b16 %v1350
        %v1395 = vunpack.c.l.b16 %v1351
        %v1396 = vunpack.c.l.b16 %v1352
        %v1397 = vunpack.c.l.b16 %v1353
        %v1398 = vpack.c.b16 %v1387, %v1386
        %v1399 = vpack.c.b16 %v1389, %v1388
        %v1400 = vpack.c.b16 %v1391, %v1390
        %v1401 = vpack.c.b16 %v1393, %v1392
        %v1402 = vpack.c.b16 %v1395, %v1394
        %v1403 = vpack.c.b16 %v1397, %v1396
        %v1411 = vsel %vm1199, %v1373, 0
        %1413 = vmatpush.bf16.msra.mxu0 0
        %1414 = vmatpush.bf16.msra.mxu0 0
        %1415 = vmatpush.bf16.msra.mxu0 %v1403
        %1416 = vmatpush.bf16.msra.mxu0 %v1402
        %1417 = vmatpush.bf16.msra.mxu0 %v1401
        %1418 = vmatpush.bf16.msra.mxu0 %v1400
        %1419 = vmatpush.bf16.msra.mxu0 %v1399
        %1420 = vmatpush.bf16.msra.mxu0 %v1398
        %1421 = vmatmul.bf16.gmra.mxu0 %v1411
        %v1422 = vpop.f32.mrf.mxu0
        %v1423 = vadd.f32 0.0, %v1422
        %v1424 = vpop.f32.mrf.mxu0
        %v1425 = vadd.f32 0.0, %v1424
        %1426 = vdwg.mxu0
        %v1427 = vadd.f32 %v1337, %v1423
        %v1428 = vadd.f32 %v1338, %v1425
        %v1429 = vld [vmem:[#allocation12 + $0xc0] sm:$0xf]
        %v1430 = vld [vmem:[#allocation12 + $0xc4] sm:$0xf]
        %v1431 = vld [vmem:[#allocation12 + $0xc8] sm:$0xf]
        %v1432 = vld [vmem:[#allocation12 + $0xcc] sm:$0xf]
        %v1433 = vld [vmem:[#allocation12 + $0xd0] sm:$0xf]
        %v1434 = vld [vmem:[#allocation12 + $0xd4] sm:$0xf]
        %v1435 = vld [vmem:[#allocation12 + $0xd8] sm:$0xf]
        %v1436 = vld [vmem:[#allocation12 + $0xdc] sm:$0xf]
        %v1437 = vld [vmem:[#allocation12 + $0xe0] sm:$0xf]
        %v1438 = vld [vmem:[#allocation12 + $0xe4] sm:$0xf]
        %v1439 = vld [vmem:[#allocation12 + $0xe8] sm:$0xf]
        %v1440 = vld [vmem:[#allocation12 + $0xec] sm:$0xf]
        %1441 = vrot.lane.b32.xlu0 %v1373, 122
        %v1442 = vpop.permute.xlu0 %1441
        %v1455 = vunpack.c.l.b16 %v1429
        %v1456 = vunpack.c.l.b16 %v1430
        %v1457 = vunpack.c.l.b16 %v1431
        %v1458 = vunpack.c.l.b16 %v1432
        %v1459 = vunpack.c.l.b16 %v1433
        %v1460 = vunpack.c.l.b16 %v1434
        %v1461 = vunpack.c.l.b16 %v1435
        %v1462 = vunpack.c.l.b16 %v1436
        %v1463 = vunpack.c.l.b16 %v1437
        %v1464 = vunpack.c.l.b16 %v1438
        %v1465 = vunpack.c.l.b16 %v1439
        %v1466 = vunpack.c.l.b16 %v1440
        %v1467 = vpack.c.b16 %v1456, %v1455
        %v1468 = vpack.c.b16 %v1458, %v1457
        %v1469 = vpack.c.b16 %v1460, %v1459
        %v1470 = vpack.c.b16 %v1462, %v1461
        %v1471 = vpack.c.b16 %v1464, %v1463
        %v1472 = vpack.c.b16 %v1466, %v1465
        %v1480 = vsel %vm1199, %v1442, 0
        %1482 = vmatpush.bf16.msra.mxu0 0
        %1483 = vmatpush.bf16.msra.mxu0 0
        %1484 = vmatpush.bf16.msra.mxu0 %v1472
        %1485 = vmatpush.bf16.msra.mxu0 %v1471
        %1486 = vmatpush.bf16.msra.mxu0 %v1470
        %1487 = vmatpush.bf16.msra.mxu0 %v1469
        %1488 = vmatpush.bf16.msra.mxu0 %v1468
        %1489 = vmatpush.bf16.msra.mxu0 %v1467
        %1490 = vmatmul.bf16.gmra.mxu0 %v1480
        %v1491 = vpop.f32.mrf.mxu0
        %v1492 = vadd.f32 0.0, %v1491
        %v1493 = vpop.f32.mrf.mxu0
        %v1494 = vadd.f32 0.0, %v1493
        %1495 = vdwg.mxu0
        %v1496 = vadd.f32 %v1427, %v1492
        %v1497 = vadd.f32 %v1428, %v1494
        %v1498 = vld [vmem:[#allocation12 + $0xf0] sm:$0xf]
        %v1499 = vld [vmem:[#allocation12 + $0xf4] sm:$0xf]
        %v1500 = vld [vmem:[#allocation12 + $0xf8] sm:$0xf]
        %v1501 = vld [vmem:[#allocation12 + $0xfc] sm:$0xf]
        %v1502 = vld [vmem:[#allocation12 + $0x100] sm:$0xf]
        %v1503 = vld [vmem:[#allocation12 + $0x104] sm:$0xf]
        %v1504 = vld [vmem:[#allocation12 + $0x108] sm:$0xf]
        %v1505 = vld [vmem:[#allocation12 + $0x10c] sm:$0xf]
        %v1506 = vld [vmem:[#allocation12 + $0x110] sm:$0xf]
        %v1507 = vld [vmem:[#allocation12 + $0x114] sm:$0xf]
        %v1508 = vld [vmem:[#allocation12 + $0x118] sm:$0xf]
        %v1509 = vld [vmem:[#allocation12 + $0x11c] sm:$0xf]
        %1510 = vrot.lane.b32.xlu0 %v1373, 116
        %v1511 = vpop.permute.xlu0 %1510
        %v1524 = vunpack.c.l.b16 %v1498
        %v1525 = vunpack.c.l.b16 %v1499
        %v1526 = vunpack.c.l.b16 %v1500
        %v1527 = vunpack.c.l.b16 %v1501
        %v1528 = vunpack.c.l.b16 %v1502
        %v1529 = vunpack.c.l.b16 %v1503
        %v1530 = vunpack.c.l.b16 %v1504
        %v1531 = vunpack.c.l.b16 %v1505
        %v1532 = vunpack.c.l.b16 %v1506
        %v1533 = vunpack.c.l.b16 %v1507
        %v1534 = vunpack.c.l.b16 %v1508
        %v1535 = vunpack.c.l.b16 %v1509
        %v1536 = vpack.c.b16 %v1525, %v1524
        %v1537 = vpack.c.b16 %v1527, %v1526
        %v1538 = vpack.c.b16 %v1529, %v1528
        %v1539 = vpack.c.b16 %v1531, %v1530
        %v1540 = vpack.c.b16 %v1533, %v1532
        %v1541 = vpack.c.b16 %v1535, %v1534
        %v1549 = vsel %vm1199, %v1511, 0
        %1551 = vmatpush.bf16.msra.mxu0 0
        %1552 = vmatpush.bf16.msra.mxu0 0
        %1553 = vmatpush.bf16.msra.mxu0 %v1541
        %1554 = vmatpush.bf16.msra.mxu0 %v1540
        %1555 = vmatpush.bf16.msra.mxu0 %v1539
        %1556 = vmatpush.bf16.msra.mxu0 %v1538
        %1557 = vmatpush.bf16.msra.mxu0 %v1537
        %1558 = vmatpush.bf16.msra.mxu0 %v1536
        %1559 = vmatmul.bf16.gmra.mxu0 %v1549
        %v1560 = vpop.f32.mrf.mxu0
        %v1561 = vadd.f32 0.0, %v1560
        %v1562 = vpop.f32.mrf.mxu0
        %v1563 = vadd.f32 0.0, %v1562
        %1564 = vdwg.mxu0
        %v1565 = vadd.f32 %v1496, %v1561
        %v1566 = vadd.f32 %v1497, %v1563
        %v1567 = vld [vmem:[#allocation3] sm:$0xe]
        %v1568 = vld [vmem:[#allocation12 + $0x120] sm:$0xf]
        %v1569 = vld [vmem:[#allocation12 + $0x124] sm:$0xf]
        %v1570 = vld [vmem:[#allocation12 + $0x128] sm:$0xf]
        %v1571 = vld [vmem:[#allocation12 + $0x12c] sm:$0xf]
        %v1572 = vld [vmem:[#allocation12 + $0x130] sm:$0xf]
        %v1573 = vld [vmem:[#allocation12 + $0x134] sm:$0xf]
        %v1574 = vld [vmem:[#allocation12 + $0x138] sm:$0xf]
        %v1575 = vld [vmem:[#allocation12 + $0x13c] sm:$0xf]
        %v1576 = vld [vmem:[#allocation12 + $0x140] sm:$0xf]
        %v1577 = vld [vmem:[#allocation12 + $0x144] sm:$0xf]
        %v1578 = vld [vmem:[#allocation12 + $0x148] sm:$0xf]
        %v1579 = vld [vmem:[#allocation12 + $0x14c] sm:$0xf]
        %v1581 = vunpack.c.l.b16 %v1567
        %v1582 = vpack.c.b16 %v1358, %v1581
        %v1583 = vrot.slane %v1582, 1
        %v1584 = vrot.slane %v1361, 1
        %v1585 = vsel %vm963, %v1583, %v1584
        %v1598 = vunpack.c.l.b16 %v1568
        %v1599 = vunpack.c.l.b16 %v1569
        %v1600 = vunpack.c.l.b16 %v1570
        %v1601 = vunpack.c.l.b16 %v1571
        %v1602 = vunpack.c.l.b16 %v1572
        %v1603 = vunpack.c.l.b16 %v1573
        %v1604 = vunpack.c.l.b16 %v1574
        %v1605 = vunpack.c.l.b16 %v1575
        %v1606 = vunpack.c.l.b16 %v1576
        %v1607 = vunpack.c.l.b16 %v1577
        %v1608 = vunpack.c.l.b16 %v1578
        %v1609 = vunpack.c.l.b16 %v1579
        %v1610 = vpack.c.b16 %v1599, %v1598
        %v1611 = vpack.c.b16 %v1601, %v1600
        %v1612 = vpack.c.b16 %v1603, %v1602
        %v1613 = vpack.c.b16 %v1605, %v1604
        %v1614 = vpack.c.b16 %v1607, %v1606
        %v1615 = vpack.c.b16 %v1609, %v1608
        %v1623 = vsel %vm1199, %v1585, 0
        %1625 = vmatpush.bf16.msra.mxu0 0
        %1626 = vmatpush.bf16.msra.mxu0 0
        %1627 = vmatpush.bf16.msra.mxu0 %v1615
        %1628 = vmatpush.bf16.msra.mxu0 %v1614
        %1629 = vmatpush.bf16.msra.mxu0 %v1613
        %1630 = vmatpush.bf16.msra.mxu0 %v1612
        %1631 = vmatpush.bf16.msra.mxu0 %v1611
        %1632 = vmatpush.bf16.msra.mxu0 %v1610
        %1633 = vmatmul.bf16.gmra.mxu0 %v1623
        %v1634 = vpop.f32.mrf.mxu0
        %v1635 = vadd.f32 0.0, %v1634
        %v1636 = vpop.f32.mrf.mxu0
        %v1637 = vadd.f32 0.0, %v1636
        %1638 = vdwg.mxu0
        %v1639 = vadd.f32 %v1565, %v1635
        %v1640 = vadd.f32 %v1566, %v1637
        %v1641 = vld [vmem:[#allocation12 + $0x150] sm:$0xf]
        %v1642 = vld [vmem:[#allocation12 + $0x154] sm:$0xf]
        %v1643 = vld [vmem:[#allocation12 + $0x158] sm:$0xf]
        %v1644 = vld [vmem:[#allocation12 + $0x15c] sm:$0xf]
        %v1645 = vld [vmem:[#allocation12 + $0x160] sm:$0xf]
        %v1646 = vld [vmem:[#allocation12 + $0x164] sm:$0xf]
        %v1647 = vld [vmem:[#allocation12 + $0x168] sm:$0xf]
        %v1648 = vld [vmem:[#allocation12 + $0x16c] sm:$0xf]
        %v1649 = vld [vmem:[#allocation12 + $0x170] sm:$0xf]
        %v1650 = vld [vmem:[#allocation12 + $0x174] sm:$0xf]
        %v1651 = vld [vmem:[#allocation12 + $0x178] sm:$0xf]
        %v1652 = vld [vmem:[#allocation12 + $0x17c] sm:$0xf]
        %1653 = vrot.lane.b32.xlu0 %v1585, 122
        %v1654 = vpop.permute.xlu0 %1653
        %v1667 = vunpack.c.l.b16 %v1641
        %v1668 = vunpack.c.l.b16 %v1642
        %v1669 = vunpack.c.l.b16 %v1643
        %v1670 = vunpack.c.l.b16 %v1644
        %v1671 = vunpack.c.l.b16 %v1645
        %v1672 = vunpack.c.l.b16 %v1646
        %v1673 = vunpack.c.l.b16 %v1647
        %v1674 = vunpack.c.l.b16 %v1648
        %v1675 = vunpack.c.l.b16 %v1649
        %v1676 = vunpack.c.l.b16 %v1650
        %v1677 = vunpack.c.l.b16 %v1651
        %v1678 = vunpack.c.l.b16 %v1652
        %v1679 = vpack.c.b16 %v1668, %v1667
        %v1680 = vpack.c.b16 %v1670, %v1669
        %v1681 = vpack.c.b16 %v1672, %v1671
        %v1682 = vpack.c.b16 %v1674, %v1673
        %v1683 = vpack.c.b16 %v1676, %v1675
        %v1684 = vpack.c.b16 %v1678, %v1677
        %v1692 = vsel %vm1199, %v1654, 0
        %1694 = vmatpush.bf16.msra.mxu0 0
        %1695 = vmatpush.bf16.msra.mxu0 0
        %1696 = vmatpush.bf16.msra.mxu0 %v1684
        %1697 = vmatpush.bf16.msra.mxu0 %v1683
        %1698 = vmatpush.bf16.msra.mxu0 %v1682
        %1699 = vmatpush.bf16.msra.mxu0 %v1681
        %1700 = vmatpush.bf16.msra.mxu0 %v1680
        %1701 = vmatpush.bf16.msra.mxu0 %v1679
        %1702 = vmatmul.bf16.gmra.mxu0 %v1692
        %v1703 = vpop.f32.mrf.mxu0
        %v1704 = vadd.f32 0.0, %v1703
        %v1705 = vpop.f32.mrf.mxu0
        %v1706 = vadd.f32 0.0, %v1705
        %1707 = vdwg.mxu0
        %v1708 = vadd.f32 %v1639, %v1704
        %v1709 = vadd.f32 %v1640, %v1706
        %v1710 = vld [vmem:[#allocation12 + $0x180] sm:$0xf]
        %v1711 = vld [vmem:[#allocation12 + $0x184] sm:$0xf]
        %v1712 = vld [vmem:[#allocation12 + $0x188] sm:$0xf]
        %v1713 = vld [vmem:[#allocation12 + $0x18c] sm:$0xf]
        %v1714 = vld [vmem:[#allocation12 + $0x190] sm:$0xf]
        %v1715 = vld [vmem:[#allocation12 + $0x194] sm:$0xf]
        %v1716 = vld [vmem:[#allocation12 + $0x198] sm:$0xf]
        %v1717 = vld [vmem:[#allocation12 + $0x19c] sm:$0xf]
        %v1718 = vld [vmem:[#allocation12 + $0x1a0] sm:$0xf]
        %v1719 = vld [vmem:[#allocation12 + $0x1a4] sm:$0xf]
        %v1720 = vld [vmem:[#allocation12 + $0x1a8] sm:$0xf]
        %v1721 = vld [vmem:[#allocation12 + $0x1ac] sm:$0xf]
        %1722 = vrot.lane.b32.xlu0 %v1585, 116
        %v1723 = vpop.permute.xlu0 %1722
        %v1736 = vunpack.c.l.b16 %v1710
        %v1737 = vunpack.c.l.b16 %v1711
        %v1738 = vunpack.c.l.b16 %v1712
        %v1739 = vunpack.c.l.b16 %v1713
        %v1740 = vunpack.c.l.b16 %v1714
        %v1741 = vunpack.c.l.b16 %v1715
        %v1742 = vunpack.c.l.b16 %v1716
        %v1743 = vunpack.c.l.b16 %v1717
        %v1744 = vunpack.c.l.b16 %v1718
        %v1745 = vunpack.c.l.b16 %v1719
        %v1746 = vunpack.c.l.b16 %v1720
        %v1747 = vunpack.c.l.b16 %v1721
        %v1748 = vpack.c.b16 %v1737, %v1736
        %v1749 = vpack.c.b16 %v1739, %v1738
        %v1750 = vpack.c.b16 %v1741, %v1740
        %v1751 = vpack.c.b16 %v1743, %v1742
        %v1752 = vpack.c.b16 %v1745, %v1744
        %v1753 = vpack.c.b16 %v1747, %v1746
        %v1761 = vsel %vm1199, %v1723, 0
        %1763 = vmatpush.bf16.msra.mxu0 0
        %1764 = vmatpush.bf16.msra.mxu0 0
        %1765 = vmatpush.bf16.msra.mxu0 %v1753
        %1766 = vmatpush.bf16.msra.mxu0 %v1752
        %1767 = vmatpush.bf16.msra.mxu0 %v1751
        %1768 = vmatpush.bf16.msra.mxu0 %v1750
        %1769 = vmatpush.bf16.msra.mxu0 %v1749
        %1770 = vmatpush.bf16.msra.mxu0 %v1748
        %1771 = vmatmul.bf16.gmra.mxu0 %v1761
        %v1772 = vpop.f32.mrf.mxu0
        %v1773 = vadd.f32 0.0, %v1772
        %v1774 = vpop.f32.mrf.mxu0
        %v1775 = vadd.f32 0.0, %v1774
        %1776 = vdwg.mxu0
        %v1777 = vadd.f32 %v1708, %v1773
        %v1778 = vadd.f32 %v1709, %v1775
        %v1779 = vld [vmem:[%s7] sm:$0x1]
        %v1781 = vperm.slane %v1779, 0
        %v1783 = vmul.f32 %v1777, %v1781
        %v1784 = vmul.f32 %v1778, %v1781
        %v1785 = vld [vmem:[%s8] sm:$0x1]
        %v1787 = vperm.slane %v1785, 0
        %v1789 = vadd.f32 %v1783, %v1787
        %v1790 = vadd.f32 %v1784, %v1787
        %v1791 = vmax.f32 %v1789, 0.0
        %v1792 = vmax.f32 %v1790, 0.0
        %v1793 = vpack.c.bf16 %v1128, %v1128
        %v1794 = vpack.c.bf16 %v1129, %v1129
        %v1796 = vshrl.u32 %v1793, 16
        %v1798 = vrot.slane %v1796, 7
        %v1799 = vshll.u32 %v1793, 16
        %v1801 = vor.u32 %v1798, %v1799
        %v1802 = vrot.slane %v1798, 4
        %v1804 = vshrl.u32 %v1794, 16
        %v1806 = vrot.slane %v1804, 7
        %v1807 = vshll.u32 %v1794, 16
        %v1809 = vor.u32 %v1806, %v1807
        %v1810 = vsel %vm527, %v1802, %v1809
        %v1811 = vrot.slane %v1806, 4
        %1812 = vrot.lane.b32.xlu0 %v1801, 8
        %v1813 = vpop.permute.xlu0 %1812
        %1814 = vrot.lane.b32.xlu0 %v1810, 8
        %v1815 = vpop.permute.xlu0 %1814
        %1816 = vrot.lane.b32.xlu0 %v1811, 8
        %v1817 = vpop.permute.xlu0 %1816
        %v1818 = vrot.slane %v1813, 4
        %v1819 = vrot.slane %v1815, 4
        %v1820 = vrot.slane %v1817, 4
        %vm1821 = vcmask 64512
        %v1822 = vsel %vm1821, %v1818, %v1813
        %v1823 = vsel %vm1821, %v1819, %v1815
        %v1824 = vsel %vm1821, %v1820, %v1817
        %vm1828 = vcmask 1043520
        %vm1829 = vmand %vm1828, %vm555
        %vm1830 = vcmask 64516
        %vm1831 = vsmask.f32 7954
        %vm1832 = vmand %vm1830, %vm1831
        %vm1833 = vmor %vm1832, %vm1829
        %v1834 = vld [vmem:[#allocation4] sm:$0xff]
        %v1835 = vsel %vm1833, %v1822, %v1834
        %1836 = vst [vmem:[#allocation4] sm:$0xff] %v1835
        %vm1837 = vcmask 1043520
        %vm1838 = vcmask 64516
        %vm1839 = vmor %vm1838, %vm1837
        %1840 = vst.msk [vmem:[#allocation4 + $0x8] sm:$0xff] %vm1839, %v1823
        %vm1841 = vcmask 1040448
        %vm1842 = vmand %vm1841, %vm525
        %vm1843 = vcmask 61444
        %vm1844 = vsmask.f32 4352
        %vm1845 = vmand %vm1843, %vm1844
        %vm1846 = vmor %vm1845, %vm1842
        %v1847 = vld [vmem:[#allocation4 + $0x10] sm:$0x11]
        %v1848 = vsel %vm1846, %v1824, %v1847
        %1849 = vst [vmem:[#allocation4 + $0x10] sm:$0x11] %v1848
        %v1850 = vpack.c.bf16 %v1791, %v1791
        %v1851 = vpack.c.bf16 %v1792, %v1792
        %v1853 = vshrl.u32 %v1850, 16
        %v1855 = vrot.slane %v1853, 7
        %v1856 = vshll.u32 %v1850, 16
        %v1858 = vor.u32 %v1855, %v1856
        %v1859 = vrot.slane %v1855, 4
        %v1861 = vshrl.u32 %v1851, 16
        %v1863 = vrot.slane %v1861, 7
        %v1864 = vshll.u32 %v1851, 16
        %v1866 = vor.u32 %v1863, %v1864
        %v1867 = vsel %vm527, %v1859, %v1866
        %v1868 = vrot.slane %v1863, 4
        %1869 = vrot.lane.b32.xlu0 %v1858, 8
        %v1870 = vpop.permute.xlu0 %1869
        %1871 = vrot.lane.b32.xlu0 %v1867, 8
        %v1872 = vpop.permute.xlu0 %1871
        %1873 = vrot.lane.b32.xlu0 %v1868, 8
        %v1874 = vpop.permute.xlu0 %1873
        %v1875 = vrot.slane %v1870, 4
        %v1876 = vrot.slane %v1872, 4
        %v1877 = vrot.slane %v1874, 4
        %v1878 = vsel %vm1821, %v1875, %v1870
        %v1879 = vsel %vm1821, %v1876, %v1872
        %v1880 = vsel %vm1821, %v1877, %v1874
        %v1884 = vld [vmem:[#allocation5] sm:$0xff]
        %v1885 = vsel %vm1833, %v1878, %v1884
        %1886 = vst [vmem:[#allocation5] sm:$0xff] %v1885
        %1887 = vst.msk [vmem:[#allocation5 + $0x8] sm:$0xff] %vm1839, %v1879
        %v1888 = vld [vmem:[#allocation5 + $0x10] sm:$0x11]
        %v1889 = vsel %vm1846, %v1880, %v1888
        %1890 = vst [vmem:[#allocation5 + $0x10] sm:$0x11] %v1889
        %v1891 = vld [vmem:[#allocation4] sm:$0xf]
        %v1892 = vld [vmem:[#allocation4 + $0x8] sm:$0xf]
        %v1893 = vld [vmem:[#allocation14] sm:$0xf]
        %v1894 = vld [vmem:[#allocation14 + $0x4] sm:$0xf]
        %v1895 = vld [vmem:[#allocation14 + $0x8] sm:$0xf]
        %v1896 = vld [vmem:[#allocation14 + $0xc] sm:$0xf]
        %v1897 = vld [vmem:[#allocation14 + $0x10] sm:$0xf]
        %v1898 = vld [vmem:[#allocation14 + $0x14] sm:$0xf]
        %v1899 = vld [vmem:[#allocation14 + $0x18] sm:$0xf]
        %v1900 = vld [vmem:[#allocation14 + $0x1c] sm:$0xf]
        %v1901 = vld [vmem:[#allocation14 + $0x20] sm:$0xf]
        %v1902 = vld [vmem:[#allocation14 + $0x24] sm:$0xf]
        %v1903 = vld [vmem:[#allocation14 + $0x28] sm:$0xf]
        %v1904 = vld [vmem:[#allocation14 + $0x2c] sm:$0xf]
        %v1905 = vld [vmem:[#allocation14 + $0x30] sm:$0xf]
        %v1906 = vld [vmem:[#allocation14 + $0x34] sm:$0xf]
        %v1907 = vld [vmem:[#allocation14 + $0x38] sm:$0xf]
        %v1908 = vld [vmem:[#allocation14 + $0x3c] sm:$0xf]
        %v1909 = vld [vmem:[#allocation4] sm:$0xff]
        %v1910 = vld [vmem:[#allocation4 + $0x8] sm:$0xff]
        %v1911 = vld [vmem:[#allocation14 + $0x40] sm:$0xf]
        %v1912 = vld [vmem:[#allocation14 + $0x44] sm:$0xf]
        %v1913 = vld [vmem:[#allocation14 + $0x48] sm:$0xf]
        %v1914 = vld [vmem:[#allocation14 + $0x4c] sm:$0xf]
        %v1915 = vld [vmem:[#allocation14 + $0x50] sm:$0xf]
        %v1916 = vld [vmem:[#allocation14 + $0x54] sm:$0xf]
        %v1917 = vld [vmem:[#allocation14 + $0x58] sm:$0xf]
        %v1918 = vld [vmem:[#allocation14 + $0x5c] sm:$0xf]
        %v1919 = vld [vmem:[#allocation14 + $0x60] sm:$0xf]
        %v1920 = vld [vmem:[#allocation14 + $0x64] sm:$0xf]
        %v1921 = vld [vmem:[#allocation14 + $0x68] sm:$0xf]
        %v1922 = vld [vmem:[#allocation14 + $0x6c] sm:$0xf]
        %v1923 = vld [vmem:[#allocation14 + $0x70] sm:$0xf]
        %v1924 = vld [vmem:[#allocation14 + $0x74] sm:$0xf]
        %v1925 = vld [vmem:[#allocation14 + $0x78] sm:$0xf]
        %v1926 = vld [vmem:[#allocation14 + $0x7c] sm:$0xf]
        %v1929 = vunpack.c.l.b16 %v1909
        %v1930 = vunpack.c.h.b16 %v1909
        %v1931 = vunpack.c.l.b16 %v1910
        %v1932 = vunpack.c.h.b16 %v1910
        %v1933 = vpack.c.b16 %v1931, %v1929
        %v1934 = vpack.c.b16 %v1932, %v1930
        %1935 = vrot.lane.b32.xlu0 %v1933, 120
        %v1936 = vpop.permute.xlu0 %1935
        %1937 = vrot.lane.b32.xlu0 %v1934, 120
        %v1938 = vpop.permute.xlu0 %1937
        %vm1939 = vcmask 982016
        %v1940 = vsel %vm1939, %v1936, %v1938
        %v1958 = vunpack.c.l.b16 %v1911
        %v1959 = vunpack.c.l.b16 %v1912
        %v1960 = vunpack.c.l.b16 %v1913
        %v1961 = vunpack.c.l.b16 %v1914
        %v1962 = vunpack.c.l.b16 %v1915
        %v1963 = vunpack.c.l.b16 %v1916
        %v1964 = vunpack.c.l.b16 %v1917
        %v1965 = vunpack.c.l.b16 %v1918
        %v1966 = vunpack.c.l.b16 %v1919
        %v1967 = vunpack.c.l.b16 %v1920
        %v1968 = vunpack.c.l.b16 %v1921
        %v1969 = vunpack.c.l.b16 %v1922
        %v1970 = vunpack.c.l.b16 %v1923
        %v1971 = vunpack.c.l.b16 %v1924
        %v1972 = vunpack.c.l.b16 %v1925
        %v1973 = vunpack.c.l.b16 %v1926
        %v1974 = vpack.c.b16 %v1959, %v1958
        %v1975 = vpack.c.b16 %v1961, %v1960
        %v1976 = vpack.c.b16 %v1963, %v1962
        %v1977 = vpack.c.b16 %v1965, %v1964
        %v1978 = vpack.c.b16 %v1967, %v1966
        %v1979 = vpack.c.b16 %v1969, %v1968
        %v1980 = vpack.c.b16 %v1971, %v1970
        %v1981 = vpack.c.b16 %v1973, %v1972
        %1990 = vmatpush.bf16.msra.mxu0 %v1981
        %1991 = vmatpush.bf16.msra.mxu0 %v1980
        %1992 = vmatpush.bf16.msra.mxu0 %v1979
        %1993 = vmatpush.bf16.msra.mxu0 %v1978
        %1994 = vmatpush.bf16.msra.mxu0 %v1977
        %1995 = vmatpush.bf16.msra.mxu0 %v1976
        %1996 = vmatpush.bf16.msra.mxu0 %v1975
        %1997 = vmatpush.bf16.msra.mxu0 %v1974
        %1998 = vmatmul.bf16.gmra.mxu0 %v1940
        %v1999 = vpop.f32.mrf.mxu0
        %v2000 = vadd.f32 0.0, %v1999
        %v2001 = vpop.f32.mrf.mxu0
        %v2002 = vadd.f32 0.0, %v2001
        %2003 = vdwg.mxu0
        %v2006 = vunpack.c.l.b16 %v1891
        %v2007 = vunpack.c.l.b16 %v1892
        %v2008 = vpack.c.b16 %v2007, %v2006
        %v2026 = vunpack.c.l.b16 %v1893
        %v2027 = vunpack.c.l.b16 %v1894
        %v2028 = vunpack.c.l.b16 %v1895
        %v2029 = vunpack.c.l.b16 %v1896
        %v2030 = vunpack.c.l.b16 %v1897
        %v2031 = vunpack.c.l.b16 %v1898
        %v2032 = vunpack.c.l.b16 %v1899
        %v2033 = vunpack.c.l.b16 %v1900
        %v2034 = vunpack.c.l.b16 %v1901
        %v2035 = vunpack.c.l.b16 %v1902
        %v2036 = vunpack.c.l.b16 %v1903
        %v2037 = vunpack.c.l.b16 %v1904
        %v2038 = vunpack.c.l.b16 %v1905
        %v2039 = vunpack.c.l.b16 %v1906
        %v2040 = vunpack.c.l.b16 %v1907
        %v2041 = vunpack.c.l.b16 %v1908
        %v2042 = vpack.c.b16 %v2027, %v2026
        %v2043 = vpack.c.b16 %v2029, %v2028
        %v2044 = vpack.c.b16 %v2031, %v2030
        %v2045 = vpack.c.b16 %v2033, %v2032
        %v2046 = vpack.c.b16 %v2035, %v2034
        %v2047 = vpack.c.b16 %v2037, %v2036
        %v2048 = vpack.c.b16 %v2039, %v2038
        %v2049 = vpack.c.b16 %v2041, %v2040
        %2058 = vmatpush.bf16.msra.mxu0 %v2049
        %2059 = vmatpush.bf16.msra.mxu0 %v2048
        %2060 = vmatpush.bf16.msra.mxu0 %v2047
        %2061 = vmatpush.bf16.msra.mxu0 %v2046
        %2062 = vmatpush.bf16.msra.mxu0 %v2045
        %2063 = vmatpush.bf16.msra.mxu0 %v2044
        %2064 = vmatpush.bf16.msra.mxu0 %v2043
        %2065 = vmatpush.bf16.msra.mxu0 %v2042
        %2066 = vmatmul.bf16.gmra.mxu0 %v2008
        %v2067 = vpop.f32.mrf.mxu0
        %v2068 = vadd.f32 %v2000, %v2067
        %v2069 = vpop.f32.mrf.mxu0
        %v2070 = vadd.f32 %v2002, %v2069
        %2071 = vdwg.mxu0
        %v2072 = vld [vmem:[#allocation14 + $0x80] sm:$0xf]
        %v2073 = vld [vmem:[#allocation14 + $0x84] sm:$0xf]
        %v2074 = vld [vmem:[#allocation14 + $0x88] sm:$0xf]
        %v2075 = vld [vmem:[#allocation14 + $0x8c] sm:$0xf]
        %v2076 = vld [vmem:[#allocation14 + $0x90] sm:$0xf]
        %v2077 = vld [vmem:[#allocation14 + $0x94] sm:$0xf]
        %v2078 = vld [vmem:[#allocation14 + $0x98] sm:$0xf]
        %v2079 = vld [vmem:[#allocation14 + $0x9c] sm:$0xf]
        %v2080 = vld [vmem:[#allocation14 + $0xa0] sm:$0xf]
        %v2081 = vld [vmem:[#allocation14 + $0xa4] sm:$0xf]
        %v2082 = vld [vmem:[#allocation14 + $0xa8] sm:$0xf]
        %v2083 = vld [vmem:[#allocation14 + $0xac] sm:$0xf]
        %v2084 = vld [vmem:[#allocation14 + $0xb0] sm:$0xf]
        %v2085 = vld [vmem:[#allocation14 + $0xb4] sm:$0xf]
        %v2086 = vld [vmem:[#allocation14 + $0xb8] sm:$0xf]
        %v2087 = vld [vmem:[#allocation14 + $0xbc] sm:$0xf]
        %2088 = vrot.lane.b32.xlu0 %v1933, 112
        %v2089 = vpop.permute.xlu0 %2088
        %2090 = vrot.lane.b32.xlu0 %v1934, 112
        %v2091 = vpop.permute.xlu0 %2090
        %vm2092 = vcmask 916480
        %v2093 = vsel %vm2092, %v2089, %v2091
        %v2111 = vunpack.c.l.b16 %v2072
        %v2112 = vunpack.c.l.b16 %v2073
        %v2113 = vunpack.c.l.b16 %v2074
        %v2114 = vunpack.c.l.b16 %v2075
        %v2115 = vunpack.c.l.b16 %v2076
        %v2116 = vunpack.c.l.b16 %v2077
        %v2117 = vunpack.c.l.b16 %v2078
        %v2118 = vunpack.c.l.b16 %v2079
        %v2119 = vunpack.c.l.b16 %v2080
        %v2120 = vunpack.c.l.b16 %v2081
        %v2121 = vunpack.c.l.b16 %v2082
        %v2122 = vunpack.c.l.b16 %v2083
        %v2123 = vunpack.c.l.b16 %v2084
        %v2124 = vunpack.c.l.b16 %v2085
        %v2125 = vunpack.c.l.b16 %v2086
        %v2126 = vunpack.c.l.b16 %v2087
        %v2127 = vpack.c.b16 %v2112, %v2111
        %v2128 = vpack.c.b16 %v2114, %v2113
        %v2129 = vpack.c.b16 %v2116, %v2115
        %v2130 = vpack.c.b16 %v2118, %v2117
        %v2131 = vpack.c.b16 %v2120, %v2119
        %v2132 = vpack.c.b16 %v2122, %v2121
        %v2133 = vpack.c.b16 %v2124, %v2123
        %v2134 = vpack.c.b16 %v2126, %v2125
        %2143 = vmatpush.bf16.msra.mxu0 %v2134
        %2144 = vmatpush.bf16.msra.mxu0 %v2133
        %2145 = vmatpush.bf16.msra.mxu0 %v2132
        %2146 = vmatpush.bf16.msra.mxu0 %v2131
        %2147 = vmatpush.bf16.msra.mxu0 %v2130
        %2148 = vmatpush.bf16.msra.mxu0 %v2129
        %2149 = vmatpush.bf16.msra.mxu0 %v2128
        %2150 = vmatpush.bf16.msra.mxu0 %v2127
        %2151 = vmatmul.bf16.gmra.mxu0 %v2093
        %v2152 = vpop.f32.mrf.mxu0
        %v2153 = vadd.f32 0.0, %v2152
        %v2154 = vpop.f32.mrf.mxu0
        %v2155 = vadd.f32 0.0, %v2154
        %2156 = vdwg.mxu0
        %v2157 = vadd.f32 %v2068, %v2153
        %v2158 = vadd.f32 %v2070, %v2155
        %v2159 = vld [vmem:[#allocation4] sm:$0xf]
        %v2160 = vld [vmem:[#allocation4 + $0x8] sm:$0xf]
        %v2161 = vld [vmem:[#allocation4 + $0x10] sm:$0x1]
        %v2162 = vld [vmem:[#allocation14 + $0xc0] sm:$0xf]
        %v2163 = vld [vmem:[#allocation14 + $0xc4] sm:$0xf]
        %v2164 = vld [vmem:[#allocation14 + $0xc8] sm:$0xf]
        %v2165 = vld [vmem:[#allocation14 + $0xcc] sm:$0xf]
        %v2166 = vld [vmem:[#allocation14 + $0xd0] sm:$0xf]
        %v2167 = vld [vmem:[#allocation14 + $0xd4] sm:$0xf]
        %v2168 = vld [vmem:[#allocation14 + $0xd8] sm:$0xf]
        %v2169 = vld [vmem:[#allocation14 + $0xdc] sm:$0xf]
        %v2170 = vld [vmem:[#allocation14 + $0xe0] sm:$0xf]
        %v2171 = vld [vmem:[#allocation14 + $0xe4] sm:$0xf]
        %v2172 = vld [vmem:[#allocation14 + $0xe8] sm:$0xf]
        %v2173 = vld [vmem:[#allocation14 + $0xec] sm:$0xf]
        %v2174 = vld [vmem:[#allocation14 + $0xf0] sm:$0xf]
        %v2175 = vld [vmem:[#allocation14 + $0xf4] sm:$0xf]
        %v2176 = vld [vmem:[#allocation14 + $0xf8] sm:$0xf]
        %v2177 = vld [vmem:[#allocation14 + $0xfc] sm:$0xf]
        %v2181 = vunpack.c.l.b16 %v2159
        %v2182 = vunpack.c.l.b16 %v2160
        %v2183 = vunpack.c.l.b16 %v2161
        %v2184 = vpack.c.b16 %v2182, %v2181
        %v2185 = vpack.c.b16 %v2183, %v2183
        %v2187 = vshrl.u32 %v2184, 16
        %v2189 = vshll.u32 %v2184, 16
        %v2191 = vrot.slane %v2189, 1
        %v2192 = vor.u32 %v2187, %v2191
        %v2194 = vshll.u32 %v2185, 16
        %v2196 = vrot.slane %v2194, 1
        %v2197 = vsel %vm789, %v2192, %v2196
        %v2215 = vunpack.c.l.b16 %v2162
        %v2216 = vunpack.c.l.b16 %v2163
        %v2217 = vunpack.c.l.b16 %v2164
        %v2218 = vunpack.c.l.b16 %v2165
        %v2219 = vunpack.c.l.b16 %v2166
        %v2220 = vunpack.c.l.b16 %v2167
        %v2221 = vunpack.c.l.b16 %v2168
        %v2222 = vunpack.c.l.b16 %v2169
        %v2223 = vunpack.c.l.b16 %v2170
        %v2224 = vunpack.c.l.b16 %v2171
        %v2225 = vunpack.c.l.b16 %v2172
        %v2226 = vunpack.c.l.b16 %v2173
        %v2227 = vunpack.c.l.b16 %v2174
        %v2228 = vunpack.c.l.b16 %v2175
        %v2229 = vunpack.c.l.b16 %v2176
        %v2230 = vunpack.c.l.b16 %v2177
        %v2231 = vpack.c.b16 %v2216, %v2215
        %v2232 = vpack.c.b16 %v2218, %v2217
        %v2233 = vpack.c.b16 %v2220, %v2219
        %v2234 = vpack.c.b16 %v2222, %v2221
        %v2235 = vpack.c.b16 %v2224, %v2223
        %v2236 = vpack.c.b16 %v2226, %v2225
        %v2237 = vpack.c.b16 %v2228, %v2227
        %v2238 = vpack.c.b16 %v2230, %v2229
        %2247 = vmatpush.bf16.msra.mxu0 %v2238
        %2248 = vmatpush.bf16.msra.mxu0 %v2237
        %2249 = vmatpush.bf16.msra.mxu0 %v2236
        %2250 = vmatpush.bf16.msra.mxu0 %v2235
        %2251 = vmatpush.bf16.msra.mxu0 %v2234
        %2252 = vmatpush.bf16.msra.mxu0 %v2233
        %2253 = vmatpush.bf16.msra.mxu0 %v2232
        %2254 = vmatpush.bf16.msra.mxu0 %v2231
        %2255 = vmatmul.bf16.gmra.mxu0 %v2197
        %v2256 = vpop.f32.mrf.mxu0
        %v2257 = vadd.f32 0.0, %v2256
        %v2258 = vpop.f32.mrf.mxu0
        %v2259 = vadd.f32 0.0, %v2258
        %2260 = vdwg.mxu0
        %v2261 = vadd.f32 %v2157, %v2257
        %v2262 = vadd.f32 %v2158, %v2259
        %v2263 = vld [vmem:[#allocation4] sm:$0xff]
        %v2264 = vld [vmem:[#allocation4 + $0x8] sm:$0xff]
        %v2265 = vld [vmem:[#allocation4 + $0x10] sm:$0x11]
        %v2266 = vld [vmem:[#allocation14 + $0x100] sm:$0xf]
        %v2267 = vld [vmem:[#allocation14 + $0x104] sm:$0xf]
        %v2268 = vld [vmem:[#allocation14 + $0x108] sm:$0xf]
        %v2269 = vld [vmem:[#allocation14 + $0x10c] sm:$0xf]
        %v2270 = vld [vmem:[#allocation14 + $0x110] sm:$0xf]
        %v2271 = vld [vmem:[#allocation14 + $0x114] sm:$0xf]
        %v2272 = vld [vmem:[#allocation14 + $0x118] sm:$0xf]
        %v2273 = vld [vmem:[#allocation14 + $0x11c] sm:$0xf]
        %v2274 = vld [vmem:[#allocation14 + $0x120] sm:$0xf]
        %v2275 = vld [vmem:[#allocation14 + $0x124] sm:$0xf]
        %v2276 = vld [vmem:[#allocation14 + $0x128] sm:$0xf]
        %v2277 = vld [vmem:[#allocation14 + $0x12c] sm:$0xf]
        %v2278 = vld [vmem:[#allocation14 + $0x130] sm:$0xf]
        %v2279 = vld [vmem:[#allocation14 + $0x134] sm:$0xf]
        %v2280 = vld [vmem:[#allocation14 + $0x138] sm:$0xf]
        %v2281 = vld [vmem:[#allocation14 + $0x13c] sm:$0xf]
        %v2285 = vunpack.c.l.b16 %v2263
        %v2286 = vunpack.c.h.b16 %v2263
        %v2287 = vunpack.c.l.b16 %v2264
        %v2288 = vunpack.c.h.b16 %v2264
        %v2289 = vunpack.c.l.b16 %v2265
        %v2290 = vunpack.c.h.b16 %v2265
        %v2291 = vpack.c.b16 %v2287, %v2285
        %v2292 = vpack.c.b16 %v2288, %v2286
        %v2293 = vpack.c.b16 %v2289, %v2289
        %v2294 = vpack.c.b16 %v2290, %v2290
        %v2296 = vshrl.u32 %v2291, 16
        %v2298 = vshll.u32 %v2291, 16
        %v2300 = vrot.slane %v2298, 1
        %v2301 = vor.u32 %v2296, %v2300
        %v2303 = vshll.u32 %v2293, 16
        %v2305 = vrot.slane %v2303, 1
        %v2306 = vsel %vm789, %v2301, %v2305
        %v2308 = vshrl.u32 %v2292, 16
        %v2310 = vshll.u32 %v2292, 16
        %v2312 = vrot.slane %v2310, 1
        %v2313 = vor.u32 %v2308, %v2312
        %v2315 = vshll.u32 %v2294, 16
        %v2317 = vrot.slane %v2315, 1
        %v2318 = vsel %vm789, %v2313, %v2317
        %2319 = vrot.lane.b32.xlu0 %v2306, 120
        %v2320 = vpop.permute.xlu0 %2319
        %2321 = vrot.lane.b32.xlu0 %v2318, 120
        %v2322 = vpop.permute.xlu0 %2321
        %v2323 = vsel %vm1939, %v2320, %v2322
        %v2341 = vunpack.c.l.b16 %v2266
        %v2342 = vunpack.c.l.b16 %v2267
        %v2343 = vunpack.c.l.b16 %v2268
        %v2344 = vunpack.c.l.b16 %v2269
        %v2345 = vunpack.c.l.b16 %v2270
        %v2346 = vunpack.c.l.b16 %v2271
        %v2347 = vunpack.c.l.b16 %v2272
        %v2348 = vunpack.c.l.b16 %v2273
        %v2349 = vunpack.c.l.b16 %v2274
        %v2350 = vunpack.c.l.b16 %v2275
        %v2351 = vunpack.c.l.b16 %v2276
        %v2352 = vunpack.c.l.b16 %v2277
        %v2353 = vunpack.c.l.b16 %v2278
        %v2354 = vunpack.c.l.b16 %v2279
        %v2355 = vunpack.c.l.b16 %v2280
        %v2356 = vunpack.c.l.b16 %v2281
        %v2357 = vpack.c.b16 %v2342, %v2341
        %v2358 = vpack.c.b16 %v2344, %v2343
        %v2359 = vpack.c.b16 %v2346, %v2345
        %v2360 = vpack.c.b16 %v2348, %v2347
        %v2361 = vpack.c.b16 %v2350, %v2349
        %v2362 = vpack.c.b16 %v2352, %v2351
        %v2363 = vpack.c.b16 %v2354, %v2353
        %v2364 = vpack.c.b16 %v2356, %v2355
        %2373 = vmatpush.bf16.msra.mxu0 %v2364
        %2374 = vmatpush.bf16.msra.mxu0 %v2363
        %2375 = vmatpush.bf16.msra.mxu0 %v2362
        %2376 = vmatpush.bf16.msra.mxu0 %v2361
        %2377 = vmatpush.bf16.msra.mxu0 %v2360
        %2378 = vmatpush.bf16.msra.mxu0 %v2359
        %2379 = vmatpush.bf16.msra.mxu0 %v2358
        %2380 = vmatpush.bf16.msra.mxu0 %v2357
        %2381 = vmatmul.bf16.gmra.mxu0 %v2323
        %v2382 = vpop.f32.mrf.mxu0
        %v2383 = vadd.f32 0.0, %v2382
        %v2384 = vpop.f32.mrf.mxu0
        %v2385 = vadd.f32 0.0, %v2384
        %2386 = vdwg.mxu0
        %v2387 = vadd.f32 %v2261, %v2383
        %v2388 = vadd.f32 %v2262, %v2385
        %v2389 = vld [vmem:[#allocation14 + $0x140] sm:$0xf]
        %v2390 = vld [vmem:[#allocation14 + $0x144] sm:$0xf]
        %v2391 = vld [vmem:[#allocation14 + $0x148] sm:$0xf]
        %v2392 = vld [vmem:[#allocation14 + $0x14c] sm:$0xf]
        %v2393 = vld [vmem:[#allocation14 + $0x150] sm:$0xf]
        %v2394 = vld [vmem:[#allocation14 + $0x154] sm:$0xf]
        %v2395 = vld [vmem:[#allocation14 + $0x158] sm:$0xf]
        %v2396 = vld [vmem:[#allocation14 + $0x15c] sm:$0xf]
        %v2397 = vld [vmem:[#allocation14 + $0x160] sm:$0xf]
        %v2398 = vld [vmem:[#allocation14 + $0x164] sm:$0xf]
        %v2399 = vld [vmem:[#allocation14 + $0x168] sm:$0xf]
        %v2400 = vld [vmem:[#allocation14 + $0x16c] sm:$0xf]
        %v2401 = vld [vmem:[#allocation14 + $0x170] sm:$0xf]
        %v2402 = vld [vmem:[#allocation14 + $0x174] sm:$0xf]
        %v2403 = vld [vmem:[#allocation14 + $0x178] sm:$0xf]
        %v2404 = vld [vmem:[#allocation14 + $0x17c] sm:$0xf]
        %2405 = vrot.lane.b32.xlu0 %v2306, 112
        %v2406 = vpop.permute.xlu0 %2405
        %2407 = vrot.lane.b32.xlu0 %v2318, 112
        %v2408 = vpop.permute.xlu0 %2407
        %v2409 = vsel %vm2092, %v2406, %v2408
        %v2427 = vunpack.c.l.b16 %v2389
        %v2428 = vunpack.c.l.b16 %v2390
        %v2429 = vunpack.c.l.b16 %v2391
        %v2430 = vunpack.c.l.b16 %v2392
        %v2431 = vunpack.c.l.b16 %v2393
        %v2432 = vunpack.c.l.b16 %v2394
        %v2433 = vunpack.c.l.b16 %v2395
        %v2434 = vunpack.c.l.b16 %v2396
        %v2435 = vunpack.c.l.b16 %v2397
        %v2436 = vunpack.c.l.b16 %v2398
        %v2437 = vunpack.c.l.b16 %v2399
        %v2438 = vunpack.c.l.b16 %v2400
        %v2439 = vunpack.c.l.b16 %v2401
        %v2440 = vunpack.c.l.b16 %v2402
        %v2441 = vunpack.c.l.b16 %v2403
        %v2442 = vunpack.c.l.b16 %v2404
        %v2443 = vpack.c.b16 %v2428, %v2427
        %v2444 = vpack.c.b16 %v2430, %v2429
        %v2445 = vpack.c.b16 %v2432, %v2431
        %v2446 = vpack.c.b16 %v2434, %v2433
        %v2447 = vpack.c.b16 %v2436, %v2435
        %v2448 = vpack.c.b16 %v2438, %v2437
        %v2449 = vpack.c.b16 %v2440, %v2439
        %v2450 = vpack.c.b16 %v2442, %v2441
        %2459 = vmatpush.bf16.msra.mxu0 %v2450
        %2460 = vmatpush.bf16.msra.mxu0 %v2449
        %2461 = vmatpush.bf16.msra.mxu0 %v2448
        %2462 = vmatpush.bf16.msra.mxu0 %v2447
        %2463 = vmatpush.bf16.msra.mxu0 %v2446
        %2464 = vmatpush.bf16.msra.mxu0 %v2445
        %2465 = vmatpush.bf16.msra.mxu0 %v2444
        %2466 = vmatpush.bf16.msra.mxu0 %v2443
        %2467 = vmatmul.bf16.gmra.mxu0 %v2409
        %v2468 = vpop.f32.mrf.mxu0
        %v2469 = vadd.f32 0.0, %v2468
        %v2470 = vpop.f32.mrf.mxu0
        %v2471 = vadd.f32 0.0, %v2470
        %2472 = vdwg.mxu0
        %v2473 = vadd.f32 %v2387, %v2469
        %v2474 = vadd.f32 %v2388, %v2471
        %v2475 = vld [vmem:[#allocation4] sm:$0xe]
        %v2476 = vld [vmem:[#allocation14 + $0x180] sm:$0xf]
        %v2477 = vld [vmem:[#allocation14 + $0x184] sm:$0xf]
        %v2478 = vld [vmem:[#allocation14 + $0x188] sm:$0xf]
        %v2479 = vld [vmem:[#allocation14 + $0x18c] sm:$0xf]
        %v2480 = vld [vmem:[#allocation14 + $0x190] sm:$0xf]
        %v2481 = vld [vmem:[#allocation14 + $0x194] sm:$0xf]
        %v2482 = vld [vmem:[#allocation14 + $0x198] sm:$0xf]
        %v2483 = vld [vmem:[#allocation14 + $0x19c] sm:$0xf]
        %v2484 = vld [vmem:[#allocation14 + $0x1a0] sm:$0xf]
        %v2485 = vld [vmem:[#allocation14 + $0x1a4] sm:$0xf]
        %v2486 = vld [vmem:[#allocation14 + $0x1a8] sm:$0xf]
        %v2487 = vld [vmem:[#allocation14 + $0x1ac] sm:$0xf]
        %v2488 = vld [vmem:[#allocation14 + $0x1b0] sm:$0xf]
        %v2489 = vld [vmem:[#allocation14 + $0x1b4] sm:$0xf]
        %v2490 = vld [vmem:[#allocation14 + $0x1b8] sm:$0xf]
        %v2491 = vld [vmem:[#allocation14 + $0x1bc] sm:$0xf]
        %v2493 = vunpack.c.l.b16 %v2475
        %v2494 = vpack.c.b16 %v2182, %v2493
        %v2495 = vrot.slane %v2494, 1
        %v2496 = vrot.slane %v2185, 1
        %v2497 = vsel %vm963, %v2495, %v2496
        %v2515 = vunpack.c.l.b16 %v2476
        %v2516 = vunpack.c.l.b16 %v2477
        %v2517 = vunpack.c.l.b16 %v2478
        %v2518 = vunpack.c.l.b16 %v2479
        %v2519 = vunpack.c.l.b16 %v2480
        %v2520 = vunpack.c.l.b16 %v2481
        %v2521 = vunpack.c.l.b16 %v2482
        %v2522 = vunpack.c.l.b16 %v2483
        %v2523 = vunpack.c.l.b16 %v2484
        %v2524 = vunpack.c.l.b16 %v2485
        %v2525 = vunpack.c.l.b16 %v2486
        %v2526 = vunpack.c.l.b16 %v2487
        %v2527 = vunpack.c.l.b16 %v2488
        %v2528 = vunpack.c.l.b16 %v2489
        %v2529 = vunpack.c.l.b16 %v2490
        %v2530 = vunpack.c.l.b16 %v2491
        %v2531 = vpack.c.b16 %v2516, %v2515
        %v2532 = vpack.c.b16 %v2518, %v2517
        %v2533 = vpack.c.b16 %v2520, %v2519
        %v2534 = vpack.c.b16 %v2522, %v2521
        %v2535 = vpack.c.b16 %v2524, %v2523
        %v2536 = vpack.c.b16 %v2526, %v2525
        %v2537 = vpack.c.b16 %v2528, %v2527
        %v2538 = vpack.c.b16 %v2530, %v2529
        %2547 = vmatpush.bf16.msra.mxu0 %v2538
        %2548 = vmatpush.bf16.msra.mxu0 %v2537
        %2549 = vmatpush.bf16.msra.mxu0 %v2536
        %2550 = vmatpush.bf16.msra.mxu0 %v2535
        %2551 = vmatpush.bf16.msra.mxu0 %v2534
        %2552 = vmatpush.bf16.msra.mxu0 %v2533
        %2553 = vmatpush.bf16.msra.mxu0 %v2532
        %2554 = vmatpush.bf16.msra.mxu0 %v2531
        %2555 = vmatmul.bf16.gmra.mxu0 %v2497
        %v2556 = vpop.f32.mrf.mxu0
        %v2557 = vadd.f32 0.0, %v2556
        %v2558 = vpop.f32.mrf.mxu0
        %v2559 = vadd.f32 0.0, %v2558
        %2560 = vdwg.mxu0
        %v2561 = vadd.f32 %v2473, %v2557
        %v2562 = vadd.f32 %v2474, %v2559
        %v2563 = vld [vmem:[#allocation4] sm:$0xee]
        %v2564 = vld [vmem:[#allocation14 + $0x1c0] sm:$0xf]
        %v2565 = vld [vmem:[#allocation14 + $0x1c4] sm:$0xf]
        %v2566 = vld [vmem:[#allocation14 + $0x1c8] sm:$0xf]
        %v2567 = vld [vmem:[#allocation14 + $0x1cc] sm:$0xf]
        %v2568 = vld [vmem:[#allocation14 + $0x1d0] sm:$0xf]
        %v2569 = vld [vmem:[#allocation14 + $0x1d4] sm:$0xf]
        %v2570 = vld [vmem:[#allocation14 + $0x1d8] sm:$0xf]
        %v2571 = vld [vmem:[#allocation14 + $0x1dc] sm:$0xf]
        %v2572 = vld [vmem:[#allocation14 + $0x1e0] sm:$0xf]
        %v2573 = vld [vmem:[#allocation14 + $0x1e4] sm:$0xf]
        %v2574 = vld [vmem:[#allocation14 + $0x1e8] sm:$0xf]
        %v2575 = vld [vmem:[#allocation14 + $0x1ec] sm:$0xf]
        %v2576 = vld [vmem:[#allocation14 + $0x1f0] sm:$0xf]
        %v2577 = vld [vmem:[#allocation14 + $0x1f4] sm:$0xf]
        %v2578 = vld [vmem:[#allocation14 + $0x1f8] sm:$0xf]
        %v2579 = vld [vmem:[#allocation14 + $0x1fc] sm:$0xf]
        %v2581 = vunpack.c.l.b16 %v2563
        %v2582 = vunpack.c.h.b16 %v2563
        %v2583 = vpack.c.b16 %v2287, %v2581
        %v2584 = vpack.c.b16 %v2288, %v2582
        %v2585 = vrot.slane %v2583, 1
        %v2586 = vrot.slane %v2293, 1
        %v2587 = vsel %vm963, %v2585, %v2586
        %v2588 = vrot.slane %v2584, 1
        %v2589 = vrot.slane %v2294, 1
        %v2590 = vsel %vm963, %v2588, %v2589
        %2591 = vrot.lane.b32.xlu0 %v2587, 120
        %v2592 = vpop.permute.xlu0 %2591
        %2593 = vrot.lane.b32.xlu0 %v2590, 120
        %v2594 = vpop.permute.xlu0 %2593
        %v2595 = vsel %vm1939, %v2592, %v2594
        %v2613 = vunpack.c.l.b16 %v2564
        %v2614 = vunpack.c.l.b16 %v2565
        %v2615 = vunpack.c.l.b16 %v2566
        %v2616 = vunpack.c.l.b16 %v2567
        %v2617 = vunpack.c.l.b16 %v2568
        %v2618 = vunpack.c.l.b16 %v2569
        %v2619 = vunpack.c.l.b16 %v2570
        %v2620 = vunpack.c.l.b16 %v2571
        %v2621 = vunpack.c.l.b16 %v2572
        %v2622 = vunpack.c.l.b16 %v2573
        %v2623 = vunpack.c.l.b16 %v2574
        %v2624 = vunpack.c.l.b16 %v2575
        %v2625 = vunpack.c.l.b16 %v2576
        %v2626 = vunpack.c.l.b16 %v2577
        %v2627 = vunpack.c.l.b16 %v2578
        %v2628 = vunpack.c.l.b16 %v2579
        %v2629 = vpack.c.b16 %v2614, %v2613
        %v2630 = vpack.c.b16 %v2616, %v2615
        %v2631 = vpack.c.b16 %v2618, %v2617
        %v2632 = vpack.c.b16 %v2620, %v2619
        %v2633 = vpack.c.b16 %v2622, %v2621
        %v2634 = vpack.c.b16 %v2624, %v2623
        %v2635 = vpack.c.b16 %v2626, %v2625
        %v2636 = vpack.c.b16 %v2628, %v2627
        %2645 = vmatpush.bf16.msra.mxu0 %v2636
        %2646 = vmatpush.bf16.msra.mxu0 %v2635
        %2647 = vmatpush.bf16.msra.mxu0 %v2634
        %2648 = vmatpush.bf16.msra.mxu0 %v2633
        %2649 = vmatpush.bf16.msra.mxu0 %v2632
        %2650 = vmatpush.bf16.msra.mxu0 %v2631
        %2651 = vmatpush.bf16.msra.mxu0 %v2630
        %2652 = vmatpush.bf16.msra.mxu0 %v2629
        %2653 = vmatmul.bf16.gmra.mxu0 %v2595
        %v2654 = vpop.f32.mrf.mxu0
        %v2655 = vadd.f32 0.0, %v2654
        %v2656 = vpop.f32.mrf.mxu0
        %v2657 = vadd.f32 0.0, %v2656
        %2658 = vdwg.mxu0
        %v2659 = vadd.f32 %v2561, %v2655
        %v2660 = vadd.f32 %v2562, %v2657
        %v2661 = vld [vmem:[#allocation14 + $0x200] sm:$0xf]
        %v2662 = vld [vmem:[#allocation14 + $0x204] sm:$0xf]
        %v2663 = vld [vmem:[#allocation14 + $0x208] sm:$0xf]
        %v2664 = vld [vmem:[#allocation14 + $0x20c] sm:$0xf]
        %v2665 = vld [vmem:[#allocation14 + $0x210] sm:$0xf]
        %v2666 = vld [vmem:[#allocation14 + $0x214] sm:$0xf]
        %v2667 = vld [vmem:[#allocation14 + $0x218] sm:$0xf]
        %v2668 = vld [vmem:[#allocation14 + $0x21c] sm:$0xf]
        %v2669 = vld [vmem:[#allocation14 + $0x220] sm:$0xf]
        %v2670 = vld [vmem:[#allocation14 + $0x224] sm:$0xf]
        %v2671 = vld [vmem:[#allocation14 + $0x228] sm:$0xf]
        %v2672 = vld [vmem:[#allocation14 + $0x22c] sm:$0xf]
        %v2673 = vld [vmem:[#allocation14 + $0x230] sm:$0xf]
        %v2674 = vld [vmem:[#allocation14 + $0x234] sm:$0xf]
        %v2675 = vld [vmem:[#allocation14 + $0x238] sm:$0xf]
        %v2676 = vld [vmem:[#allocation14 + $0x23c] sm:$0xf]
        %2677 = vrot.lane.b32.xlu0 %v2587, 112
        %v2678 = vpop.permute.xlu0 %2677
        %2679 = vrot.lane.b32.xlu0 %v2590, 112
        %v2680 = vpop.permute.xlu0 %2679
        %v2681 = vsel %vm2092, %v2678, %v2680
        %v2699 = vunpack.c.l.b16 %v2661
        %v2700 = vunpack.c.l.b16 %v2662
        %v2701 = vunpack.c.l.b16 %v2663
        %v2702 = vunpack.c.l.b16 %v2664
        %v2703 = vunpack.c.l.b16 %v2665
        %v2704 = vunpack.c.l.b16 %v2666
        %v2705 = vunpack.c.l.b16 %v2667
        %v2706 = vunpack.c.l.b16 %v2668
        %v2707 = vunpack.c.l.b16 %v2669
        %v2708 = vunpack.c.l.b16 %v2670
        %v2709 = vunpack.c.l.b16 %v2671
        %v2710 = vunpack.c.l.b16 %v2672
        %v2711 = vunpack.c.l.b16 %v2673
        %v2712 = vunpack.c.l.b16 %v2674
        %v2713 = vunpack.c.l.b16 %v2675
        %v2714 = vunpack.c.l.b16 %v2676
        %v2715 = vpack.c.b16 %v2700, %v2699
        %v2716 = vpack.c.b16 %v2702, %v2701
        %v2717 = vpack.c.b16 %v2704, %v2703
        %v2718 = vpack.c.b16 %v2706, %v2705
        %v2719 = vpack.c.b16 %v2708, %v2707
        %v2720 = vpack.c.b16 %v2710, %v2709
        %v2721 = vpack.c.b16 %v2712, %v2711
        %v2722 = vpack.c.b16 %v2714, %v2713
        %2731 = vmatpush.bf16.msra.mxu0 %v2722
        %2732 = vmatpush.bf16.msra.mxu0 %v2721
        %2733 = vmatpush.bf16.msra.mxu0 %v2720
        %2734 = vmatpush.bf16.msra.mxu0 %v2719
        %2735 = vmatpush.bf16.msra.mxu0 %v2718
        %2736 = vmatpush.bf16.msra.mxu0 %v2717
        %2737 = vmatpush.bf16.msra.mxu0 %v2716
        %2738 = vmatpush.bf16.msra.mxu0 %v2715
        %2739 = vmatmul.bf16.gmra.mxu0 %v2681
        %v2740 = vpop.f32.mrf.mxu0
        %v2741 = vadd.f32 0.0, %v2740
        %v2742 = vpop.f32.mrf.mxu0
        %v2743 = vadd.f32 0.0, %v2742
        %2744 = vdwg.mxu0
        %v2745 = vadd.f32 %v2659, %v2741
        %v2746 = vadd.f32 %v2660, %v2743
        %v2747 = vld [vmem:[#allocation5] sm:$0xf]
        %v2748 = vld [vmem:[#allocation5 + $0x8] sm:$0xf]
        %v2749 = vld [vmem:[#allocation14 + $0x240] sm:$0xf]
        %v2750 = vld [vmem:[#allocation14 + $0x244] sm:$0xf]
        %v2751 = vld [vmem:[#allocation14 + $0x248] sm:$0xf]
        %v2752 = vld [vmem:[#allocation14 + $0x24c] sm:$0xf]
        %v2753 = vld [vmem:[#allocation14 + $0x250] sm:$0xf]
        %v2754 = vld [vmem:[#allocation14 + $0x254] sm:$0xf]
        %v2755 = vld [vmem:[#allocation14 + $0x258] sm:$0xf]
        %v2756 = vld [vmem:[#allocation14 + $0x25c] sm:$0xf]
        %v2757 = vld [vmem:[#allocation14 + $0x260] sm:$0xf]
        %v2758 = vld [vmem:[#allocation14 + $0x264] sm:$0xf]
        %v2759 = vld [vmem:[#allocation14 + $0x268] sm:$0xf]
        %v2760 = vld [vmem:[#allocation14 + $0x26c] sm:$0xf]
        %v2761 = vld [vmem:[#allocation14 + $0x270] sm:$0xf]
        %v2762 = vld [vmem:[#allocation14 + $0x274] sm:$0xf]
        %v2763 = vld [vmem:[#allocation14 + $0x278] sm:$0xf]
        %v2764 = vld [vmem:[#allocation14 + $0x27c] sm:$0xf]
        %v2767 = vunpack.c.l.b16 %v2747
        %v2768 = vunpack.c.l.b16 %v2748
        %v2769 = vpack.c.b16 %v2768, %v2767
        %v2787 = vunpack.c.l.b16 %v2749
        %v2788 = vunpack.c.l.b16 %v2750
        %v2789 = vunpack.c.l.b16 %v2751
        %v2790 = vunpack.c.l.b16 %v2752
        %v2791 = vunpack.c.l.b16 %v2753
        %v2792 = vunpack.c.l.b16 %v2754
        %v2793 = vunpack.c.l.b16 %v2755
        %v2794 = vunpack.c.l.b16 %v2756
        %v2795 = vunpack.c.l.b16 %v2757
        %v2796 = vunpack.c.l.b16 %v2758
        %v2797 = vunpack.c.l.b16 %v2759
        %v2798 = vunpack.c.l.b16 %v2760
        %v2799 = vunpack.c.l.b16 %v2761
        %v2800 = vunpack.c.l.b16 %v2762
        %v2801 = vunpack.c.l.b16 %v2763
        %v2802 = vunpack.c.l.b16 %v2764
        %v2803 = vpack.c.b16 %v2788, %v2787
        %v2804 = vpack.c.b16 %v2790, %v2789
        %v2805 = vpack.c.b16 %v2792, %v2791
        %v2806 = vpack.c.b16 %v2794, %v2793
        %v2807 = vpack.c.b16 %v2796, %v2795
        %v2808 = vpack.c.b16 %v2798, %v2797
        %v2809 = vpack.c.b16 %v2800, %v2799
        %v2810 = vpack.c.b16 %v2802, %v2801
        %2819 = vmatpush.bf16.msra.mxu0 %v2810
        %2820 = vmatpush.bf16.msra.mxu0 %v2809
        %2821 = vmatpush.bf16.msra.mxu0 %v2808
        %2822 = vmatpush.bf16.msra.mxu0 %v2807
        %2823 = vmatpush.bf16.msra.mxu0 %v2806
        %2824 = vmatpush.bf16.msra.mxu0 %v2805
        %2825 = vmatpush.bf16.msra.mxu0 %v2804
        %2826 = vmatpush.bf16.msra.mxu0 %v2803
        %2827 = vmatmul.bf16.gmra.mxu0 %v2769
        %v2828 = vpop.f32.mrf.mxu0
        %v2829 = vadd.f32 0.0, %v2828
        %v2830 = vpop.f32.mrf.mxu0
        %v2831 = vadd.f32 0.0, %v2830
        %2832 = vdwg.mxu0
        %v2833 = vadd.f32 %v2745, %v2829
        %v2834 = vadd.f32 %v2746, %v2831
        %v2835 = vld [vmem:[#allocation5] sm:$0xff]
        %v2836 = vld [vmem:[#allocation5 + $0x8] sm:$0xff]
        %v2837 = vld [vmem:[#allocation14 + $0x280] sm:$0xf]
        %v2838 = vld [vmem:[#allocation14 + $0x284] sm:$0xf]
        %v2839 = vld [vmem:[#allocation14 + $0x288] sm:$0xf]
        %v2840 = vld [vmem:[#allocation14 + $0x28c] sm:$0xf]
        %v2841 = vld [vmem:[#allocation14 + $0x290] sm:$0xf]
        %v2842 = vld [vmem:[#allocation14 + $0x294] sm:$0xf]
        %v2843 = vld [vmem:[#allocation14 + $0x298] sm:$0xf]
        %v2844 = vld [vmem:[#allocation14 + $0x29c] sm:$0xf]
        %v2845 = vld [vmem:[#allocation14 + $0x2a0] sm:$0xf]
        %v2846 = vld [vmem:[#allocation14 + $0x2a4] sm:$0xf]
        %v2847 = vld [vmem:[#allocation14 + $0x2a8] sm:$0xf]
        %v2848 = vld [vmem:[#allocation14 + $0x2ac] sm:$0xf]
        %v2849 = vld [vmem:[#allocation14 + $0x2b0] sm:$0xf]
        %v2850 = vld [vmem:[#allocation14 + $0x2b4] sm:$0xf]
        %v2851 = vld [vmem:[#allocation14 + $0x2b8] sm:$0xf]
        %v2852 = vld [vmem:[#allocation14 + $0x2bc] sm:$0xf]
        %v2855 = vunpack.c.l.b16 %v2835
        %v2856 = vunpack.c.h.b16 %v2835
        %v2857 = vunpack.c.l.b16 %v2836
        %v2858 = vunpack.c.h.b16 %v2836
        %v2859 = vpack.c.b16 %v2857, %v2855
        %v2860 = vpack.c.b16 %v2858, %v2856
        %2861 = vrot.lane.b32.xlu0 %v2859, 120
        %v2862 = vpop.permute.xlu0 %2861
        %2863 = vrot.lane.b32.xlu0 %v2860, 120
        %v2864 = vpop.permute.xlu0 %2863
        %v2865 = vsel %vm1939, %v2862, %v2864
        %v2883 = vunpack.c.l.b16 %v2837
        %v2884 = vunpack.c.l.b16 %v2838
        %v2885 = vunpack.c.l.b16 %v2839
        %v2886 = vunpack.c.l.b16 %v2840
        %v2887 = vunpack.c.l.b16 %v2841
        %v2888 = vunpack.c.l.b16 %v2842
        %v2889 = vunpack.c.l.b16 %v2843
        %v2890 = vunpack.c.l.b16 %v2844
        %v2891 = vunpack.c.l.b16 %v2845
        %v2892 = vunpack.c.l.b16 %v2846
        %v2893 = vunpack.c.l.b16 %v2847
        %v2894 = vunpack.c.l.b16 %v2848
        %v2895 = vunpack.c.l.b16 %v2849
        %v2896 = vunpack.c.l.b16 %v2850
        %v2897 = vunpack.c.l.b16 %v2851
        %v2898 = vunpack.c.l.b16 %v2852
        %v2899 = vpack.c.b16 %v2884, %v2883
        %v2900 = vpack.c.b16 %v2886, %v2885
        %v2901 = vpack.c.b16 %v2888, %v2887
        %v2902 = vpack.c.b16 %v2890, %v2889
        %v2903 = vpack.c.b16 %v2892, %v2891
        %v2904 = vpack.c.b16 %v2894, %v2893
        %v2905 = vpack.c.b16 %v2896, %v2895
        %v2906 = vpack.c.b16 %v2898, %v2897
        %2915 = vmatpush.bf16.msra.mxu0 %v2906
        %2916 = vmatpush.bf16.msra.mxu0 %v2905
        %2917 = vmatpush.bf16.msra.mxu0 %v2904
        %2918 = vmatpush.bf16.msra.mxu0 %v2903
        %2919 = vmatpush.bf16.msra.mxu0 %v2902
        %2920 = vmatpush.bf16.msra.mxu0 %v2901
        %2921 = vmatpush.bf16.msra.mxu0 %v2900
        %2922 = vmatpush.bf16.msra.mxu0 %v2899
        %2923 = vmatmul.bf16.gmra.mxu0 %v2865
        %v2924 = vpop.f32.mrf.mxu0
        %v2925 = vadd.f32 0.0, %v2924
        %v2926 = vpop.f32.mrf.mxu0
        %v2927 = vadd.f32 0.0, %v2926
        %2928 = vdwg.mxu0
        %v2929 = vadd.f32 %v2833, %v2925
        %v2930 = vadd.f32 %v2834, %v2927
        %v2931 = vld [vmem:[#allocation14 + $0x2c0] sm:$0xf]
        %v2932 = vld [vmem:[#allocation14 + $0x2c4] sm:$0xf]
        %v2933 = vld [vmem:[#allocation14 + $0x2c8] sm:$0xf]
        %v2934 = vld [vmem:[#allocation14 + $0x2cc] sm:$0xf]
        %v2935 = vld [vmem:[#allocation14 + $0x2d0] sm:$0xf]
        %v2936 = vld [vmem:[#allocation14 + $0x2d4] sm:$0xf]
        %v2937 = vld [vmem:[#allocation14 + $0x2d8] sm:$0xf]
        %v2938 = vld [vmem:[#allocation14 + $0x2dc] sm:$0xf]
        %v2939 = vld [vmem:[#allocation14 + $0x2e0] sm:$0xf]
        %v2940 = vld [vmem:[#allocation14 + $0x2e4] sm:$0xf]
        %v2941 = vld [vmem:[#allocation14 + $0x2e8] sm:$0xf]
        %v2942 = vld [vmem:[#allocation14 + $0x2ec] sm:$0xf]
        %v2943 = vld [vmem:[#allocation14 + $0x2f0] sm:$0xf]
        %v2944 = vld [vmem:[#allocation14 + $0x2f4] sm:$0xf]
        %v2945 = vld [vmem:[#allocation14 + $0x2f8] sm:$0xf]
        %v2946 = vld [vmem:[#allocation14 + $0x2fc] sm:$0xf]
        %2947 = vrot.lane.b32.xlu0 %v2859, 112
        %v2948 = vpop.permute.xlu0 %2947
        %2949 = vrot.lane.b32.xlu0 %v2860, 112
        %v2950 = vpop.permute.xlu0 %2949
        %v2951 = vsel %vm2092, %v2948, %v2950
        %v2969 = vunpack.c.l.b16 %v2931
        %v2970 = vunpack.c.l.b16 %v2932
        %v2971 = vunpack.c.l.b16 %v2933
        %v2972 = vunpack.c.l.b16 %v2934
        %v2973 = vunpack.c.l.b16 %v2935
        %v2974 = vunpack.c.l.b16 %v2936
        %v2975 = vunpack.c.l.b16 %v2937
        %v2976 = vunpack.c.l.b16 %v2938
        %v2977 = vunpack.c.l.b16 %v2939
        %v2978 = vunpack.c.l.b16 %v2940
        %v2979 = vunpack.c.l.b16 %v2941
        %v2980 = vunpack.c.l.b16 %v2942
        %v2981 = vunpack.c.l.b16 %v2943
        %v2982 = vunpack.c.l.b16 %v2944
        %v2983 = vunpack.c.l.b16 %v2945
        %v2984 = vunpack.c.l.b16 %v2946
        %v2985 = vpack.c.b16 %v2970, %v2969
        %v2986 = vpack.c.b16 %v2972, %v2971
        %v2987 = vpack.c.b16 %v2974, %v2973
        %v2988 = vpack.c.b16 %v2976, %v2975
        %v2989 = vpack.c.b16 %v2978, %v2977
        %v2990 = vpack.c.b16 %v2980, %v2979
        %v2991 = vpack.c.b16 %v2982, %v2981
        %v2992 = vpack.c.b16 %v2984, %v2983
        %3001 = vmatpush.bf16.msra.mxu0 %v2992
        %3002 = vmatpush.bf16.msra.mxu0 %v2991
        %3003 = vmatpush.bf16.msra.mxu0 %v2990
        %3004 = vmatpush.bf16.msra.mxu0 %v2989
        %3005 = vmatpush.bf16.msra.mxu0 %v2988
        %3006 = vmatpush.bf16.msra.mxu0 %v2987
        %3007 = vmatpush.bf16.msra.mxu0 %v2986
        %3008 = vmatpush.bf16.msra.mxu0 %v2985
        %3009 = vmatmul.bf16.gmra.mxu0 %v2951
        %v3010 = vpop.f32.mrf.mxu0
        %v3011 = vadd.f32 0.0, %v3010
        %v3012 = vpop.f32.mrf.mxu0
        %v3013 = vadd.f32 0.0, %v3012
        %3014 = vdwg.mxu0
        %v3015 = vadd.f32 %v2929, %v3011
        %v3016 = vadd.f32 %v2930, %v3013
        %v3017 = vld [vmem:[#allocation5] sm:$0xf]
        %v3018 = vld [vmem:[#allocation5 + $0x8] sm:$0xf]
        %v3019 = vld [vmem:[#allocation5 + $0x10] sm:$0x1]
        %v3020 = vld [vmem:[#allocation14 + $0x300] sm:$0xf]
        %v3021 = vld [vmem:[#allocation14 + $0x304] sm:$0xf]
        %v3022 = vld [vmem:[#allocation14 + $0x308] sm:$0xf]
        %v3023 = vld [vmem:[#allocation14 + $0x30c] sm:$0xf]
        %v3024 = vld [vmem:[#allocation14 + $0x310] sm:$0xf]
        %v3025 = vld [vmem:[#allocation14 + $0x314] sm:$0xf]
        %v3026 = vld [vmem:[#allocation14 + $0x318] sm:$0xf]
        %v3027 = vld [vmem:[#allocation14 + $0x31c] sm:$0xf]
        %v3028 = vld [vmem:[#allocation14 + $0x320] sm:$0xf]
        %v3029 = vld [vmem:[#allocation14 + $0x324] sm:$0xf]
        %v3030 = vld [vmem:[#allocation14 + $0x328] sm:$0xf]
        %v3031 = vld [vmem:[#allocation14 + $0x32c] sm:$0xf]
        %v3032 = vld [vmem:[#allocation14 + $0x330] sm:$0xf]
        %v3033 = vld [vmem:[#allocation14 + $0x334] sm:$0xf]
        %v3034 = vld [vmem:[#allocation14 + $0x338] sm:$0xf]
        %v3035 = vld [vmem:[#allocation14 + $0x33c] sm:$0xf]
        %v3039 = vunpack.c.l.b16 %v3017
        %v3040 = vunpack.c.l.b16 %v3018
        %v3041 = vunpack.c.l.b16 %v3019
        %v3042 = vpack.c.b16 %v3040, %v3039
        %v3043 = vpack.c.b16 %v3041, %v3041
        %v3045 = vshrl.u32 %v3042, 16
        %v3047 = vshll.u32 %v3042, 16
        %v3049 = vrot.slane %v3047, 1
        %v3050 = vor.u32 %v3045, %v3049
        %v3052 = vshll.u32 %v3043, 16
        %v3054 = vrot.slane %v3052, 1
        %v3055 = vsel %vm789, %v3050, %v3054
        %v3073 = vunpack.c.l.b16 %v3020
        %v3074 = vunpack.c.l.b16 %v3021
        %v3075 = vunpack.c.l.b16 %v3022
        %v3076 = vunpack.c.l.b16 %v3023
        %v3077 = vunpack.c.l.b16 %v3024
        %v3078 = vunpack.c.l.b16 %v3025
        %v3079 = vunpack.c.l.b16 %v3026
        %v3080 = vunpack.c.l.b16 %v3027
        %v3081 = vunpack.c.l.b16 %v3028
        %v3082 = vunpack.c.l.b16 %v3029
        %v3083 = vunpack.c.l.b16 %v3030
        %v3084 = vunpack.c.l.b16 %v3031
        %v3085 = vunpack.c.l.b16 %v3032
        %v3086 = vunpack.c.l.b16 %v3033
        %v3087 = vunpack.c.l.b16 %v3034
        %v3088 = vunpack.c.l.b16 %v3035
        %v3089 = vpack.c.b16 %v3074, %v3073
        %v3090 = vpack.c.b16 %v3076, %v3075
        %v3091 = vpack.c.b16 %v3078, %v3077
        %v3092 = vpack.c.b16 %v3080, %v3079
        %v3093 = vpack.c.b16 %v3082, %v3081
        %v3094 = vpack.c.b16 %v3084, %v3083
        %v3095 = vpack.c.b16 %v3086, %v3085
        %v3096 = vpack.c.b16 %v3088, %v3087
        %3105 = vmatpush.bf16.msra.mxu0 %v3096
        %3106 = vmatpush.bf16.msra.mxu0 %v3095
        %3107 = vmatpush.bf16.msra.mxu0 %v3094
        %3108 = vmatpush.bf16.msra.mxu0 %v3093
        %3109 = vmatpush.bf16.msra.mxu0 %v3092
        %3110 = vmatpush.bf16.msra.mxu0 %v3091
        %3111 = vmatpush.bf16.msra.mxu0 %v3090
        %3112 = vmatpush.bf16.msra.mxu0 %v3089
        %3113 = vmatmul.bf16.gmra.mxu0 %v3055
        %v3114 = vpop.f32.mrf.mxu0
        %v3115 = vadd.f32 0.0, %v3114
        %v3116 = vpop.f32.mrf.mxu0
        %v3117 = vadd.f32 0.0, %v3116
        %3118 = vdwg.mxu0
        %v3119 = vadd.f32 %v3015, %v3115
        %v3120 = vadd.f32 %v3016, %v3117
        %v3121 = vld [vmem:[#allocation5] sm:$0xff]
        %v3122 = vld [vmem:[#allocation5 + $0x8] sm:$0xff]
        %v3123 = vld [vmem:[#allocation5 + $0x10] sm:$0x11]
        %v3124 = vld [vmem:[#allocation14 + $0x340] sm:$0xf]
        %v3125 = vld [vmem:[#allocation14 + $0x344] sm:$0xf]
        %v3126 = vld [vmem:[#allocation14 + $0x348] sm:$0xf]
        %v3127 = vld [vmem:[#allocation14 + $0x34c] sm:$0xf]
        %v3128 = vld [vmem:[#allocation14 + $0x350] sm:$0xf]
        %v3129 = vld [vmem:[#allocation14 + $0x354] sm:$0xf]
        %v3130 = vld [vmem:[#allocation14 + $0x358] sm:$0xf]
        %v3131 = vld [vmem:[#allocation14 + $0x35c] sm:$0xf]
        %v3132 = vld [vmem:[#allocation14 + $0x360] sm:$0xf]
        %v3133 = vld [vmem:[#allocation14 + $0x364] sm:$0xf]
        %v3134 = vld [vmem:[#allocation14 + $0x368] sm:$0xf]
        %v3135 = vld [vmem:[#allocation14 + $0x36c] sm:$0xf]
        %v3136 = vld [vmem:[#allocation14 + $0x370] sm:$0xf]
        %v3137 = vld [vmem:[#allocation14 + $0x374] sm:$0xf]
        %v3138 = vld [vmem:[#allocation14 + $0x378] sm:$0xf]
        %v3139 = vld [vmem:[#allocation14 + $0x37c] sm:$0xf]
        %v3143 = vunpack.c.l.b16 %v3121
        %v3144 = vunpack.c.h.b16 %v3121
        %v3145 = vunpack.c.l.b16 %v3122
        %v3146 = vunpack.c.h.b16 %v3122
        %v3147 = vunpack.c.l.b16 %v3123
        %v3148 = vunpack.c.h.b16 %v3123
        %v3149 = vpack.c.b16 %v3145, %v3143
        %v3150 = vpack.c.b16 %v3146, %v3144
        %v3151 = vpack.c.b16 %v3147, %v3147
        %v3152 = vpack.c.b16 %v3148, %v3148
        %v3154 = vshrl.u32 %v3149, 16
        %v3156 = vshll.u32 %v3149, 16
        %v3158 = vrot.slane %v3156, 1
        %v3159 = vor.u32 %v3154, %v3158
        %v3161 = vshll.u32 %v3151, 16
        %v3163 = vrot.slane %v3161, 1
        %v3164 = vsel %vm789, %v3159, %v3163
        %v3166 = vshrl.u32 %v3150, 16
        %v3168 = vshll.u32 %v3150, 16
        %v3170 = vrot.slane %v3168, 1
        %v3171 = vor.u32 %v3166, %v3170
        %v3173 = vshll.u32 %v3152, 16
        %v3175 = vrot.slane %v3173, 1
        %v3176 = vsel %vm789, %v3171, %v3175
        %3177 = vrot.lane.b32.xlu0 %v3164, 120
        %v3178 = vpop.permute.xlu0 %3177
        %3179 = vrot.lane.b32.xlu0 %v3176, 120
        %v3180 = vpop.permute.xlu0 %3179
        %v3181 = vsel %vm1939, %v3178, %v3180
        %v3199 = vunpack.c.l.b16 %v3124
        %v3200 = vunpack.c.l.b16 %v3125
        %v3201 = vunpack.c.l.b16 %v3126
        %v3202 = vunpack.c.l.b16 %v3127
        %v3203 = vunpack.c.l.b16 %v3128
        %v3204 = vunpack.c.l.b16 %v3129
        %v3205 = vunpack.c.l.b16 %v3130
        %v3206 = vunpack.c.l.b16 %v3131
        %v3207 = vunpack.c.l.b16 %v3132
        %v3208 = vunpack.c.l.b16 %v3133
        %v3209 = vunpack.c.l.b16 %v3134
        %v3210 = vunpack.c.l.b16 %v3135
        %v3211 = vunpack.c.l.b16 %v3136
        %v3212 = vunpack.c.l.b16 %v3137
        %v3213 = vunpack.c.l.b16 %v3138
        %v3214 = vunpack.c.l.b16 %v3139
        %v3215 = vpack.c.b16 %v3200, %v3199
        %v3216 = vpack.c.b16 %v3202, %v3201
        %v3217 = vpack.c.b16 %v3204, %v3203
        %v3218 = vpack.c.b16 %v3206, %v3205
        %v3219 = vpack.c.b16 %v3208, %v3207
        %v3220 = vpack.c.b16 %v3210, %v3209
        %v3221 = vpack.c.b16 %v3212, %v3211
        %v3222 = vpack.c.b16 %v3214, %v3213
        %3231 = vmatpush.bf16.msra.mxu0 %v3222
        %3232 = vmatpush.bf16.msra.mxu0 %v3221
        %3233 = vmatpush.bf16.msra.mxu0 %v3220
        %3234 = vmatpush.bf16.msra.mxu0 %v3219
        %3235 = vmatpush.bf16.msra.mxu0 %v3218
        %3236 = vmatpush.bf16.msra.mxu0 %v3217
        %3237 = vmatpush.bf16.msra.mxu0 %v3216
        %3238 = vmatpush.bf16.msra.mxu0 %v3215
        %3239 = vmatmul.bf16.gmra.mxu0 %v3181
        %v3240 = vpop.f32.mrf.mxu0
        %v3241 = vadd.f32 0.0, %v3240
        %v3242 = vpop.f32.mrf.mxu0
        %v3243 = vadd.f32 0.0, %v3242
        %3244 = vdwg.mxu0
        %v3245 = vadd.f32 %v3119, %v3241
        %v3246 = vadd.f32 %v3120, %v3243
        %v3247 = vld [vmem:[#allocation14 + $0x380] sm:$0xf]
        %v3248 = vld [vmem:[#allocation14 + $0x384] sm:$0xf]
        %v3249 = vld [vmem:[#allocation14 + $0x388] sm:$0xf]
        %v3250 = vld [vmem:[#allocation14 + $0x38c] sm:$0xf]
        %v3251 = vld [vmem:[#allocation14 + $0x390] sm:$0xf]
        %v3252 = vld [vmem:[#allocation14 + $0x394] sm:$0xf]
        %v3253 = vld [vmem:[#allocation14 + $0x398] sm:$0xf]
        %v3254 = vld [vmem:[#allocation14 + $0x39c] sm:$0xf]
        %v3255 = vld [vmem:[#allocation14 + $0x3a0] sm:$0xf]
        %v3256 = vld [vmem:[#allocation14 + $0x3a4] sm:$0xf]
        %v3257 = vld [vmem:[#allocation14 + $0x3a8] sm:$0xf]
        %v3258 = vld [vmem:[#allocation14 + $0x3ac] sm:$0xf]
        %v3259 = vld [vmem:[#allocation14 + $0x3b0] sm:$0xf]
        %v3260 = vld [vmem:[#allocation14 + $0x3b4] sm:$0xf]
        %v3261 = vld [vmem:[#allocation14 + $0x3b8] sm:$0xf]
        %v3262 = vld [vmem:[#allocation14 + $0x3bc] sm:$0xf]
        %3263 = vrot.lane.b32.xlu0 %v3164, 112
        %v3264 = vpop.permute.xlu0 %3263
        %3265 = vrot.lane.b32.xlu0 %v3176, 112
        %v3266 = vpop.permute.xlu0 %3265
        %v3267 = vsel %vm2092, %v3264, %v3266
        %v3285 = vunpack.c.l.b16 %v3247
        %v3286 = vunpack.c.l.b16 %v3248
        %v3287 = vunpack.c.l.b16 %v3249
        %v3288 = vunpack.c.l.b16 %v3250
        %v3289 = vunpack.c.l.b16 %v3251
        %v3290 = vunpack.c.l.b16 %v3252
        %v3291 = vunpack.c.l.b16 %v3253
        %v3292 = vunpack.c.l.b16 %v3254
        %v3293 = vunpack.c.l.b16 %v3255
        %v3294 = vunpack.c.l.b16 %v3256
        %v3295 = vunpack.c.l.b16 %v3257
        %v3296 = vunpack.c.l.b16 %v3258
        %v3297 = vunpack.c.l.b16 %v3259
        %v3298 = vunpack.c.l.b16 %v3260
        %v3299 = vunpack.c.l.b16 %v3261
        %v3300 = vunpack.c.l.b16 %v3262
        %v3301 = vpack.c.b16 %v3286, %v3285
        %v3302 = vpack.c.b16 %v3288, %v3287
        %v3303 = vpack.c.b16 %v3290, %v3289
        %v3304 = vpack.c.b16 %v3292, %v3291
        %v3305 = vpack.c.b16 %v3294, %v3293
        %v3306 = vpack.c.b16 %v3296, %v3295
        %v3307 = vpack.c.b16 %v3298, %v3297
        %v3308 = vpack.c.b16 %v3300, %v3299
        %3317 = vmatpush.bf16.msra.mxu0 %v3308
        %3318 = vmatpush.bf16.msra.mxu0 %v3307
        %3319 = vmatpush.bf16.msra.mxu0 %v3306
        %3320 = vmatpush.bf16.msra.mxu0 %v3305
        %3321 = vmatpush.bf16.msra.mxu0 %v3304
        %3322 = vmatpush.bf16.msra.mxu0 %v3303
        %3323 = vmatpush.bf16.msra.mxu0 %v3302
        %3324 = vmatpush.bf16.msra.mxu0 %v3301
        %3325 = vmatmul.bf16.gmra.mxu0 %v3267
        %v3326 = vpop.f32.mrf.mxu0
        %v3327 = vadd.f32 0.0, %v3326
        %v3328 = vpop.f32.mrf.mxu0
        %v3329 = vadd.f32 0.0, %v3328
        %3330 = vdwg.mxu0
        %v3331 = vadd.f32 %v3245, %v3327
        %v3332 = vadd.f32 %v3246, %v3329
        %v3333 = vld [vmem:[#allocation5] sm:$0xe]
        %v3334 = vld [vmem:[#allocation14 + $0x3c0] sm:$0xf]
        %v3335 = vld [vmem:[#allocation14 + $0x3c4] sm:$0xf]
        %v3336 = vld [vmem:[#allocation14 + $0x3c8] sm:$0xf]
        %v3337 = vld [vmem:[#allocation14 + $0x3cc] sm:$0xf]
        %v3338 = vld [vmem:[#allocation14 + $0x3d0] sm:$0xf]
        %v3339 = vld [vmem:[#allocation14 + $0x3d4] sm:$0xf]
        %v3340 = vld [vmem:[#allocation14 + $0x3d8] sm:$0xf]
        %v3341 = vld [vmem:[#allocation14 + $0x3dc] sm:$0xf]
        %v3342 = vld [vmem:[#allocation14 + $0x3e0] sm:$0xf]
        %v3343 = vld [vmem:[#allocation14 + $0x3e4] sm:$0xf]
        %v3344 = vld [vmem:[#allocation14 + $0x3e8] sm:$0xf]
        %v3345 = vld [vmem:[#allocation14 + $0x3ec] sm:$0xf]
        %v3346 = vld [vmem:[#allocation14 + $0x3f0] sm:$0xf]
        %v3347 = vld [vmem:[#allocation14 + $0x3f4] sm:$0xf]
        %v3348 = vld [vmem:[#allocation14 + $0x3f8] sm:$0xf]
        %v3349 = vld [vmem:[#allocation14 + $0x3fc] sm:$0xf]
        %v3351 = vunpack.c.l.b16 %v3333
        %v3352 = vpack.c.b16 %v3040, %v3351
        %v3353 = vrot.slane %v3352, 1
        %v3354 = vrot.slane %v3043, 1
        %v3355 = vsel %vm963, %v3353, %v3354
        %v3373 = vunpack.c.l.b16 %v3334
        %v3374 = vunpack.c.l.b16 %v3335
        %v3375 = vunpack.c.l.b16 %v3336
        %v3376 = vunpack.c.l.b16 %v3337
        %v3377 = vunpack.c.l.b16 %v3338
        %v3378 = vunpack.c.l.b16 %v3339
        %v3379 = vunpack.c.l.b16 %v3340
        %v3380 = vunpack.c.l.b16 %v3341
        %v3381 = vunpack.c.l.b16 %v3342
        %v3382 = vunpack.c.l.b16 %v3343
        %v3383 = vunpack.c.l.b16 %v3344
        %v3384 = vunpack.c.l.b16 %v3345
        %v3385 = vunpack.c.l.b16 %v3346
        %v3386 = vunpack.c.l.b16 %v3347
        %v3387 = vunpack.c.l.b16 %v3348
        %v3388 = vunpack.c.l.b16 %v3349
        %v3389 = vpack.c.b16 %v3374, %v3373
        %v3390 = vpack.c.b16 %v3376, %v3375
        %v3391 = vpack.c.b16 %v3378, %v3377
        %v3392 = vpack.c.b16 %v3380, %v3379
        %v3393 = vpack.c.b16 %v3382, %v3381
        %v3394 = vpack.c.b16 %v3384, %v3383
        %v3395 = vpack.c.b16 %v3386, %v3385
        %v3396 = vpack.c.b16 %v3388, %v3387
        %3405 = vmatpush.bf16.msra.mxu0 %v3396
        %3406 = vmatpush.bf16.msra.mxu0 %v3395
        %3407 = vmatpush.bf16.msra.mxu0 %v3394
        %3408 = vmatpush.bf16.msra.mxu0 %v3393
        %3409 = vmatpush.bf16.msra.mxu0 %v3392
        %3410 = vmatpush.bf16.msra.mxu0 %v3391
        %3411 = vmatpush.bf16.msra.mxu0 %v3390
        %3412 = vmatpush.bf16.msra.mxu0 %v3389
        %3413 = vmatmul.bf16.gmra.mxu0 %v3355
        %v3414 = vpop.f32.mrf.mxu0
        %v3415 = vadd.f32 0.0, %v3414
        %v3416 = vpop.f32.mrf.mxu0
        %v3417 = vadd.f32 0.0, %v3416
        %3418 = vdwg.mxu0
        %v3419 = vadd.f32 %v3331, %v3415
        %v3420 = vadd.f32 %v3332, %v3417
        %v3421 = vld [vmem:[#allocation5] sm:$0xee]
        %v3422 = vld [vmem:[#allocation14 + $0x400] sm:$0xf]
        %v3423 = vld [vmem:[#allocation14 + $0x404] sm:$0xf]
        %v3424 = vld [vmem:[#allocation14 + $0x408] sm:$0xf]
        %v3425 = vld [vmem:[#allocation14 + $0x40c] sm:$0xf]
        %v3426 = vld [vmem:[#allocation14 + $0x410] sm:$0xf]
        %v3427 = vld [vmem:[#allocation14 + $0x414] sm:$0xf]
        %v3428 = vld [vmem:[#allocation14 + $0x418] sm:$0xf]
        %v3429 = vld [vmem:[#allocation14 + $0x41c] sm:$0xf]
        %v3430 = vld [vmem:[#allocation14 + $0x420] sm:$0xf]
        %v3431 = vld [vmem:[#allocation14 + $0x424] sm:$0xf]
        %v3432 = vld [vmem:[#allocation14 + $0x428] sm:$0xf]
        %v3433 = vld [vmem:[#allocation14 + $0x42c] sm:$0xf]
        %v3434 = vld [vmem:[#allocation14 + $0x430] sm:$0xf]
        %v3435 = vld [vmem:[#allocation14 + $0x434] sm:$0xf]
        %v3436 = vld [vmem:[#allocation14 + $0x438] sm:$0xf]
        %v3437 = vld [vmem:[#allocation14 + $0x43c] sm:$0xf]
        %v3439 = vunpack.c.l.b16 %v3421
        %v3440 = vunpack.c.h.b16 %v3421
        %v3441 = vpack.c.b16 %v3145, %v3439
        %v3442 = vpack.c.b16 %v3146, %v3440
        %v3443 = vrot.slane %v3441, 1
        %v3444 = vrot.slane %v3151, 1
        %v3445 = vsel %vm963, %v3443, %v3444
        %v3446 = vrot.slane %v3442, 1
        %v3447 = vrot.slane %v3152, 1
        %v3448 = vsel %vm963, %v3446, %v3447
        %3449 = vrot.lane.b32.xlu0 %v3445, 120
        %v3450 = vpop.permute.xlu0 %3449
        %3451 = vrot.lane.b32.xlu0 %v3448, 120
        %v3452 = vpop.permute.xlu0 %3451
        %v3453 = vsel %vm1939, %v3450, %v3452
        %v3471 = vunpack.c.l.b16 %v3422
        %v3472 = vunpack.c.l.b16 %v3423
        %v3473 = vunpack.c.l.b16 %v3424
        %v3474 = vunpack.c.l.b16 %v3425
        %v3475 = vunpack.c.l.b16 %v3426
        %v3476 = vunpack.c.l.b16 %v3427
        %v3477 = vunpack.c.l.b16 %v3428
        %v3478 = vunpack.c.l.b16 %v3429
        %v3479 = vunpack.c.l.b16 %v3430
        %v3480 = vunpack.c.l.b16 %v3431
        %v3481 = vunpack.c.l.b16 %v3432
        %v3482 = vunpack.c.l.b16 %v3433
        %v3483 = vunpack.c.l.b16 %v3434
        %v3484 = vunpack.c.l.b16 %v3435
        %v3485 = vunpack.c.l.b16 %v3436
        %v3486 = vunpack.c.l.b16 %v3437
        %v3487 = vpack.c.b16 %v3472, %v3471
        %v3488 = vpack.c.b16 %v3474, %v3473
        %v3489 = vpack.c.b16 %v3476, %v3475
        %v3490 = vpack.c.b16 %v3478, %v3477
        %v3491 = vpack.c.b16 %v3480, %v3479
        %v3492 = vpack.c.b16 %v3482, %v3481
        %v3493 = vpack.c.b16 %v3484, %v3483
        %v3494 = vpack.c.b16 %v3486, %v3485
        %3503 = vmatpush.bf16.msra.mxu0 %v3494
        %3504 = vmatpush.bf16.msra.mxu0 %v3493
        %3505 = vmatpush.bf16.msra.mxu0 %v3492
        %3506 = vmatpush.bf16.msra.mxu0 %v3491
        %3507 = vmatpush.bf16.msra.mxu0 %v3490
        %3508 = vmatpush.bf16.msra.mxu0 %v3489
        %3509 = vmatpush.bf16.msra.mxu0 %v3488
        %3510 = vmatpush.bf16.msra.mxu0 %v3487
        %3511 = vmatmul.bf16.gmra.mxu0 %v3453
        %v3512 = vpop.f32.mrf.mxu0
        %v3513 = vadd.f32 0.0, %v3512
        %v3514 = vpop.f32.mrf.mxu0
        %v3515 = vadd.f32 0.0, %v3514
        %3516 = vdwg.mxu0
        %v3517 = vadd.f32 %v3419, %v3513
        %v3518 = vadd.f32 %v3420, %v3515
        %v3519 = vld [vmem:[#allocation14 + $0x440] sm:$0xf]
        %v3520 = vld [vmem:[#allocation14 + $0x444] sm:$0xf]
        %v3521 = vld [vmem:[#allocation14 + $0x448] sm:$0xf]
        %v3522 = vld [vmem:[#allocation14 + $0x44c] sm:$0xf]
        %v3523 = vld [vmem:[#allocation14 + $0x450] sm:$0xf]
        %v3524 = vld [vmem:[#allocation14 + $0x454] sm:$0xf]
        %v3525 = vld [vmem:[#allocation14 + $0x458] sm:$0xf]
        %v3526 = vld [vmem:[#allocation14 + $0x45c] sm:$0xf]
        %v3527 = vld [vmem:[#allocation14 + $0x460] sm:$0xf]
        %v3528 = vld [vmem:[#allocation14 + $0x464] sm:$0xf]
        %v3529 = vld [vmem:[#allocation14 + $0x468] sm:$0xf]
        %v3530 = vld [vmem:[#allocation14 + $0x46c] sm:$0xf]
        %v3531 = vld [vmem:[#allocation14 + $0x470] sm:$0xf]
        %v3532 = vld [vmem:[#allocation14 + $0x474] sm:$0xf]
        %v3533 = vld [vmem:[#allocation14 + $0x478] sm:$0xf]
        %v3534 = vld [vmem:[#allocation14 + $0x47c] sm:$0xf]
        %3535 = vrot.lane.b32.xlu0 %v3445, 112
        %v3536 = vpop.permute.xlu0 %3535
        %3537 = vrot.lane.b32.xlu0 %v3448, 112
        %v3538 = vpop.permute.xlu0 %3537
        %v3539 = vsel %vm2092, %v3536, %v3538
        %v3557 = vunpack.c.l.b16 %v3519
        %v3558 = vunpack.c.l.b16 %v3520
        %v3559 = vunpack.c.l.b16 %v3521
        %v3560 = vunpack.c.l.b16 %v3522
        %v3561 = vunpack.c.l.b16 %v3523
        %v3562 = vunpack.c.l.b16 %v3524
        %v3563 = vunpack.c.l.b16 %v3525
        %v3564 = vunpack.c.l.b16 %v3526
        %v3565 = vunpack.c.l.b16 %v3527
        %v3566 = vunpack.c.l.b16 %v3528
        %v3567 = vunpack.c.l.b16 %v3529
        %v3568 = vunpack.c.l.b16 %v3530
        %v3569 = vunpack.c.l.b16 %v3531
        %v3570 = vunpack.c.l.b16 %v3532
        %v3571 = vunpack.c.l.b16 %v3533
        %v3572 = vunpack.c.l.b16 %v3534
        %v3573 = vpack.c.b16 %v3558, %v3557
        %v3574 = vpack.c.b16 %v3560, %v3559
        %v3575 = vpack.c.b16 %v3562, %v3561
        %v3576 = vpack.c.b16 %v3564, %v3563
        %v3577 = vpack.c.b16 %v3566, %v3565
        %v3578 = vpack.c.b16 %v3568, %v3567
        %v3579 = vpack.c.b16 %v3570, %v3569
        %v3580 = vpack.c.b16 %v3572, %v3571
        %3589 = vmatpush.bf16.msra.mxu0 %v3580
        %3590 = vmatpush.bf16.msra.mxu0 %v3579
        %3591 = vmatpush.bf16.msra.mxu0 %v3578
        %3592 = vmatpush.bf16.msra.mxu0 %v3577
        %3593 = vmatpush.bf16.msra.mxu0 %v3576
        %3594 = vmatpush.bf16.msra.mxu0 %v3575
        %3595 = vmatpush.bf16.msra.mxu0 %v3574
        %3596 = vmatpush.bf16.msra.mxu0 %v3573
        %3597 = vmatmul.bf16.gmra.mxu0 %v3539
        %v3598 = vpop.f32.mrf.mxu0
        %v3599 = vadd.f32 0.0, %v3598
        %v3600 = vpop.f32.mrf.mxu0
        %v3601 = vadd.f32 0.0, %v3600
        %3602 = vdwg.mxu0
        %v3603 = vadd.f32 %v3517, %v3599
        %v3604 = vadd.f32 %v3518, %v3601
        %v3605 = vld [vmem:[%s9] sm:$0x1]
        %v3607 = vperm.slane %v3605, 0
        %v3609 = vmul.f32 %v3603, %v3607
        %v3610 = vmul.f32 %v3604, %v3607
        %v3611 = vld [vmem:[%s10] sm:$0x1]
        %v3613 = vperm.slane %v3611, 0
        %v3615 = vadd.f32 %v3609, %v3613
        %v3616 = vadd.f32 %v3610, %v3613
        %v3617 = vmax.f32 %v3615, 0.0
        %v3618 = vmax.f32 %v3616, 0.0
        %3619 = vst [vmem:[%s497] sm:$0xff] %v3617
        %3620 = vst [vmem:[%s497 + $0x8] sm:$0xff] %v3618
        %s3621 = sand.u32 %s281, 1
        %s3622 = scalar_lea.sflag [#allocation8], %s3621
        %s3623 = sand.u32 %s281, 1
        %s3624 = smul.addr %s3623, 16
        %s3625 = scalar_lea.vmem [#allocation15], %s3624
        // Predicated region
        $region85: #{tpu_custom_call.1} parent=63 // pred_check
          %p3626 = pneg %p291
        $region86: #{tpu_custom_call.1} parent=63 // pred_check_branch
          %3628 = sbr.rel (%p3626) target = $region88
        $region87: #{tpu_custom_call.1} parent=63 // pred_region
          %3630 = vsyncadd %s3622, 0
          %s3631 = smul.addr %s32, 2
          %s3632 = smul.addr %s3631, 8
          %s3633 = scalar_lea.hbm %s11, %s3632
          %s3634 = sshll.u32 %s3625, 4
          %s3635 = int_to_ptr.vmem [resolvable:$true] %s3634
          %s3636 = sshll.u32 %s3633, 4
          %s3637 = int_to_ptr.hbm [resolvable:$true] %s3636
          %3642 = dma.vmem_to_hbm [thread:$0]  %s3635, 256, %s3637, %s3622, 128, 128, 8
        $region88: #{tpu_custom_call.1} parent=63 // pred_fallthru
          _
      $region64: #{tpu_custom_call.1} parent=5 // pred_fallthru
        _
      %p3643 = scmp.le.s32.totalorder 2, %s27
      // Predicated region
      $region89: #{tpu_custom_call.1} parent=5 // pred_check
        %p3644 = pneg %p3643
      $region90: #{tpu_custom_call.1} parent=5 // pred_check_branch
        %3646 = sbr.rel (%p3644) target = $region92
      $region91: #{tpu_custom_call.1} parent=5 // pred_region
        %s3647 = ssub.s32 %s27, 2
        // Predicated region
        $region93: #{tpu_custom_call.1} parent=91 // pred_check
          %p3648 = pneg %p297
        $region94: #{tpu_custom_call.1} parent=91 // pred_check_branch
          %3650 = sbr.rel (%p3648) target = $region96
        $region95: #{tpu_custom_call.1} parent=91 // pred_region
          %s3651 = sand.u32 %s282, 1
          %s3652 = scalar_lea.sflag [#allocation8], %s3651
          %s3653 = sand.u32 %s282, 1
          %s3654 = smul.addr %s3653, 16
          %s3655 = scalar_lea.vmem [#allocation15], %s3654
          %3657 = dma.done %s3652, 256
        $region96: #{tpu_custom_call.1} parent=91 // pred_fallthru
          _
      $region92: #{tpu_custom_call.1} parent=5 // pred_fallthru
        _
    $region6: #{tpu_custom_call.1} parent=1 // loop_footer
      %s31 = sadd.s32 1, %s27
    $region7: #{tpu_custom_call.1} parent=1 // loop_footer_branch
      %26 = sbr.rel target = $region3
    $region8: #{tpu_custom_call.1} parent=1 // loop_exit
      _
    %3658 = vsyncpa [#allocation7], 1
    %s3659 = scalar_lea.sflag [#allocation7], 1
    %3660 = vsyncpa %s3659, 1
    %3661 = vsyncpa [#allocation10], 1
    %s3662 = scalar_lea.sflag [#allocation10], 1
    %3663 = vsyncpa %s3662, 1
    %3664 = vsyncpa [#allocation13], 1
    %3665 = vsyncpa [#allocation8], 1
    %s3666 = scalar_lea.sflag [#allocation8], 1
    %3667 = vsyncpa %s3666, 1

</llo_original>
